<compile_context>
chip_gen: v7x
topology: tpu7x:2x2x1
jax: 0.10.0
libtpu: 0.0.40
codegen_flags: <defaults>
</compile_context>

<pallas_src>
import math
from functools import partial

import jax
import jax.numpy as jnp
from jax import lax
from jax.experimental import pallas as pl
from jax.experimental.pallas import tpu as pltpu


def _row_tile(M):
    for t in (512, 256, 128, 64, 32, 16, 8):
        if M % t == 0:
            return t
    return M


# ------------------------------------------------------------------
# Kernel A: LayerNorm (eps=1e-12) + shared in_proj  (computed once per block)
# ------------------------------------------------------------------

def _prologue_kernel(x_ref, g_ref, b_ref, w_ref, xz_ref, *, eps):
    x = x_ref[...]
    mu = jnp.mean(x, axis=-1, keepdims=True)
    xc = x - mu
    var = jnp.mean(xc * xc, axis=-1, keepdims=True)
    n = xc * lax.rsqrt(var + eps) * g_ref[...] + b_ref[...]
    xz_ref[...] = jnp.dot(n, w_ref[...], preferred_element_type=jnp.float32)


def ln_in_proj(x2, ln_w, ln_b, in_w, eps=1e-12):
    M, H = x2.shape
    N = in_w.shape[1]
    TM = _row_tile(M)
    return pl.pallas_call(
        partial(_prologue_kernel, eps=eps),
        grid=(M // TM,),
        in_specs=[
            pl.BlockSpec((TM, H), lambda i: (i, 0)),
            pl.BlockSpec((1, H), lambda i: (0, 0)),
            pl.BlockSpec((1, H), lambda i: (0, 0)),
            pl.BlockSpec((H, N), lambda i: (0, 0)),      # weight stays resident
        ],
        out_specs=pl.BlockSpec((TM, N), lambda i: (i, 0)),
        out_shape=jax.ShapeDtypeStruct((M, N), jnp.float32),
        compiler_params=pltpu.CompilerParams(dimension_semantics=("parallel",)),
    )(x2, ln_w.reshape(1, H), ln_b.reshape(1, H), in_w)


# ------------------------------------------------------------------
# Kernel B: fused Mamba core (conv+SiLU -> projections -> selective scan -> gating)
#           grid (batch, direction); direction is an accumulator axis so the fwd+bwd
#           sum happens in the resident output block (no HBM flip / stack / add pass).
# ------------------------------------------------------------------

def _mamba_core_kernel(x_ref, z_ref, cw_ref, cb_ref, xpw_ref, dtw_ref, dtb_ref,
                       at_ref, d_ref, y_ref,
                       xpad_s, da_s, g_s, c_s, y_s,
                       *, L, d_conv, dt_rank, d_state):
    dirp = pl.program_id(1)                 # 0 = forward stream, 1 = backward stream
    is_fwd = dirp == 0
    K = d_conv
    S = d_state
    x = x_ref[0]                            # (L, d_inner)
    z = z_ref[0]                            # (L, d_inner)
    d_inner = x.shape[-1]

    # ---- depthwise conv1d + SiLU -------------------------------------------
    # fwd:  u[t] = b + sum_j w[j]     * x[t-(K-1)+j]   (causal, left zero pad)
    # bwd:  u[t] = b + sum_j w[K-1-j] * x[t+j]         (anti-causal, right zero pad)
    # The bwd form equals running the causal conv on flip(x) and flipping back.
    @pl.when(is_fwd)
    def _():
        if K > 1:
            xpad_s[pl.ds(0, K - 1), :] = jnp.zeros((K - 1, d_inner), jnp.float32)
        xpad_s[pl.ds(K - 1, L), :] = x

    @pl.when(jnp.logical_not(is_fwd))
    def _():
        xpad_s[pl.ds(0, L), :] = x
        if K > 1:
            xpad_s[pl.ds(L, K - 1), :] = jnp.zeros((K - 1, d_inner), jnp.float32)

    w = cw_ref[0]                           # (K, d_inner)
    acc = cb_ref[0]                         # (1, d_inner) -> broadcasts over L
    for j in range(K):                      # static unrolled taps
        wj = jnp.where(is_fwd, w[j:j + 1, :], w[K - 1 - j:K - j, :])
        acc = acc + xpad_s[pl.ds(j, L), :] * wj
    u = acc * jax.nn.sigmoid(acc)           # SiLU, (L, d_inner)

    # ---- per-token projections, vectorized over L ---------------------------
    x_dbl = jnp.dot(u, xpw_ref[0], preferred_element_type=jnp.float32)   # (L, R+2S)
    dt = jnp.dot(x_dbl[:, 0:dt_rank], dtw_ref[0],
                 preferred_element_type=jnp.float32) + dtb_ref[0]
    # numerically-stable softplus
    delta = jnp.maximum(dt, 0.0) + jnp.log(1.0 + jnp.exp(-jnp.abs(dt)))  # (L, d_inner)
    Bm = x_dbl[:, dt_rank:dt_rank + S]                                   # (L, S)
    Cm = x_dbl[:, dt_rank + S:dt_rank + 2 * S]                           # (L, S)

    # ---- precompute scan coefficients (broadcasts only, no one-hot matmuls) -
    At = at_ref[0]                          # (S, d_inner) = A^T
    du = delta * u
    eye = (lax.broadcasted_iota(jnp.int32, (S, S), 0)
           == lax.broadcasted_iota(jnp.int32, (S, S), 1)).astype(jnp.float32)
    for t in range(L):                      # static loop, no loop-carried dependence
        da_s[pl.ds(t * S, S), :] = jnp.exp(delta[t:t + 1, :] * At)          # (S, d_inner)
        bcol = jnp.sum(eye * Bm[t:t + 1, :], axis=1, keepdims=True)         # (S, 1) = B[t]^T
        ccol = jnp.sum(eye * Cm[t:t + 1, :], axis=1, keepdims=True)         # (S, 1) = C[t]^T
        g_s[pl.ds(t * S, S), :] = bcol * du[t:t + 1, :]                     # B*dt*u
        c_s[pl.ds(t * S, S), :] = ccol

    # ---- serial selective scan: fwd runs t = 0..L-1, bwd runs t = L-1..0 ----
    def body(i, h):
        t = jnp.where(is_fwd, i, L - 1 - i)
        q = pl.multiple_of(t * S, S)
        h = da_s[pl.ds(q, S), :] * h + g_s[pl.ds(q, S), :]
        y_s[pl.ds(t, 1), :] = jnp.sum(c_s[pl.ds(q, S), :] * h, axis=0, keepdims=True)
        return h

    lax.fori_loop(0, L, body, jnp.zeros((S, d_inner), jnp.float32),
                  unroll=True if L <= 32 else 8)

    # ---- D skip + SiLU(z) gate; one lane-dense store per direction ----------
    y = (y_s[...] + d_ref[0] * u) * (z * jax.nn.sigmoid(z))

    @pl.when(is_fwd)
    def _():
        y_ref[0] = y

    @pl.when(jnp.logical_not(is_fwd))
    def _():
        y_ref[0] = y_ref[0] + y             # fwd + bwd accumulated in resident block


def mamba_core(x_in, z, prm):
    # TODO(synk): for very long L (esp. v7x 64 MiB VMEM) chunk the sequence with an
    # extra "arbitrary" grid axis carrying the scan state h across chunks.
    B, L, d_inner = x_in.shape
    d_conv = prm['conv_w'].shape[1]
    dt_rank = prm['dt_w'].shape[1]
    d_state = prm['A_T'].shape[1]
    r2s = dt_rank + 2 * d_state
    kernel = partial(_mamba_core_kernel, L=L, d_conv=d_conv,
                     dt_rank=dt_rank, d_state=d_state)
    return pl.pallas_call(
        kernel,
        grid=(B, 2),
        in_specs=[
            pl.BlockSpec((1, L, d_inner), lambda b, d: (b, 0, 0)),       # x_in (no re-DMA per dir)
            pl.BlockSpec((1, L, d_inner), lambda b, d: (b, 0, 0)),       # z
            pl.BlockSpec((1, d_conv, d_inner), lambda b, d: (d, 0, 0)),  # conv_w (per dir)
            pl.BlockSpec((1, 1, d_inner), lambda b, d: (d, 0, 0)),       # conv_b
            pl.BlockSpec((1, d_inner, r2s), lambda b, d: (d, 0, 0)),     # x_proj
            pl.BlockSpec((1, dt_rank, d_inner), lambda b, d: (d, 0, 0)), # dt_w
            pl.BlockSpec((1, 1, d_inner), lambda b, d: (d, 0, 0)),       # dt_b
            pl.BlockSpec((1, d_state, d_inner), lambda b, d: (d, 0, 0)), # A^T
            pl.BlockSpec((1, 1, d_inner), lambda b, d: (d, 0, 0)),       # D
        ],
        out_specs=pl.BlockSpec((1, L, d_inner), lambda b, d: (b, 0, 0)),
        out_shape=jax.ShapeDtypeStruct((B, L, d_inner), jnp.float32),
        scratch_shapes=[
            pltpu.VMEM((L + d_conv - 1, d_inner), jnp.float32),   # padded conv input
            pltpu.VMEM((L * d_state, d_inner), jnp.float32),      # exp(dt*A) all t
            pltpu.VMEM((L * d_state, d_inner), jnp.float32),      # B*dt*u all t
            pltpu.VMEM((L * d_state, 1), jnp.float32),            # C all t (column form)
            pltpu.VMEM((L, d_inner), jnp.float32),                # scan outputs
        ],
        compiler_params=pltpu.CompilerParams(
            dimension_semantics=("parallel", "arbitrary")),
    )(x_in, z, prm['conv_w'], prm['conv_b'], prm['xproj_w'],
      prm['dt_w'], prm['dt_b'], prm['A_T'], prm['D'])


# ------------------------------------------------------------------
# Kernel C: folded shared out_proj + LayerNorm + FourierKAN + residual
# ------------------------------------------------------------------

def _epilogue_kernel(y_ref, x_ref, ow_ref, g_ref, b_ref, wcs_ref, repk_ref,
                     o_ref, *, eps):
    # shared out_proj applied once to (y_fwd + y_bwd)
    o = jnp.dot(y_ref[...], ow_ref[...], preferred_element_type=jnp.float32)
    mu = jnp.mean(o, axis=-1, keepdims=True)
    oc = o - mu
    var = jnp.mean(oc * oc, axis=-1, keepdims=True)
    n = oc * lax.rsqrt(var + eps) * g_ref[...] + b_ref[...]
    # FourierKAN: kx[m, i*G+g] = n[m, i] * (g+1), built via one (H, H*G) matmul
    kx = jnp.dot(n, repk_ref[...], preferred_element_type=jnp.float32)
    cs = jnp.concatenate([jnp.cos(kx), jnp.sin(kx)], axis=-1)        # (TM, 2*H*G)
    kan = jnp.dot(cs, wcs_ref[...], preferred_element_type=jnp.float32)
    o_ref[...] = kan + x_ref[...]                                    # residual


def out_ln_kan_res(y2, x2, out_w, ln_w, ln_b, w_cs, rep_k, eps=1e-12):
    M, D = y2.shape
    H = x2.shape[1]
    HG = rep_k.shape[1]
    TM = _row_tile(M)
    return pl.pallas_call(
        partial(_epilogue_kernel, eps=eps),
        grid=(M // TM,),
        in_specs=[
            pl.BlockSpec((TM, D), lambda i: (i, 0)),
            pl.BlockSpec((TM, H), lambda i: (i, 0)),
            pl.BlockSpec((D, H), lambda i: (0, 0)),
            pl.BlockSpec((1, H), lambda i: (0, 0)),
            pl.BlockSpec((1, H), lambda i: (0, 0)),
            pl.BlockSpec((2 * HG, H), lambda i: (0, 0)),   # stacked [wc; ws]
            pl.BlockSpec((H, HG), lambda i: (0, 0)),       # rep * k (host-folded)
        ],
        out_specs=pl.BlockSpec((TM, H), lambda i: (i, 0)),
        out_shape=jax.ShapeDtypeStruct((M, H), jnp.float32),
        compiler_params=pltpu.CompilerParams(dimension_semantics=("parallel",)),
    )(y2, x2, out_w, ln_w.reshape(1, H), ln_b.reshape(1, H), w_cs, rep_k)


# ------------------------------------------------------------------
# Model glue (plain JAX)
# ------------------------------------------------------------------

def build_consts(H, G):
    j = jnp.arange(H * G)
    rep = (jnp.arange(H)[:, None] == (j[None, :] // G)).astype(jnp.float32)
    krow = ((j % G) + 1).astype(jnp.float32)[None, :]
    return dict(rep_k=rep * krow)


def bi_mamba_block(p, x, consts):
    B, L, H = x.shape
    d_inner = p['in_w'].shape[1] // 2
    x2 = x.reshape(B * L, H)

    # shared in_proj computed once (ln1 fused in)
    xz = ln_in_proj(x2, p['ln1_w'], p['ln1_b'], p['in_w'])        # (B*L, 2*d_inner)
    x_in, z = jnp.split(xz, 2, axis=-1)
    x_in = x_in.reshape(B, L, d_inner)
    z = z.reshape(B, L, d_inner)

    mprm = dict(conv_w=p['conv_w'], conv_b=p['conv_b'], xproj_w=p['xproj_w'],
                dt_w=p['dt_w'], dt_b=p['dt_b'],
                A_T=jnp.transpose(-jnp.exp(p['A_log']), (0, 2, 1)),   # (2, S, d_inner)
                D=p['D'])
    # y already contains y_fwd + y_bwd (direction accumulated inside kernel B)
    y = mamba_core(x_in, z, mprm)                                 # (B, L, d_inner)

    # TODO(synk): dropout is identity (inference mode).
    out2 = out_ln_kan_res(y.reshape(B * L, d_inner), x2, p['out_w'],
                          p['ln_w'], p['ln_b'], p['kan_w'], consts['rep_k'])
    return out2.reshape(B, L, H)


def bi_mamba_forward(params, x, consts):
    feats = []
    for p in params['blocks']:
        x = bi_mamba_block(p, x, consts)
        feats.append(x)
    return sum(feats) / len(feats)


# ------------------------------------------------------------------
# Deterministic synthetic parameter init (mirrors mamba_ssm Mamba layout;
# in_proj / out_proj shared between fwd and bwd, as in shared_parameter=True)
# ------------------------------------------------------------------

def init_params(key, cfg):
    H = cfg['emb_dim']
    S = cfg['d_state']
    K = cfg['d_conv']
    G = cfg['gridsize']
    d_inner = cfg['expand'] * H
    dt_rank = math.ceil(H / 16)

    keys = iter(jax.random.split(key, 4096))

    def dense(shape, scale=0.05):
        return scale * jax.random.normal(next(keys), shape, jnp.float32)

    def per_dir(shape, scale=0.05):
        return dense((2,) + shape, scale)

    A = jnp.tile(jnp.arange(1, S + 1, dtype=jnp.float32)[None, :], (d_inner, 1))
    A_log = jnp.log(A)

    blocks = []
    for _ in range(cfg['layer_num']):
        coeffs = jax.random.normal(next(keys), (2, H, H, G), jnp.float32) / (
            math.sqrt(H) * math.sqrt(G))
        # wc[i*G+g, j] = coeffs[0, j, i, g]; ws likewise for sin; stacked [wc; ws]
        wc = jnp.transpose(coeffs[0], (1, 2, 0)).reshape(H * G, H)
        ws = jnp.transpose(coeffs[1], (1, 2, 0)).reshape(H * G, H)
        blocks.append(dict(
            ln1_w=jnp.ones((H,), jnp.float32), ln1_b=jnp.zeros((H,), jnp.float32),
            ln_w=jnp.ones((H,), jnp.float32), ln_b=jnp.zeros((H,), jnp.float32),
            in_w=dense((H, 2 * d_inner)),          # shared fwd/bwd in_proj (bias=False)
            out_w=dense((d_inner, H)),             # shared fwd/bwd out_proj (bias=False)
            conv_w=per_dir((K, d_inner), 0.2),
            conv_b=per_dir((1, d_inner), 0.1),
            xproj_w=per_dir((d_inner, dt_rank + 2 * S)),
            dt_w=per_dir((dt_rank, d_inner), 0.2),
            dt_b=per_dir((1, d_inner), 0.1),
            A_log=jnp.tile(A_log[None], (2, 1, 1)),
            D=jnp.ones((2, 1, d_inner), jnp.float32),
            kan_w=jnp.concatenate([wc, ws], axis=0),
        ))
    return dict(blocks=blocks)


# ------------------------------------------------------------------
# Main
# ------------------------------------------------------------------

if __name__ == "__main__":
    cfg = dict(emb_dim=32, layer_num=2, d_state=8, d_conv=4, expand=2,
               drop_prob=0.0, gridsize=4)
    B, L, H = 2, 8, cfg['emb_dim']

    key = jax.random.PRNGKey(0)
    pkey, xkey = jax.random.split(key)
    params = init_params(pkey, cfg)
    x = jax.random.normal(xkey, (B, L, H), jnp.float32)
    consts = build_consts(H, cfg['gridsize'])

    fwd = jax.jit(lambda prm, xx: bi_mamba_forward(prm, xx, consts))
    out = fwd(params, x)
    jax.block_until_ready(out)

    assert out.shape == (B, L, H)
    assert bool(jnp.all(jnp.isfinite(out)))
    print("KERNEL_OK")
</pallas_src>

<mosaic_0001>
module attributes {stable_mosaic.version = 11 : i64} {
  func.func @_prologue_kernel(%arg0: i32, %arg1: memref<16x32xf32, #tpu.memory_space<vmem>>, %arg2: memref<1x32xf32, #tpu.memory_space<vmem>>, %arg3: memref<1x32xf32, #tpu.memory_space<vmem>>, %arg4: memref<32x128xf32, #tpu.memory_space<vmem>>, %arg5: memref<16x128xf32, #tpu.memory_space<vmem>>) attributes {dimension_semantics = [#tpu.dimension_semantics<parallel>], iteration_bounds = array<i64: 1>, scalar_prefetch = 0 : i64, scratch_operands = 0 : i64, tpu.core_type = #tpu.core_type<tc>, window_params = [{transform_indices = @transform_0, window_bounds = array<i64: 16, 32>}, {pipeline_mode = #tpu.pipeline_mode<synchronous>, transform_indices = @transform_1, window_bounds = array<i64: 1, 32>}, {pipeline_mode = #tpu.pipeline_mode<synchronous>, transform_indices = @transform_2, window_bounds = array<i64: 1, 32>}, {pipeline_mode = #tpu.pipeline_mode<synchronous>, transform_indices = @transform_3, window_bounds = array<i64: 32, 128>}, {transform_indices = @transform_4, window_bounds = array<i64: 16, 128>}]} {
    %c0 = arith.constant 0 : index
    %c0_0 = arith.constant 0 : index
    %0 = vector.load %arg1[%c0, %c0_0] : memref<16x32xf32, #tpu.memory_space<vmem>>, vector<16x32xf32>
    %cst = arith.constant dense<0.000000e+00> : vector<16xf32>
    %1 = vector.multi_reduction <add>, %0, %cst [1] : vector<16x32xf32> to vector<16xf32>
    %2 = vector.shape_cast %1 : vector<16xf32> to vector<16x1xf32>
    %cst_1 = arith.constant 3.200000e+01 : f32
    %3 = vector.broadcast %cst_1 : f32 to vector<16x1xf32>
    %4 = arith.divf %2, %3 : vector<16x1xf32>
    %5 = vector.broadcast %4 : vector<16x1xf32> to vector<16x32xf32>
    %6 = arith.subf %0, %5 : vector<16x32xf32>
    %7 = arith.mulf %6, %6 : vector<16x32xf32>
    %cst_2 = arith.constant dense<0.000000e+00> : vector<16xf32>
    %8 = vector.multi_reduction <add>, %7, %cst_2 [1] : vector<16x32xf32> to vector<16xf32>
    %9 = vector.shape_cast %8 : vector<16xf32> to vector<16x1xf32>
    %cst_3 = arith.constant 3.200000e+01 : f32
    %10 = vector.broadcast %cst_3 : f32 to vector<16x1xf32>
    %11 = arith.divf %9, %10 : vector<16x1xf32>
    %cst_4 = arith.constant 9.99999996E-13 : f32
    %12 = vector.broadcast %cst_4 : f32 to vector<16x1xf32>
    %13 = arith.addf %11, %12 : vector<16x1xf32>
    %14 = math.rsqrt %13 : vector<16x1xf32>
    %15 = vector.broadcast %14 : vector<16x1xf32> to vector<16x32xf32>
    %16 = arith.mulf %6, %15 : vector<16x32xf32>
    %c0_5 = arith.constant 0 : index
    %c0_6 = arith.constant 0 : index
    %17 = vector.load %arg2[%c0_5, %c0_6] : memref<1x32xf32, #tpu.memory_space<vmem>>, vector<1x32xf32>
    %18 = vector.broadcast %17 : vector<1x32xf32> to vector<16x32xf32>
    %19 = arith.mulf %16, %18 : vector<16x32xf32>
    %c0_7 = arith.constant 0 : index
    %c0_8 = arith.constant 0 : index
    %20 = vector.load %arg3[%c0_7, %c0_8] : memref<1x32xf32, #tpu.memory_space<vmem>>, vector<1x32xf32>
    %21 = vector.broadcast %20 : vector<1x32xf32> to vector<16x32xf32>
    %22 = arith.addf %19, %21 : vector<16x32xf32>
    %c0_9 = arith.constant 0 : index
    %c0_10 = arith.constant 0 : index
    %23 = vector.load %arg4[%c0_9, %c0_10] : memref<32x128xf32, #tpu.memory_space<vmem>>, vector<32x128xf32>
    %cst_11 = arith.constant dense<0.000000e+00> : vector<16x128xf32>
    %24 = tpu.matmul %22, %23, %cst_11 {dimension_numbers = #tpu.dot_dimension_numbers<[1], [0], [0], [1], [0, 0, 1, 1], [], []>} : vector<16x32xf32>, vector<32x128xf32>, vector<16x128xf32> -> vector<16x128xf32>
    %c0_12 = arith.constant 0 : index
    %c0_13 = arith.constant 0 : index
    %25 = vector.load %arg5[%c0_12, %c0_13] : memref<16x128xf32, #tpu.memory_space<vmem>>, vector<16x128xf32>
    tpu.vector_store %arg5[%c0_12, %c0_13], %24 {strides = array<i32>} : memref<16x128xf32, #tpu.memory_space<vmem>>, vector<16x128xf32>,
    return
  }
  func.func @transform_0(%arg0: i32) -> (i32, i32) {
    %c0_i32 = arith.constant 0 : i32
    %c0_i32_0 = arith.constant 0 : i32
    return %arg0, %c0_i32 : i32, i32
  }
  func.func @transform_1(%arg0: i32) -> (i32, i32) {
    %c0_i32 = arith.constant 0 : i32
    %c0_i32_0 = arith.constant 0 : i32
    %c0_i32_1 = arith.constant 0 : i32
    return %c0_i32, %c0_i32_0 : i32, i32
  }
  func.func @transform_2(%arg0: i32) -> (i32, i32) {
    %c0_i32 = arith.constant 0 : i32
    %c0_i32_0 = arith.constant 0 : i32
    %c0_i32_1 = arith.constant 0 : i32
    return %c0_i32, %c0_i32_0 : i32, i32
  }
  func.func @transform_3(%arg0: i32) -> (i32, i32) {
    %c0_i32 = arith.constant 0 : i32
    %c0_i32_0 = arith.constant 0 : i32
    %c0_i32_1 = arith.constant 0 : i32
    return %c0_i32, %c0_i32_0 : i32, i32
  }
  func.func @transform_4(%arg0: i32) -> (i32, i32) {
    %c0_i32 = arith.constant 0 : i32
    %c0_i32_0 = arith.constant 0 : i32
    return %arg0, %c0_i32 : i32, i32
  }
}

module attributes {stable_mosaic.version = 11 : i64} {
  func.func @_epilogue_kernel(%arg0: i32, %arg1: memref<16x64xf32, #tpu.memory_space<vmem>>, %arg2: memref<16x32xf32, #tpu.memory_space<vmem>>, %arg3: memref<64x32xf32, #tpu.memory_space<vmem>>, %arg4: memref<1x32xf32, #tpu.memory_space<vmem>>, %arg5: memref<1x32xf32, #tpu.memory_space<vmem>>, %arg6: memref<256x32xf32, #tpu.memory_space<vmem>>, %arg7: memref<32x128xf32, #tpu.memory_space<vmem>>, %arg8: memref<16x32xf32, #tpu.memory_space<vmem>>) attributes {dimension_semantics = [#tpu.dimension_semantics<parallel>], iteration_bounds = array<i64: 1>, scalar_prefetch = 0 : i64, scratch_operands = 0 : i64, tpu.core_type = #tpu.core_type<tc>, window_params = [{transform_indices = @transform_0, window_bounds = array<i64: 16, 64>}, {transform_indices = @transform_1, window_bounds = array<i64: 16, 32>}, {pipeline_mode = #tpu.pipeline_mode<synchronous>, transform_indices = @transform_2, window_bounds = array<i64: 64, 32>}, {pipeline_mode = #tpu.pipeline_mode<synchronous>, transform_indices = @transform_3, window_bounds = array<i64: 1, 32>}, {pipeline_mode = #tpu.pipeline_mode<synchronous>, transform_indices = @transform_4, window_bounds = array<i64: 1, 32>}, {pipeline_mode = #tpu.pipeline_mode<synchronous>, transform_indices = @transform_5, window_bounds = array<i64: 256, 32>}, {pipeline_mode = #tpu.pipeline_mode<synchronous>, transform_indices = @transform_6, window_bounds = array<i64: 32, 128>}, {transform_indices = @transform_7, window_bounds = array<i64: 16, 32>}]} {
    %c0 = arith.constant 0 : index
    %c0_0 = arith.constant 0 : index
    %0 = vector.load %arg1[%c0, %c0_0] : memref<16x64xf32, #tpu.memory_space<vmem>>, vector<16x64xf32>
    %c0_1 = arith.constant 0 : index
    %c0_2 = arith.constant 0 : index
    %1 = vector.load %arg3[%c0_1, %c0_2] : memref<64x32xf32, #tpu.memory_space<vmem>>, vector<64x32xf32>
    %cst = arith.constant dense<0.000000e+00> : vector<16x32xf32>
    %2 = tpu.matmul %0, %1, %cst {dimension_numbers = #tpu.dot_dimension_numbers<[1], [0], [0], [1], [0, 0, 1, 1], [], []>} : vector<16x64xf32>, vector<64x32xf32>, vector<16x32xf32> -> vector<16x32xf32>
    %cst_3 = arith.constant dense<0.000000e+00> : vector<16xf32>
    %3 = vector.multi_reduction <add>, %2, %cst_3 [1] : vector<16x32xf32> to vector<16xf32>
    %4 = vector.shape_cast %3 : vector<16xf32> to vector<16x1xf32>
    %cst_4 = arith.constant 3.200000e+01 : f32
    %5 = vector.broadcast %cst_4 : f32 to vector<16x1xf32>
    %6 = arith.divf %4, %5 : vector<16x1xf32>
    %7 = vector.broadcast %6 : vector<16x1xf32> to vector<16x32xf32>
    %8 = arith.subf %2, %7 : vector<16x32xf32>
    %9 = arith.mulf %8, %8 : vector<16x32xf32>
    %cst_5 = arith.constant dense<0.000000e+00> : vector<16xf32>
    %10 = vector.multi_reduction <add>, %9, %cst_5 [1] : vector<16x32xf32> to vector<16xf32>
    %11 = vector.shape_cast %10 : vector<16xf32> to vector<16x1xf32>
    %cst_6 = arith.constant 3.200000e+01 : f32
    %12 = vector.broadcast %cst_6 : f32 to vector<16x1xf32>
    %13 = arith.divf %11, %12 : vector<16x1xf32>
    %cst_7 = arith.constant 9.99999996E-13 : f32
    %14 = vector.broadcast %cst_7 : f32 to vector<16x1xf32>
    %15 = arith.addf %13, %14 : vector<16x1xf32>
    %16 = math.rsqrt %15 : vector<16x1xf32>
    %17 = vector.broadcast %16 : vector<16x1xf32> to vector<16x32xf32>
    %18 = arith.mulf %8, %17 : vector<16x32xf32>
    %c0_8 = arith.constant 0 : index
    %c0_9 = arith.constant 0 : index
    %19 = vector.load %arg4[%c0_8, %c0_9] : memref<1x32xf32, #tpu.memory_space<vmem>>, vector<1x32xf32>
    %20 = vector.broadcast %19 : vector<1x32xf32> to vector<16x32xf32>
    %21 = arith.mulf %18, %20 : vector<16x32xf32>
    %c0_10 = arith.constant 0 : index
    %c0_11 = arith.constant 0 : index
    %22 = vector.load %arg5[%c0_10, %c0_11] : memref<1x32xf32, #tpu.memory_space<vmem>>, vector<1x32xf32>
    %23 = vector.broadcast %22 : vector<1x32xf32> to vector<16x32xf32>
    %24 = arith.addf %21, %23 : vector<16x32xf32>
    %c0_12 = arith.constant 0 : index
    %c0_13 = arith.constant 0 : index
    %25 = vector.load %arg7[%c0_12, %c0_13] : memref<32x128xf32, #tpu.memory_space<vmem>>, vector<32x128xf32>
    %cst_14 = arith.constant dense<0.000000e+00> : vector<16x128xf32>
    %26 = tpu.matmul %24, %25, %cst_14 {dimension_numbers = #tpu.dot_dimension_numbers<[1], [0], [0], [1], [0, 0, 1, 1], [], []>} : vector<16x32xf32>, vector<32x128xf32>, vector<16x128xf32> -> vector<16x128xf32>
    %27 = math.cos %26 : vector<16x128xf32>
    %28 = math.sin %26 : vector<16x128xf32>
    %29 = tpu.concatenate %27, %28 in 1 : vector<16x128xf32>, vector<16x128xf32> -> vector<16x256xf32>
    %c0_15 = arith.constant 0 : index
    %c0_16 = arith.constant 0 : index
    %30 = vector.load %arg6[%c0_15, %c0_16] : memref<256x32xf32, #tpu.memory_space<vmem>>, vector<256x32xf32>
    %cst_17 = arith.constant dense<0.000000e+00> : vector<16x32xf32>
    %31 = tpu.matmul %29, %30, %cst_17 {dimension_numbers = #tpu.dot_dimension_numbers<[1], [0], [0], [1], [0, 0, 1, 1], [], []>} : vector<16x256xf32>, vector<256x32xf32>, vector<16x32xf32> -> vector<16x32xf32>
    %c0_18 = arith.constant 0 : index
    %c0_19 = arith.constant 0 : index
    %32 = vector.load %arg2[%c0_18, %c0_19] : memref<16x32xf32, #tpu.memory_space<vmem>>, vector<16x32xf32>
    %33 = arith.addf %31, %32 : vector<16x32xf32>
    %c0_20 = arith.constant 0 : index
    %c0_21 = arith.constant 0 : index
    %34 = vector.load %arg8[%c0_20, %c0_21] : memref<16x32xf32, #tpu.memory_space<vmem>>, vector<16x32xf32>
    tpu.vector_store %arg8[%c0_20, %c0_21], %33 {strides = array<i32>} : memref<16x32xf32, #tpu.memory_space<vmem>>, vector<16x32xf32>,
    return
  }
  func.func @transform_0(%arg0: i32) -> (i32, i32) {
    %c0_i32 = arith.constant 0 : i32
    %c0_i32_0 = arith.constant 0 : i32
    return %arg0, %c0_i32 : i32, i32
  }
  func.func @transform_1(%arg0: i32) -> (i32, i32) {
    %c0_i32 = arith.constant 0 : i32
    %c0_i32_0 = arith.constant 0 : i32
    return %arg0, %c0_i32 : i32, i32
  }
  func.func @transform_2(%arg0: i32) -> (i32, i32) {
    %c0_i32 = arith.constant 0 : i32
    %c0_i32_0 = arith.constant 0 : i32
    %c0_i32_1 = arith.constant 0 : i32
    return %c0_i32, %c0_i32_0 : i32, i32
  }
  func.func @transform_3(%arg0: i32) -> (i32, i32) {
    %c0_i32 = arith.constant 0 : i32
    %c0_i32_0 = arith.constant 0 : i32
    %c0_i32_1 = arith.constant 0 : i32
    return %c0_i32, %c0_i32_0 : i32, i32
  }
  func.func @transform_4(%arg0: i32) -> (i32, i32) {
    %c0_i32 = arith.constant 0 : i32
    %c0_i32_0 = arith.constant 0 : i32
    %c0_i32_1 = arith.constant 0 : i32
    return %c0_i32, %c0_i32_0 : i32, i32
  }
  func.func @transform_5(%arg0: i32) -> (i32, i32) {
    %c0_i32 = arith.constant 0 : i32
    %c0_i32_0 = arith.constant 0 : i32
    %c0_i32_1 = arith.constant 0 : i32
    return %c0_i32, %c0_i32_0 : i32, i32
  }
  func.func @transform_6(%arg0: i32) -> (i32, i32) {
    %c0_i32 = arith.constant 0 : i32
    %c0_i32_0 = arith.constant 0 : i32
    %c0_i32_1 = arith.constant 0 : i32
    return %c0_i32, %c0_i32_0 : i32, i32
  }
  func.func @transform_7(%arg0: i32) -> (i32, i32) {
    %c0_i32 = arith.constant 0 : i32
    %c0_i32_0 = arith.constant 0 : i32
    return %arg0, %c0_i32 : i32, i32
  }
}

module attributes {stable_mosaic.version = 11 : i64} {
  func.func @_mamba_core_kernel(%arg0: i32, %arg1: i32, %arg2: memref<1x8x64xf32, #tpu.memory_space<vmem>>, %arg3: memref<1x8x64xf32, #tpu.memory_space<vmem>>, %arg4: memref<1x4x64xf32, #tpu.memory_space<vmem>>, %arg5: memref<1x1x64xf32, #tpu.memory_space<vmem>>, %arg6: memref<1x64x18xf32, #tpu.memory_space<vmem>>, %arg7: memref<1x2x64xf32, #tpu.memory_space<vmem>>, %arg8: memref<1x1x64xf32, #tpu.memory_space<vmem>>, %arg9: memref<1x8x64xf32, #tpu.memory_space<vmem>>, %arg10: memref<1x1x64xf32, #tpu.memory_space<vmem>>, %arg11: memref<1x8x64xf32, #tpu.memory_space<vmem>>, %arg12: memref<11x64xf32, #tpu.memory_space<vmem>>, %arg13: memref<64x64xf32, #tpu.memory_space<vmem>>, %arg14: memref<64x64xf32, #tpu.memory_space<vmem>>, %arg15: memref<64x1xf32, #tpu.memory_space<vmem>>, %arg16: memref<8x64xf32, #tpu.memory_space<vmem>>) attributes {dimension_semantics = [#tpu.dimension_semantics<parallel>, #tpu.dimension_semantics<arbitrary>], iteration_bounds = array<i64: 2, 2>, scalar_prefetch = 0 : i64, scratch_operands = 5 : i64, tpu.core_type = #tpu.core_type<tc>, window_params = [{transform_indices = @transform_0, window_bounds = array<i64: 1, 8, 64>}, {transform_indices = @transform_1, window_bounds = array<i64: 1, 8, 64>}, {transform_indices = @transform_2, window_bounds = array<i64: 1, 4, 64>}, {transform_indices = @transform_3, window_bounds = array<i64: 1, 1, 64>}, {transform_indices = @transform_4, window_bounds = array<i64: 1, 64, 18>}, {transform_indices = @transform_5, window_bounds = array<i64: 1, 2, 64>}, {transform_indices = @transform_6, window_bounds = array<i64: 1, 1, 64>}, {transform_indices = @transform_7, window_bounds = array<i64: 1, 8, 64>}, {transform_indices = @transform_8, window_bounds = array<i64: 1, 1, 64>}, {transform_indices = @transform_9, window_bounds = array<i64: 1, 8, 64>}]} {
    %c0_i32 = arith.constant 0 : i32
    %0 = arith.cmpi eq, %arg1, %c0_i32 : i32
    %c0 = arith.constant 0 : index
    %c0_0 = arith.constant 0 : index
    %c0_1 = arith.constant 0 : index
    %1 = vector.load %arg2[%c0, %c0_0, %c0_1] : memref<1x8x64xf32, #tpu.memory_space<vmem>>, vector<1x8x64xf32>
    %2 = vector.shape_cast %1 : vector<1x8x64xf32> to vector<8x64xf32>
    %c0_2 = arith.constant 0 : index
    %c0_3 = arith.constant 0 : index
    %c0_4 = arith.constant 0 : index
    %3 = vector.load %arg3[%c0_2, %c0_3, %c0_4] : memref<1x8x64xf32, #tpu.memory_space<vmem>>, vector<1x8x64xf32>
    %4 = vector.shape_cast %3 : vector<1x8x64xf32> to vector<8x64xf32>
    %5 = arith.extui %0 : i1 to i32
    %c0_i32_5 = arith.constant 0 : i32
    %6 = arith.cmpi ne, %5, %c0_i32_5 : i32
    scf.if %6 {
      %cst_159 = arith.constant 0.000000e+00 : f32
      %411 = vector.broadcast %cst_159 : f32 to vector<3x64xf32>
      %c0_160 = arith.constant 0 : index
      %c0_161 = arith.constant 0 : index
      %412 = vector.load %arg12[%c0_160, %c0_161] : memref<11x64xf32, #tpu.memory_space<vmem>>, vector<3x64xf32>
      tpu.vector_store %arg12[%c0_160, %c0_161], %411 {strides = array<i32>} : memref<11x64xf32, #tpu.memory_space<vmem>>, vector<3x64xf32>,
      %c3_162 = arith.constant 3 : index
      %c0_163 = arith.constant 0 : index
      %413 = vector.load %arg12[%c3_162, %c0_163] : memref<11x64xf32, #tpu.memory_space<vmem>>, vector<8x64xf32>
      tpu.vector_store %arg12[%c3_162, %c0_163], %2 {strides = array<i32>} : memref<11x64xf32, #tpu.memory_space<vmem>>, vector<8x64xf32>,
    } else {
    }
    %true = arith.constant true
    %7 = arith.xori %0, %true : i1
    %8 = arith.extui %7 : i1 to i32
    %c0_i32_6 = arith.constant 0 : i32
    %9 = arith.cmpi ne, %8, %c0_i32_6 : i32
    scf.if %9 {
      %c0_159 = arith.constant 0 : index
      %c0_160 = arith.constant 0 : index
      %411 = vector.load %arg12[%c0_159, %c0_160] : memref<11x64xf32, #tpu.memory_space<vmem>>, vector<8x64xf32>
      tpu.vector_store %arg12[%c0_159, %c0_160], %2 {strides = array<i32>} : memref<11x64xf32, #tpu.memory_space<vmem>>, vector<8x64xf32>,
      %cst_161 = arith.constant 0.000000e+00 : f32
      %412 = vector.broadcast %cst_161 : f32 to vector<3x64xf32>
      %c8_162 = arith.constant 8 : index
      %c0_163 = arith.constant 0 : index
      %413 = vector.load %arg12[%c8_162, %c0_163] : memref<11x64xf32, #tpu.memory_space<vmem>>, vector<3x64xf32>
      tpu.vector_store %arg12[%c8_162, %c0_163], %412 {strides = array<i32>} : memref<11x64xf32, #tpu.memory_space<vmem>>, vector<3x64xf32>,
    } else {
    }
    %c0_7 = arith.constant 0 : index
    %c0_8 = arith.constant 0 : index
    %c0_9 = arith.constant 0 : index
    %10 = vector.load %arg4[%c0_7, %c0_8, %c0_9] : memref<1x4x64xf32, #tpu.memory_space<vmem>>, vector<1x4x64xf32>
    %11 = vector.shape_cast %10 : vector<1x4x64xf32> to vector<4x64xf32>
    %c0_10 = arith.constant 0 : index
    %c0_11 = arith.constant 0 : index
    %c0_12 = arith.constant 0 : index
    %12 = vector.load %arg5[%c0_10, %c0_11, %c0_12] : memref<1x1x64xf32, #tpu.memory_space<vmem>>, vector<1x1x64xf32>
    %13 = vector.shape_cast %12 : vector<1x1x64xf32> to vector<1x64xf32>
    %14 = vector.extract_strided_slice %11 {offsets = [0, 0], sizes = [1, 64], strides = [1, 1]} : vector<4x64xf32> to vector<1x64xf32>
    %15 = vector.extract_strided_slice %11 {offsets = [3, 0], sizes = [1, 64], strides = [1, 1]} : vector<4x64xf32> to vector<1x64xf32>
    %16 = arith.select %0, %14, %15 : vector<1x64xf32>
    %c0_13 = arith.constant 0 : index
    %c0_14 = arith.constant 0 : index
    %17 = vector.load %arg12[%c0_13, %c0_14] : memref<11x64xf32, #tpu.memory_space<vmem>>, vector<8x64xf32>
    %18 = vector.broadcast %16 : vector<1x64xf32> to vector<8x64xf32>
    %19 = arith.mulf %17, %18 : vector<8x64xf32>
    %20 = vector.broadcast %13 : vector<1x64xf32> to vector<8x64xf32>
    %21 = arith.addf %20, %19 : vector<8x64xf32>
    %22 = vector.extract_strided_slice %11 {offsets = [1, 0], sizes = [1, 64], strides = [1, 1]} : vector<4x64xf32> to vector<1x64xf32>
    %23 = vector.extract_strided_slice %11 {offsets = [2, 0], sizes = [1, 64], strides = [1, 1]} : vector<4x64xf32> to vector<1x64xf32>
    %24 = arith.select %0, %22, %23 : vector<1x64xf32>
    %c1 = arith.constant 1 : index
    %c0_15 = arith.constant 0 : index
    %25 = vector.load %arg12[%c1, %c0_15] : memref<11x64xf32, #tpu.memory_space<vmem>>, vector<8x64xf32>
    %26 = vector.broadcast %24 : vector<1x64xf32> to vector<8x64xf32>
    %27 = arith.mulf %25, %26 : vector<8x64xf32>
    %28 = arith.addf %21, %27 : vector<8x64xf32>
    %29 = vector.extract_strided_slice %11 {offsets = [2, 0], sizes = [1, 64], strides = [1, 1]} : vector<4x64xf32> to vector<1x64xf32>
    %30 = vector.extract_strided_slice %11 {offsets = [1, 0], sizes = [1, 64], strides = [1, 1]} : vector<4x64xf32> to vector<1x64xf32>
    %31 = arith.select %0, %29, %30 : vector<1x64xf32>
    %c2 = arith.constant 2 : index
    %c0_16 = arith.constant 0 : index
    %32 = vector.load %arg12[%c2, %c0_16] : memref<11x64xf32, #tpu.memory_space<vmem>>, vector<8x64xf32>
    %33 = vector.broadcast %31 : vector<1x64xf32> to vector<8x64xf32>
    %34 = arith.mulf %32, %33 : vector<8x64xf32>
    %35 = arith.addf %28, %34 : vector<8x64xf32>
    %36 = vector.extract_strided_slice %11 {offsets = [3, 0], sizes = [1, 64], strides = [1, 1]} : vector<4x64xf32> to vector<1x64xf32>
    %37 = vector.extract_strided_slice %11 {offsets = [0, 0], sizes = [1, 64], strides = [1, 1]} : vector<4x64xf32> to vector<1x64xf32>
    %38 = arith.select %0, %36, %37 : vector<1x64xf32>
    %c3 = arith.constant 3 : index
    %c0_17 = arith.constant 0 : index
    %39 = vector.load %arg12[%c3, %c0_17] : memref<11x64xf32, #tpu.memory_space<vmem>>, vector<8x64xf32>
    %40 = vector.broadcast %38 : vector<1x64xf32> to vector<8x64xf32>
    %41 = arith.mulf %39, %40 : vector<8x64xf32>
    %42 = arith.addf %35, %41 : vector<8x64xf32>
    %43 = arith.negf %42 : vector<8x64xf32>
    %44 = math.exp %43 : vector<8x64xf32>
    %cst = arith.constant 1.000000e+00 : f32
    %45 = vector.broadcast %cst : f32 to vector<8x64xf32>
    %46 = arith.addf %45, %44 : vector<8x64xf32>
    %47 = arith.divf %45, %46 : vector<8x64xf32>
    %48 = arith.mulf %42, %47 : vector<8x64xf32>
    %c0_18 = arith.constant 0 : index
    %c0_19 = arith.constant 0 : index
    %c0_20 = arith.constant 0 : index
    %49 = vector.load %arg6[%c0_18, %c0_19, %c0_20] : memref<1x64x18xf32, #tpu.memory_space<vmem>>, vector<1x64x18xf32>
    %50 = vector.shape_cast %49 : vector<1x64x18xf32> to vector<64x18xf32>
    %cst_21 = arith.constant dense<0.000000e+00> : vector<8x18xf32>
    %51 = tpu.matmul %48, %50, %cst_21 {dimension_numbers = #tpu.dot_dimension_numbers<[1], [0], [0], [1], [0, 0, 1, 1], [], []>} : vector<8x64xf32>, vector<64x18xf32>, vector<8x18xf32> -> vector<8x18xf32>
    %52 = vector.extract_strided_slice %51 {offsets = [0, 0], sizes = [8, 2], strides = [1, 1]} : vector<8x18xf32> to vector<8x2xf32>
    %c0_22 = arith.constant 0 : index
    %c0_23 = arith.constant 0 : index
    %c0_24 = arith.constant 0 : index
    %53 = vector.load %arg7[%c0_22, %c0_23, %c0_24] : memref<1x2x64xf32, #tpu.memory_space<vmem>>, vector<1x2x64xf32>
    %54 = vector.shape_cast %53 : vector<1x2x64xf32> to vector<2x64xf32>
    %cst_25 = arith.constant dense<0.000000e+00> : vector<8x64xf32>
    %55 = tpu.matmul %52, %54, %cst_25 {dimension_numbers = #tpu.dot_dimension_numbers<[1], [0], [0], [1], [0, 0, 1, 1], [], []>} : vector<8x2xf32>, vector<2x64xf32>, vector<8x64xf32> -> vector<8x64xf32>
    %c0_26 = arith.constant 0 : index
    %c0_27 = arith.constant 0 : index
    %c0_28 = arith.constant 0 : index
    %56 = vector.load %arg8[%c0_26, %c0_27, %c0_28] : memref<1x1x64xf32, #tpu.memory_space<vmem>>, vector<1x1x64xf32>
    %57 = vector.shape_cast %56 : vector<1x1x64xf32> to vector<1x64xf32>
    %58 = vector.broadcast %57 : vector<1x64xf32> to vector<8x64xf32>
    %59 = arith.addf %55, %58 : vector<8x64xf32>
    %cst_29 = arith.constant 0.000000e+00 : f32
    %60 = vector.broadcast %cst_29 : f32 to vector<8x64xf32>
    %61 = arith.maximumf %59, %60 : vector<8x64xf32>
    %62 = math.absf %59 : vector<8x64xf32>
    %cst_30 = arith.constant 0.000000e+00 : f32
    %63 = vector.broadcast %cst_30 : f32 to vector<8x64xf32>
    %64 = arith.subf %63, %62 : vector<8x64xf32>
    %65 = math.exp %64 : vector<8x64xf32>
    %cst_31 = arith.constant 1.000000e+00 : f32
    %66 = vector.broadcast %cst_31 : f32 to vector<8x64xf32>
    %67 = arith.addf %66, %65 : vector<8x64xf32>
    %68 = math.log %67 : vector<8x64xf32>
    %69 = arith.addf %61, %68 : vector<8x64xf32>
    %70 = vector.extract_strided_slice %51 {offsets = [0, 2], sizes = [8, 8], strides = [1, 1]} : vector<8x18xf32> to vector<8x8xf32>
    %71 = vector.extract_strided_slice %51 {offsets = [0, 10], sizes = [8, 8], strides = [1, 1]} : vector<8x18xf32> to vector<8x8xf32>
    %c0_32 = arith.constant 0 : index
    %c0_33 = arith.constant 0 : index
    %c0_34 = arith.constant 0 : index
    %72 = vector.load %arg9[%c0_32, %c0_33, %c0_34] : memref<1x8x64xf32, #tpu.memory_space<vmem>>, vector<1x8x64xf32>
    %73 = vector.shape_cast %72 : vector<1x8x64xf32> to vector<8x64xf32>
    %74 = arith.mulf %69, %48 : vector<8x64xf32>
    %75 = tpu.iota {dimensions = array<i32: 0>} : vector<8x8xi32>
    %76 = tpu.iota {dimensions = array<i32: 1>} : vector<8x8xi32>
    %77 = arith.cmpi eq, %75, %76 : vector<8x8xi32>
    %78 = arith.extui %77 : vector<8x8xi1> to vector<8x8xi32>
    %79 = arith.sitofp %78 : vector<8x8xi32> to vector<8x8xf32>
    %80 = vector.extract_strided_slice %69 {offsets = [0, 0], sizes = [1, 64], strides = [1, 1]} : vector<8x64xf32> to vector<1x64xf32>
    %81 = vector.broadcast %80 : vector<1x64xf32> to vector<8x64xf32>
    %82 = arith.mulf %81, %73 : vector<8x64xf32>
    %83 = math.exp %82 : vector<8x64xf32>
    %c0_35 = arith.constant 0 : index
    %c0_36 = arith.constant 0 : index
    %84 = vector.load %arg13[%c0_35, %c0_36] : memref<64x64xf32, #tpu.memory_space<vmem>>, vector<8x64xf32>
    tpu.vector_store %arg13[%c0_35, %c0_36], %83 {strides = array<i32>} : memref<64x64xf32, #tpu.memory_space<vmem>>, vector<8x64xf32>,
    %85 = vector.extract_strided_slice %70 {offsets = [0, 0], sizes = [1, 8], strides = [1, 1]} : vector<8x8xf32> to vector<1x8xf32>
    %86 = vector.broadcast %85 : vector<1x8xf32> to vector<8x8xf32>
    %87 = arith.mulf %79, %86 : vector<8x8xf32>
    %cst_37 = arith.constant dense<0.000000e+00> : vector<8xf32>
    %88 = vector.multi_reduction <add>, %87, %cst_37 [1] : vector<8x8xf32> to vector<8xf32>
    %89 = vector.shape_cast %88 : vector<8xf32> to vector<8x1xf32>
    %90 = vector.extract_strided_slice %71 {offsets = [0, 0], sizes = [1, 8], strides = [1, 1]} : vector<8x8xf32> to vector<1x8xf32>
    %91 = vector.broadcast %90 : vector<1x8xf32> to vector<8x8xf32>
    %92 = arith.mulf %79, %91 : vector<8x8xf32>
    %cst_38 = arith.constant dense<0.000000e+00> : vector<8xf32>
    %93 = vector.multi_reduction <add>, %92, %cst_38 [1] : vector<8x8xf32> to vector<8xf32>
    %94 = vector.shape_cast %93 : vector<8xf32> to vector<8x1xf32>
    %95 = vector.extract_strided_slice %74 {offsets = [0, 0], sizes = [1, 64], strides = [1, 1]} : vector<8x64xf32> to vector<1x64xf32>
    %96 = vector.broadcast %89 : vector<8x1xf32> to vector<8x64xf32>
    %97 = vector.broadcast %95 : vector<1x64xf32> to vector<8x64xf32>
    %98 = arith.mulf %96, %97 : vector<8x64xf32>
    %c0_39 = arith.constant 0 : index
    %c0_40 = arith.constant 0 : index
    %99 = vector.load %arg14[%c0_39, %c0_40] : memref<64x64xf32, #tpu.memory_space<vmem>>, vector<8x64xf32>
    tpu.vector_store %arg14[%c0_39, %c0_40], %98 {strides = array<i32>} : memref<64x64xf32, #tpu.memory_space<vmem>>, vector<8x64xf32>,
    %c0_41 = arith.constant 0 : index
    %c0_42 = arith.constant 0 : index
    %100 = vector.load %arg15[%c0_41, %c0_42] : memref<64x1xf32, #tpu.memory_space<vmem>>, vector<8x1xf32>
    tpu.vector_store %arg15[%c0_41, %c0_42], %94 {strides = array<i32>} : memref<64x1xf32, #tpu.memory_space<vmem>>, vector<8x1xf32>,
    %101 = vector.extract_strided_slice %69 {offsets = [1, 0], sizes = [1, 64], strides = [1, 1]} : vector<8x64xf32> to vector<1x64xf32>
    %102 = vector.broadcast %101 : vector<1x64xf32> to vector<8x64xf32>
    %103 = arith.mulf %102, %73 : vector<8x64xf32>
    %104 = math.exp %103 : vector<8x64xf32>
    %c8 = arith.constant 8 : index
    %c0_43 = arith.constant 0 : index
    %105 = vector.load %arg13[%c8, %c0_43] : memref<64x64xf32, #tpu.memory_space<vmem>>, vector<8x64xf32>
    tpu.vector_store %arg13[%c8, %c0_43], %104 {strides = array<i32>} : memref<64x64xf32, #tpu.memory_space<vmem>>, vector<8x64xf32>,
    %106 = vector.extract_strided_slice %70 {offsets = [1, 0], sizes = [1, 8], strides = [1, 1]} : vector<8x8xf32> to vector<1x8xf32>
    %107 = vector.broadcast %106 : vector<1x8xf32> to vector<8x8xf32>
    %108 = arith.mulf %79, %107 : vector<8x8xf32>
    %cst_44 = arith.constant dense<0.000000e+00> : vector<8xf32>
    %109 = vector.multi_reduction <add>, %108, %cst_44 [1] : vector<8x8xf32> to vector<8xf32>
    %110 = vector.shape_cast %109 : vector<8xf32> to vector<8x1xf32>
    %111 = vector.extract_strided_slice %71 {offsets = [1, 0], sizes = [1, 8], strides = [1, 1]} : vector<8x8xf32> to vector<1x8xf32>
    %112 = vector.broadcast %111 : vector<1x8xf32> to vector<8x8xf32>
    %113 = arith.mulf %79, %112 : vector<8x8xf32>
    %cst_45 = arith.constant dense<0.000000e+00> : vector<8xf32>
    %114 = vector.multi_reduction <add>, %113, %cst_45 [1] : vector<8x8xf32> to vector<8xf32>
    %115 = vector.shape_cast %114 : vector<8xf32> to vector<8x1xf32>
    %116 = vector.extract_strided_slice %74 {offsets = [1, 0], sizes = [1, 64], strides = [1, 1]} : vector<8x64xf32> to vector<1x64xf32>
    %117 = vector.broadcast %110 : vector<8x1xf32> to vector<8x64xf32>
    %118 = vector.broadcast %116 : vector<1x64xf32> to vector<8x64xf32>
    %119 = arith.mulf %117, %118 : vector<8x64xf32>
    %c8_46 = arith.constant 8 : index
    %c0_47 = arith.constant 0 : index
    %120 = vector.load %arg14[%c8_46, %c0_47] : memref<64x64xf32, #tpu.memory_space<vmem>>, vector<8x64xf32>
    tpu.vector_store %arg14[%c8_46, %c0_47], %119 {strides = array<i32>} : memref<64x64xf32, #tpu.memory_space<vmem>>, vector<8x64xf32>,
    %c8_48 = arith.constant 8 : index
    %c0_49 = arith.constant 0 : index
    %121 = vector.load %arg15[%c8_48, %c0_49] : memref<64x1xf32, #tpu.memory_space<vmem>>, vector<8x1xf32>
    tpu.vector_store %arg15[%c8_48, %c0_49], %115 {strides = array<i32>} : memref<64x1xf32, #tpu.memory_space<vmem>>, vector<8x1xf32>,
    %122 = vector.extract_strided_slice %69 {offsets = [2, 0], sizes = [1, 64], strides = [1, 1]} : vector<8x64xf32> to vector<1x64xf32>
    %123 = vector.broadcast %122 : vector<1x64xf32> to vector<8x64xf32>
    %124 = arith.mulf %123, %73 : vector<8x64xf32>
    %125 = math.exp %124 : vector<8x64xf32>
    %c16 = arith.constant 16 : index
    %c0_50 = arith.constant 0 : index
    %126 = vector.load %arg13[%c16, %c0_50] : memref<64x64xf32, #tpu.memory_space<vmem>>, vector<8x64xf32>
    tpu.vector_store %arg13[%c16, %c0_50], %125 {strides = array<i32>} : memref<64x64xf32, #tpu.memory_space<vmem>>, vector<8x64xf32>,
    %127 = vector.extract_strided_slice %70 {offsets = [2, 0], sizes = [1, 8], strides = [1, 1]} : vector<8x8xf32> to vector<1x8xf32>
    %128 = vector.broadcast %127 : vector<1x8xf32> to vector<8x8xf32>
    %129 = arith.mulf %79, %128 : vector<8x8xf32>
    %cst_51 = arith.constant dense<0.000000e+00> : vector<8xf32>
    %130 = vector.multi_reduction <add>, %129, %cst_51 [1] : vector<8x8xf32> to vector<8xf32>
    %131 = vector.shape_cast %130 : vector<8xf32> to vector<8x1xf32>
    %132 = vector.extract_strided_slice %71 {offsets = [2, 0], sizes = [1, 8], strides = [1, 1]} : vector<8x8xf32> to vector<1x8xf32>
    %133 = vector.broadcast %132 : vector<1x8xf32> to vector<8x8xf32>
    %134 = arith.mulf %79, %133 : vector<8x8xf32>
    %cst_52 = arith.constant dense<0.000000e+00> : vector<8xf32>
    %135 = vector.multi_reduction <add>, %134, %cst_52 [1] : vector<8x8xf32> to vector<8xf32>
    %136 = vector.shape_cast %135 : vector<8xf32> to vector<8x1xf32>
    %137 = vector.extract_strided_slice %74 {offsets = [2, 0], sizes = [1, 64], strides = [1, 1]} : vector<8x64xf32> to vector<1x64xf32>
    %138 = vector.broadcast %131 : vector<8x1xf32> to vector<8x64xf32>
    %139 = vector.broadcast %137 : vector<1x64xf32> to vector<8x64xf32>
    %140 = arith.mulf %138, %139 : vector<8x64xf32>
    %c16_53 = arith.constant 16 : index
    %c0_54 = arith.constant 0 : index
    %141 = vector.load %arg14[%c16_53, %c0_54] : memref<64x64xf32, #tpu.memory_space<vmem>>, vector<8x64xf32>
    tpu.vector_store %arg14[%c16_53, %c0_54], %140 {strides = array<i32>} : memref<64x64xf32, #tpu.memory_space<vmem>>, vector<8x64xf32>,
    %c16_55 = arith.constant 16 : index
    %c0_56 = arith.constant 0 : index
    %142 = vector.load %arg15[%c16_55, %c0_56] : memref<64x1xf32, #tpu.memory_space<vmem>>, vector<8x1xf32>
    tpu.vector_store %arg15[%c16_55, %c0_56], %136 {strides = array<i32>} : memref<64x1xf32, #tpu.memory_space<vmem>>, vector<8x1xf32>,
    %143 = vector.extract_strided_slice %69 {offsets = [3, 0], sizes = [1, 64], strides = [1, 1]} : vector<8x64xf32> to vector<1x64xf32>
    %144 = vector.broadcast %143 : vector<1x64xf32> to vector<8x64xf32>
    %145 = arith.mulf %144, %73 : vector<8x64xf32>
    %146 = math.exp %145 : vector<8x64xf32>
    %c24 = arith.constant 24 : index
    %c0_57 = arith.constant 0 : index
    %147 = vector.load %arg13[%c24, %c0_57] : memref<64x64xf32, #tpu.memory_space<vmem>>, vector<8x64xf32>
    tpu.vector_store %arg13[%c24, %c0_57], %146 {strides = array<i32>} : memref<64x64xf32, #tpu.memory_space<vmem>>, vector<8x64xf32>,
    %148 = vector.extract_strided_slice %70 {offsets = [3, 0], sizes = [1, 8], strides = [1, 1]} : vector<8x8xf32> to vector<1x8xf32>
    %149 = vector.broadcast %148 : vector<1x8xf32> to vector<8x8xf32>
    %150 = arith.mulf %79, %149 : vector<8x8xf32>
    %cst_58 = arith.constant dense<0.000000e+00> : vector<8xf32>
    %151 = vector.multi_reduction <add>, %150, %cst_58 [1] : vector<8x8xf32> to vector<8xf32>
    %152 = vector.shape_cast %151 : vector<8xf32> to vector<8x1xf32>
    %153 = vector.extract_strided_slice %71 {offsets = [3, 0], sizes = [1, 8], strides = [1, 1]} : vector<8x8xf32> to vector<1x8xf32>
    %154 = vector.broadcast %153 : vector<1x8xf32> to vector<8x8xf32>
    %155 = arith.mulf %79, %154 : vector<8x8xf32>
    %cst_59 = arith.constant dense<0.000000e+00> : vector<8xf32>
    %156 = vector.multi_reduction <add>, %155, %cst_59 [1] : vector<8x8xf32> to vector<8xf32>
    %157 = vector.shape_cast %156 : vector<8xf32> to vector<8x1xf32>
    %158 = vector.extract_strided_slice %74 {offsets = [3, 0], sizes = [1, 64], strides = [1, 1]} : vector<8x64xf32> to vector<1x64xf32>
    %159 = vector.broadcast %152 : vector<8x1xf32> to vector<8x64xf32>
    %160 = vector.broadcast %158 : vector<1x64xf32> to vector<8x64xf32>
    %161 = arith.mulf %159, %160 : vector<8x64xf32>
    %c24_60 = arith.constant 24 : index
    %c0_61 = arith.constant 0 : index
    %162 = vector.load %arg14[%c24_60, %c0_61] : memref<64x64xf32, #tpu.memory_space<vmem>>, vector<8x64xf32>
    tpu.vector_store %arg14[%c24_60, %c0_61], %161 {strides = array<i32>} : memref<64x64xf32, #tpu.memory_space<vmem>>, vector<8x64xf32>,
    %c24_62 = arith.constant 24 : index
    %c0_63 = arith.constant 0 : index
    %163 = vector.load %arg15[%c24_62, %c0_63] : memref<64x1xf32, #tpu.memory_space<vmem>>, vector<8x1xf32>
    tpu.vector_store %arg15[%c24_62, %c0_63], %157 {strides = array<i32>} : memref<64x1xf32, #tpu.memory_space<vmem>>, vector<8x1xf32>,
    %164 = vector.extract_strided_slice %69 {offsets = [4, 0], sizes = [1, 64], strides = [1, 1]} : vector<8x64xf32> to vector<1x64xf32>
    %165 = vector.broadcast %164 : vector<1x64xf32> to vector<8x64xf32>
    %166 = arith.mulf %165, %73 : vector<8x64xf32>
    %167 = math.exp %166 : vector<8x64xf32>
    %c32 = arith.constant 32 : index
    %c0_64 = arith.constant 0 : index
    %168 = vector.load %arg13[%c32, %c0_64] : memref<64x64xf32, #tpu.memory_space<vmem>>, vector<8x64xf32>
    tpu.vector_store %arg13[%c32, %c0_64], %167 {strides = array<i32>} : memref<64x64xf32, #tpu.memory_space<vmem>>, vector<8x64xf32>,
    %169 = vector.extract_strided_slice %70 {offsets = [4, 0], sizes = [1, 8], strides = [1, 1]} : vector<8x8xf32> to vector<1x8xf32>
    %170 = vector.broadcast %169 : vector<1x8xf32> to vector<8x8xf32>
    %171 = arith.mulf %79, %170 : vector<8x8xf32>
    %cst_65 = arith.constant dense<0.000000e+00> : vector<8xf32>
    %172 = vector.multi_reduction <add>, %171, %cst_65 [1] : vector<8x8xf32> to vector<8xf32>
    %173 = vector.shape_cast %172 : vector<8xf32> to vector<8x1xf32>
    %174 = vector.extract_strided_slice %71 {offsets = [4, 0], sizes = [1, 8], strides = [1, 1]} : vector<8x8xf32> to vector<1x8xf32>
    %175 = vector.broadcast %174 : vector<1x8xf32> to vector<8x8xf32>
    %176 = arith.mulf %79, %175 : vector<8x8xf32>
    %cst_66 = arith.constant dense<0.000000e+00> : vector<8xf32>
    %177 = vector.multi_reduction <add>, %176, %cst_66 [1] : vector<8x8xf32> to vector<8xf32>
    %178 = vector.shape_cast %177 : vector<8xf32> to vector<8x1xf32>
    %179 = vector.extract_strided_slice %74 {offsets = [4, 0], sizes = [1, 64], strides = [1, 1]} : vector<8x64xf32> to vector<1x64xf32>
    %180 = vector.broadcast %173 : vector<8x1xf32> to vector<8x64xf32>
    %181 = vector.broadcast %179 : vector<1x64xf32> to vector<8x64xf32>
    %182 = arith.mulf %180, %181 : vector<8x64xf32>
    %c32_67 = arith.constant 32 : index
    %c0_68 = arith.constant 0 : index
    %183 = vector.load %arg14[%c32_67, %c0_68] : memref<64x64xf32, #tpu.memory_space<vmem>>, vector<8x64xf32>
    tpu.vector_store %arg14[%c32_67, %c0_68], %182 {strides = array<i32>} : memref<64x64xf32, #tpu.memory_space<vmem>>, vector<8x64xf32>,
    %c32_69 = arith.constant 32 : index
    %c0_70 = arith.constant 0 : index
    %184 = vector.load %arg15[%c32_69, %c0_70] : memref<64x1xf32, #tpu.memory_space<vmem>>, vector<8x1xf32>
    tpu.vector_store %arg15[%c32_69, %c0_70], %178 {strides = array<i32>} : memref<64x1xf32, #tpu.memory_space<vmem>>, vector<8x1xf32>,
    %185 = vector.extract_strided_slice %69 {offsets = [5, 0], sizes = [1, 64], strides = [1, 1]} : vector<8x64xf32> to vector<1x64xf32>
    %186 = vector.broadcast %185 : vector<1x64xf32> to vector<8x64xf32>
    %187 = arith.mulf %186, %73 : vector<8x64xf32>
    %188 = math.exp %187 : vector<8x64xf32>
    %c40 = arith.constant 40 : index
    %c0_71 = arith.constant 0 : index
    %189 = vector.load %arg13[%c40, %c0_71] : memref<64x64xf32, #tpu.memory_space<vmem>>, vector<8x64xf32>
    tpu.vector_store %arg13[%c40, %c0_71], %188 {strides = array<i32>} : memref<64x64xf32, #tpu.memory_space<vmem>>, vector<8x64xf32>,
    %190 = vector.extract_strided_slice %70 {offsets = [5, 0], sizes = [1, 8], strides = [1, 1]} : vector<8x8xf32> to vector<1x8xf32>
    %191 = vector.broadcast %190 : vector<1x8xf32> to vector<8x8xf32>
    %192 = arith.mulf %79, %191 : vector<8x8xf32>
    %cst_72 = arith.constant dense<0.000000e+00> : vector<8xf32>
    %193 = vector.multi_reduction <add>, %192, %cst_72 [1] : vector<8x8xf32> to vector<8xf32>
    %194 = vector.shape_cast %193 : vector<8xf32> to vector<8x1xf32>
    %195 = vector.extract_strided_slice %71 {offsets = [5, 0], sizes = [1, 8], strides = [1, 1]} : vector<8x8xf32> to vector<1x8xf32>
    %196 = vector.broadcast %195 : vector<1x8xf32> to vector<8x8xf32>
    %197 = arith.mulf %79, %196 : vector<8x8xf32>
    %cst_73 = arith.constant dense<0.000000e+00> : vector<8xf32>
    %198 = vector.multi_reduction <add>, %197, %cst_73 [1] : vector<8x8xf32> to vector<8xf32>
    %199 = vector.shape_cast %198 : vector<8xf32> to vector<8x1xf32>
    %200 = vector.extract_strided_slice %74 {offsets = [5, 0], sizes = [1, 64], strides = [1, 1]} : vector<8x64xf32> to vector<1x64xf32>
    %201 = vector.broadcast %194 : vector<8x1xf32> to vector<8x64xf32>
    %202 = vector.broadcast %200 : vector<1x64xf32> to vector<8x64xf32>
    %203 = arith.mulf %201, %202 : vector<8x64xf32>
    %c40_74 = arith.constant 40 : index
    %c0_75 = arith.constant 0 : index
    %204 = vector.load %arg14[%c40_74, %c0_75] : memref<64x64xf32, #tpu.memory_space<vmem>>, vector<8x64xf32>
    tpu.vector_store %arg14[%c40_74, %c0_75], %203 {strides = array<i32>} : memref<64x64xf32, #tpu.memory_space<vmem>>, vector<8x64xf32>,
    %c40_76 = arith.constant 40 : index
    %c0_77 = arith.constant 0 : index
    %205 = vector.load %arg15[%c40_76, %c0_77] : memref<64x1xf32, #tpu.memory_space<vmem>>, vector<8x1xf32>
    tpu.vector_store %arg15[%c40_76, %c0_77], %199 {strides = array<i32>} : memref<64x1xf32, #tpu.memory_space<vmem>>, vector<8x1xf32>,
    %206 = vector.extract_strided_slice %69 {offsets = [6, 0], sizes = [1, 64], strides = [1, 1]} : vector<8x64xf32> to vector<1x64xf32>
    %207 = vector.broadcast %206 : vector<1x64xf32> to vector<8x64xf32>
    %208 = arith.mulf %207, %73 : vector<8x64xf32>
    %209 = math.exp %208 : vector<8x64xf32>
    %c48 = arith.constant 48 : index
    %c0_78 = arith.constant 0 : index
    %210 = vector.load %arg13[%c48, %c0_78] : memref<64x64xf32, #tpu.memory_space<vmem>>, vector<8x64xf32>
    tpu.vector_store %arg13[%c48, %c0_78], %209 {strides = array<i32>} : memref<64x64xf32, #tpu.memory_space<vmem>>, vector<8x64xf32>,
    %211 = vector.extract_strided_slice %70 {offsets = [6, 0], sizes = [1, 8], strides = [1, 1]} : vector<8x8xf32> to vector<1x8xf32>
    %212 = vector.broadcast %211 : vector<1x8xf32> to vector<8x8xf32>
    %213 = arith.mulf %79, %212 : vector<8x8xf32>
    %cst_79 = arith.constant dense<0.000000e+00> : vector<8xf32>
    %214 = vector.multi_reduction <add>, %213, %cst_79 [1] : vector<8x8xf32> to vector<8xf32>
    %215 = vector.shape_cast %214 : vector<8xf32> to vector<8x1xf32>
    %216 = vector.extract_strided_slice %71 {offsets = [6, 0], sizes = [1, 8], strides = [1, 1]} : vector<8x8xf32> to vector<1x8xf32>
    %217 = vector.broadcast %216 : vector<1x8xf32> to vector<8x8xf32>
    %218 = arith.mulf %79, %217 : vector<8x8xf32>
    %cst_80 = arith.constant dense<0.000000e+00> : vector<8xf32>
    %219 = vector.multi_reduction <add>, %218, %cst_80 [1] : vector<8x8xf32> to vector<8xf32>
    %220 = vector.shape_cast %219 : vector<8xf32> to vector<8x1xf32>
    %221 = vector.extract_strided_slice %74 {offsets = [6, 0], sizes = [1, 64], strides = [1, 1]} : vector<8x64xf32> to vector<1x64xf32>
    %222 = vector.broadcast %215 : vector<8x1xf32> to vector<8x64xf32>
    %223 = vector.broadcast %221 : vector<1x64xf32> to vector<8x64xf32>
    %224 = arith.mulf %222, %223 : vector<8x64xf32>
    %c48_81 = arith.constant 48 : index
    %c0_82 = arith.constant 0 : index
    %225 = vector.load %arg14[%c48_81, %c0_82] : memref<64x64xf32, #tpu.memory_space<vmem>>, vector<8x64xf32>
    tpu.vector_store %arg14[%c48_81, %c0_82], %224 {strides = array<i32>} : memref<64x64xf32, #tpu.memory_space<vmem>>, vector<8x64xf32>,
    %c48_83 = arith.constant 48 : index
    %c0_84 = arith.constant 0 : index
    %226 = vector.load %arg15[%c48_83, %c0_84] : memref<64x1xf32, #tpu.memory_space<vmem>>, vector<8x1xf32>
    tpu.vector_store %arg15[%c48_83, %c0_84], %220 {strides = array<i32>} : memref<64x1xf32, #tpu.memory_space<vmem>>, vector<8x1xf32>,
    %227 = vector.extract_strided_slice %69 {offsets = [7, 0], sizes = [1, 64], strides = [1, 1]} : vector<8x64xf32> to vector<1x64xf32>
    %228 = vector.broadcast %227 : vector<1x64xf32> to vector<8x64xf32>
    %229 = arith.mulf %228, %73 : vector<8x64xf32>
    %230 = math.exp %229 : vector<8x64xf32>
    %c56 = arith.constant 56 : index
    %c0_85 = arith.constant 0 : index
    %231 = vector.load %arg13[%c56, %c0_85] : memref<64x64xf32, #tpu.memory_space<vmem>>, vector<8x64xf32>
    tpu.vector_store %arg13[%c56, %c0_85], %230 {strides = array<i32>} : memref<64x64xf32, #tpu.memory_space<vmem>>, vector<8x64xf32>,
    %232 = vector.extract_strided_slice %70 {offsets = [7, 0], sizes = [1, 8], strides = [1, 1]} : vector<8x8xf32> to vector<1x8xf32>
    %233 = vector.broadcast %232 : vector<1x8xf32> to vector<8x8xf32>
    %234 = arith.mulf %79, %233 : vector<8x8xf32>
    %cst_86 = arith.constant dense<0.000000e+00> : vector<8xf32>
    %235 = vector.multi_reduction <add>, %234, %cst_86 [1] : vector<8x8xf32> to vector<8xf32>
    %236 = vector.shape_cast %235 : vector<8xf32> to vector<8x1xf32>
    %237 = vector.extract_strided_slice %71 {offsets = [7, 0], sizes = [1, 8], strides = [1, 1]} : vector<8x8xf32> to vector<1x8xf32>
    %238 = vector.broadcast %237 : vector<1x8xf32> to vector<8x8xf32>
    %239 = arith.mulf %79, %238 : vector<8x8xf32>
    %cst_87 = arith.constant dense<0.000000e+00> : vector<8xf32>
    %240 = vector.multi_reduction <add>, %239, %cst_87 [1] : vector<8x8xf32> to vector<8xf32>
    %241 = vector.shape_cast %240 : vector<8xf32> to vector<8x1xf32>
    %242 = vector.extract_strided_slice %74 {offsets = [7, 0], sizes = [1, 64], strides = [1, 1]} : vector<8x64xf32> to vector<1x64xf32>
    %243 = vector.broadcast %236 : vector<8x1xf32> to vector<8x64xf32>
    %244 = vector.broadcast %242 : vector<1x64xf32> to vector<8x64xf32>
    %245 = arith.mulf %243, %244 : vector<8x64xf32>
    %c56_88 = arith.constant 56 : index
    %c0_89 = arith.constant 0 : index
    %246 = vector.load %arg14[%c56_88, %c0_89] : memref<64x64xf32, #tpu.memory_space<vmem>>, vector<8x64xf32>
    tpu.vector_store %arg14[%c56_88, %c0_89], %245 {strides = array<i32>} : memref<64x64xf32, #tpu.memory_space<vmem>>, vector<8x64xf32>,
    %c56_90 = arith.constant 56 : index
    %c0_91 = arith.constant 0 : index
    %247 = vector.load %arg15[%c56_90, %c0_91] : memref<64x1xf32, #tpu.memory_space<vmem>>, vector<8x1xf32>
    tpu.vector_store %arg15[%c56_90, %c0_91], %241 {strides = array<i32>} : memref<64x1xf32, #tpu.memory_space<vmem>>, vector<8x1xf32>,
    %cst_92 = arith.constant 0.000000e+00 : f32
    %248 = vector.broadcast %cst_92 : f32 to vector<8x64xf32>
    %c0_i32_93 = arith.constant 0 : i32
    %c7_i32 = arith.constant 7 : i32
    %249 = arith.subi %c7_i32, %c0_i32_93 : i32
    %250 = arith.select %0, %c0_i32_93, %249 : i32
    %c8_i32 = arith.constant 8 : i32
    %251 = arith.muli %250, %c8_i32 : i32
    %252 = tpu.assume_multiple %251, 8 : i32
    %253 = arith.index_cast %252 : i32 to index
    %c0_94 = arith.constant 0 : index
    %254 = vector.load %arg13[%253, %c0_94] : memref<64x64xf32, #tpu.memory_space<vmem>>, vector<8x64xf32>
    %255 = arith.mulf %254, %248 : vector<8x64xf32>
    %256 = arith.index_cast %252 : i32 to index
    %c0_95 = arith.constant 0 : index
    %257 = vector.load %arg14[%256, %c0_95] : memref<64x64xf32, #tpu.memory_space<vmem>>, vector<8x64xf32>
    %258 = arith.addf %255, %257 : vector<8x64xf32>
    %259 = arith.index_cast %252 : i32 to index
    %c0_96 = arith.constant 0 : index
    %260 = vector.load %arg15[%259, %c0_96] : memref<64x1xf32, #tpu.memory_space<vmem>>, vector<8x1xf32>
    %261 = vector.broadcast %260 : vector<8x1xf32> to vector<8x64xf32>
    %262 = arith.mulf %261, %258 : vector<8x64xf32>
    %cst_97 = arith.constant dense<0.000000e+00> : vector<64xf32>
    %263 = vector.multi_reduction <add>, %262, %cst_97 [0] : vector<8x64xf32> to vector<64xf32>
    %264 = vector.shape_cast %263 : vector<64xf32> to vector<1x64xf32>
    %265 = arith.index_cast %250 : i32 to index
    %c0_98 = arith.constant 0 : index
    %266 = vector.load %arg16[%265, %c0_98] : memref<8x64xf32, #tpu.memory_space<vmem>>, vector<1x64xf32>
    tpu.vector_store %arg16[%265, %c0_98], %264 {strides = array<i32>} : memref<8x64xf32, #tpu.memory_space<vmem>>, vector<1x64xf32>,
    %c1_i32 = arith.constant 1 : i32
    %c7_i32_99 = arith.constant 7 : i32
    %267 = arith.subi %c7_i32_99, %c1_i32 : i32
    %268 = arith.select %0, %c1_i32, %267 : i32
    %c8_i32_100 = arith.constant 8 : i32
    %269 = arith.muli %268, %c8_i32_100 : i32
    %270 = tpu.assume_multiple %269, 8 : i32
    %271 = arith.index_cast %270 : i32 to index
    %c0_101 = arith.constant 0 : index
    %272 = vector.load %arg13[%271, %c0_101] : memref<64x64xf32, #tpu.memory_space<vmem>>, vector<8x64xf32>
    %273 = arith.mulf %272, %258 : vector<8x64xf32>
    %274 = arith.index_cast %270 : i32 to index
    %c0_102 = arith.constant 0 : index
    %275 = vector.load %arg14[%274, %c0_102] : memref<64x64xf32, #tpu.memory_space<vmem>>, vector<8x64xf32>
    %276 = arith.addf %273, %275 : vector<8x64xf32>
    %277 = arith.index_cast %270 : i32 to index
    %c0_103 = arith.constant 0 : index
    %278 = vector.load %arg15[%277, %c0_103] : memref<64x1xf32, #tpu.memory_space<vmem>>, vector<8x1xf32>
    %279 = vector.broadcast %278 : vector<8x1xf32> to vector<8x64xf32>
    %280 = arith.mulf %279, %276 : vector<8x64xf32>
    %cst_104 = arith.constant dense<0.000000e+00> : vector<64xf32>
    %281 = vector.multi_reduction <add>, %280, %cst_104 [0] : vector<8x64xf32> to vector<64xf32>
    %282 = vector.shape_cast %281 : vector<64xf32> to vector<1x64xf32>
    %283 = arith.index_cast %268 : i32 to index
    %c0_105 = arith.constant 0 : index
    %284 = vector.load %arg16[%283, %c0_105] : memref<8x64xf32, #tpu.memory_space<vmem>>, vector<1x64xf32>
    tpu.vector_store %arg16[%283, %c0_105], %282 {strides = array<i32>} : memref<8x64xf32, #tpu.memory_space<vmem>>, vector<1x64xf32>,
    %c2_i32 = arith.constant 2 : i32
    %c7_i32_106 = arith.constant 7 : i32
    %285 = arith.subi %c7_i32_106, %c2_i32 : i32
    %286 = arith.select %0, %c2_i32, %285 : i32
    %c8_i32_107 = arith.constant 8 : i32
    %287 = arith.muli %286, %c8_i32_107 : i32
    %288 = tpu.assume_multiple %287, 8 : i32
    %289 = arith.index_cast %288 : i32 to index
    %c0_108 = arith.constant 0 : index
    %290 = vector.load %arg13[%289, %c0_108] : memref<64x64xf32, #tpu.memory_space<vmem>>, vector<8x64xf32>
    %291 = arith.mulf %290, %276 : vector<8x64xf32>
    %292 = arith.index_cast %288 : i32 to index
    %c0_109 = arith.constant 0 : index
    %293 = vector.load %arg14[%292, %c0_109] : memref<64x64xf32, #tpu.memory_space<vmem>>, vector<8x64xf32>
    %294 = arith.addf %291, %293 : vector<8x64xf32>
    %295 = arith.index_cast %288 : i32 to index
    %c0_110 = arith.constant 0 : index
    %296 = vector.load %arg15[%295, %c0_110] : memref<64x1xf32, #tpu.memory_space<vmem>>, vector<8x1xf32>
    %297 = vector.broadcast %296 : vector<8x1xf32> to vector<8x64xf32>
    %298 = arith.mulf %297, %294 : vector<8x64xf32>
    %cst_111 = arith.constant dense<0.000000e+00> : vector<64xf32>
    %299 = vector.multi_reduction <add>, %298, %cst_111 [0] : vector<8x64xf32> to vector<64xf32>
    %300 = vector.shape_cast %299 : vector<64xf32> to vector<1x64xf32>
    %301 = arith.index_cast %286 : i32 to index
    %c0_112 = arith.constant 0 : index
    %302 = vector.load %arg16[%301, %c0_112] : memref<8x64xf32, #tpu.memory_space<vmem>>, vector<1x64xf32>
    tpu.vector_store %arg16[%301, %c0_112], %300 {strides = array<i32>} : memref<8x64xf32, #tpu.memory_space<vmem>>, vector<1x64xf32>,
    %c3_i32 = arith.constant 3 : i32
    %c7_i32_113 = arith.constant 7 : i32
    %303 = arith.subi %c7_i32_113, %c3_i32 : i32
    %304 = arith.select %0, %c3_i32, %303 : i32
    %c8_i32_114 = arith.constant 8 : i32
    %305 = arith.muli %304, %c8_i32_114 : i32
    %306 = tpu.assume_multiple %305, 8 : i32
    %307 = arith.index_cast %306 : i32 to index
    %c0_115 = arith.constant 0 : index
    %308 = vector.load %arg13[%307, %c0_115] : memref<64x64xf32, #tpu.memory_space<vmem>>, vector<8x64xf32>
    %309 = arith.mulf %308, %294 : vector<8x64xf32>
    %310 = arith.index_cast %306 : i32 to index
    %c0_116 = arith.constant 0 : index
    %311 = vector.load %arg14[%310, %c0_116] : memref<64x64xf32, #tpu.memory_space<vmem>>, vector<8x64xf32>
    %312 = arith.addf %309, %311 : vector<8x64xf32>
    %313 = arith.index_cast %306 : i32 to index
    %c0_117 = arith.constant 0 : index
    %314 = vector.load %arg15[%313, %c0_117] : memref<64x1xf32, #tpu.memory_space<vmem>>, vector<8x1xf32>
    %315 = vector.broadcast %314 : vector<8x1xf32> to vector<8x64xf32>
    %316 = arith.mulf %315, %312 : vector<8x64xf32>
    %cst_118 = arith.constant dense<0.000000e+00> : vector<64xf32>
    %317 = vector.multi_reduction <add>, %316, %cst_118 [0] : vector<8x64xf32> to vector<64xf32>
    %318 = vector.shape_cast %317 : vector<64xf32> to vector<1x64xf32>
    %319 = arith.index_cast %304 : i32 to index
    %c0_119 = arith.constant 0 : index
    %320 = vector.load %arg16[%319, %c0_119] : memref<8x64xf32, #tpu.memory_space<vmem>>, vector<1x64xf32>
    tpu.vector_store %arg16[%319, %c0_119], %318 {strides = array<i32>} : memref<8x64xf32, #tpu.memory_space<vmem>>, vector<1x64xf32>,
    %c4_i32 = arith.constant 4 : i32
    %c7_i32_120 = arith.constant 7 : i32
    %321 = arith.subi %c7_i32_120, %c4_i32 : i32
    %322 = arith.select %0, %c4_i32, %321 : i32
    %c8_i32_121 = arith.constant 8 : i32
    %323 = arith.muli %322, %c8_i32_121 : i32
    %324 = tpu.assume_multiple %323, 8 : i32
    %325 = arith.index_cast %324 : i32 to index
    %c0_122 = arith.constant 0 : index
    %326 = vector.load %arg13[%325, %c0_122] : memref<64x64xf32, #tpu.memory_space<vmem>>, vector<8x64xf32>
    %327 = arith.mulf %326, %312 : vector<8x64xf32>
    %328 = arith.index_cast %324 : i32 to index
    %c0_123 = arith.constant 0 : index
    %329 = vector.load %arg14[%328, %c0_123] : memref<64x64xf32, #tpu.memory_space<vmem>>, vector<8x64xf32>
    %330 = arith.addf %327, %329 : vector<8x64xf32>
    %331 = arith.index_cast %324 : i32 to index
    %c0_124 = arith.constant 0 : index
    %332 = vector.load %arg15[%331, %c0_124] : memref<64x1xf32, #tpu.memory_space<vmem>>, vector<8x1xf32>
    %333 = vector.broadcast %332 : vector<8x1xf32> to vector<8x64xf32>
    %334 = arith.mulf %333, %330 : vector<8x64xf32>
    %cst_125 = arith.constant dense<0.000000e+00> : vector<64xf32>
    %335 = vector.multi_reduction <add>, %334, %cst_125 [0] : vector<8x64xf32> to vector<64xf32>
    %336 = vector.shape_cast %335 : vector<64xf32> to vector<1x64xf32>
    %337 = arith.index_cast %322 : i32 to index
    %c0_126 = arith.constant 0 : index
    %338 = vector.load %arg16[%337, %c0_126] : memref<8x64xf32, #tpu.memory_space<vmem>>, vector<1x64xf32>
    tpu.vector_store %arg16[%337, %c0_126], %336 {strides = array<i32>} : memref<8x64xf32, #tpu.memory_space<vmem>>, vector<1x64xf32>,
    %c5_i32 = arith.constant 5 : i32
    %c7_i32_127 = arith.constant 7 : i32
    %339 = arith.subi %c7_i32_127, %c5_i32 : i32
    %340 = arith.select %0, %c5_i32, %339 : i32
    %c8_i32_128 = arith.constant 8 : i32
    %341 = arith.muli %340, %c8_i32_128 : i32
    %342 = tpu.assume_multiple %341, 8 : i32
    %343 = arith.index_cast %342 : i32 to index
    %c0_129 = arith.constant 0 : index
    %344 = vector.load %arg13[%343, %c0_129] : memref<64x64xf32, #tpu.memory_space<vmem>>, vector<8x64xf32>
    %345 = arith.mulf %344, %330 : vector<8x64xf32>
    %346 = arith.index_cast %342 : i32 to index
    %c0_130 = arith.constant 0 : index
    %347 = vector.load %arg14[%346, %c0_130] : memref<64x64xf32, #tpu.memory_space<vmem>>, vector<8x64xf32>
    %348 = arith.addf %345, %347 : vector<8x64xf32>
    %349 = arith.index_cast %342 : i32 to index
    %c0_131 = arith.constant 0 : index
    %350 = vector.load %arg15[%349, %c0_131] : memref<64x1xf32, #tpu.memory_space<vmem>>, vector<8x1xf32>
    %351 = vector.broadcast %350 : vector<8x1xf32> to vector<8x64xf32>
    %352 = arith.mulf %351, %348 : vector<8x64xf32>
    %cst_132 = arith.constant dense<0.000000e+00> : vector<64xf32>
    %353 = vector.multi_reduction <add>, %352, %cst_132 [0] : vector<8x64xf32> to vector<64xf32>
    %354 = vector.shape_cast %353 : vector<64xf32> to vector<1x64xf32>
    %355 = arith.index_cast %340 : i32 to index
    %c0_133 = arith.constant 0 : index
    %356 = vector.load %arg16[%355, %c0_133] : memref<8x64xf32, #tpu.memory_space<vmem>>, vector<1x64xf32>
    tpu.vector_store %arg16[%355, %c0_133], %354 {strides = array<i32>} : memref<8x64xf32, #tpu.memory_space<vmem>>, vector<1x64xf32>,
    %c6_i32 = arith.constant 6 : i32
    %c7_i32_134 = arith.constant 7 : i32
    %357 = arith.subi %c7_i32_134, %c6_i32 : i32
    %358 = arith.select %0, %c6_i32, %357 : i32
    %c8_i32_135 = arith.constant 8 : i32
    %359 = arith.muli %358, %c8_i32_135 : i32
    %360 = tpu.assume_multiple %359, 8 : i32
    %361 = arith.index_cast %360 : i32 to index
    %c0_136 = arith.constant 0 : index
    %362 = vector.load %arg13[%361, %c0_136] : memref<64x64xf32, #tpu.memory_space<vmem>>, vector<8x64xf32>
    %363 = arith.mulf %362, %348 : vector<8x64xf32>
    %364 = arith.index_cast %360 : i32 to index
    %c0_137 = arith.constant 0 : index
    %365 = vector.load %arg14[%364, %c0_137] : memref<64x64xf32, #tpu.memory_space<vmem>>, vector<8x64xf32>
    %366 = arith.addf %363, %365 : vector<8x64xf32>
    %367 = arith.index_cast %360 : i32 to index
    %c0_138 = arith.constant 0 : index
    %368 = vector.load %arg15[%367, %c0_138] : memref<64x1xf32, #tpu.memory_space<vmem>>, vector<8x1xf32>
    %369 = vector.broadcast %368 : vector<8x1xf32> to vector<8x64xf32>
    %370 = arith.mulf %369, %366 : vector<8x64xf32>
    %cst_139 = arith.constant dense<0.000000e+00> : vector<64xf32>
    %371 = vector.multi_reduction <add>, %370, %cst_139 [0] : vector<8x64xf32> to vector<64xf32>
    %372 = vector.shape_cast %371 : vector<64xf32> to vector<1x64xf32>
    %373 = arith.index_cast %358 : i32 to index
    %c0_140 = arith.constant 0 : index
    %374 = vector.load %arg16[%373, %c0_140] : memref<8x64xf32, #tpu.memory_space<vmem>>, vector<1x64xf32>
    tpu.vector_store %arg16[%373, %c0_140], %372 {strides = array<i32>} : memref<8x64xf32, #tpu.memory_space<vmem>>, vector<1x64xf32>,
    %c7_i32_141 = arith.constant 7 : i32
    %c7_i32_142 = arith.constant 7 : i32
    %375 = arith.subi %c7_i32_142, %c7_i32_141 : i32
    %376 = arith.select %0, %c7_i32_141, %375 : i32
    %c8_i32_143 = arith.constant 8 : i32
    %377 = arith.muli %376, %c8_i32_143 : i32
    %378 = tpu.assume_multiple %377, 8 : i32
    %379 = arith.index_cast %378 : i32 to index
    %c0_144 = arith.constant 0 : index
    %380 = vector.load %arg13[%379, %c0_144] : memref<64x64xf32, #tpu.memory_space<vmem>>, vector<8x64xf32>
    %381 = arith.mulf %380, %366 : vector<8x64xf32>
    %382 = arith.index_cast %378 : i32 to index
    %c0_145 = arith.constant 0 : index
    %383 = vector.load %arg14[%382, %c0_145] : memref<64x64xf32, #tpu.memory_space<vmem>>, vector<8x64xf32>
    %384 = arith.addf %381, %383 : vector<8x64xf32>
    %385 = arith.index_cast %378 : i32 to index
    %c0_146 = arith.constant 0 : index
    %386 = vector.load %arg15[%385, %c0_146] : memref<64x1xf32, #tpu.memory_space<vmem>>, vector<8x1xf32>
    %387 = vector.broadcast %386 : vector<8x1xf32> to vector<8x64xf32>
    %388 = arith.mulf %387, %384 : vector<8x64xf32>
    %cst_147 = arith.constant dense<0.000000e+00> : vector<64xf32>
    %389 = vector.multi_reduction <add>, %388, %cst_147 [0] : vector<8x64xf32> to vector<64xf32>
    %390 = vector.shape_cast %389 : vector<64xf32> to vector<1x64xf32>
    %391 = arith.index_cast %376 : i32 to index
    %c0_148 = arith.constant 0 : index
    %392 = vector.load %arg16[%391, %c0_148] : memref<8x64xf32, #tpu.memory_space<vmem>>, vector<1x64xf32>
    tpu.vector_store %arg16[%391, %c0_148], %390 {strides = array<i32>} : memref<8x64xf32, #tpu.memory_space<vmem>>, vector<1x64xf32>,
    %c8_i32_149 = arith.constant 8 : i32
    %c0_150 = arith.constant 0 : index
    %c0_151 = arith.constant 0 : index
    %393 = vector.load %arg16[%c0_150, %c0_151] : memref<8x64xf32, #tpu.memory_space<vmem>>, vector<8x64xf32>
    %c0_152 = arith.constant 0 : index
    %c0_153 = arith.constant 0 : index
    %c0_154 = arith.constant 0 : index
    %394 = vector.load %arg10[%c0_152, %c0_153, %c0_154] : memref<1x1x64xf32, #tpu.memory_space<vmem>>, vector<1x1x64xf32>
    %395 = vector.shape_cast %394 : vector<1x1x64xf32> to vector<1x64xf32>
    %396 = vector.broadcast %395 : vector<1x64xf32> to vector<8x64xf32>
    %397 = arith.mulf %396, %48 : vector<8x64xf32>
    %398 = arith.addf %393, %397 : vector<8x64xf32>
    %399 = arith.negf %4 : vector<8x64xf32>
    %400 = math.exp %399 : vector<8x64xf32>
    %cst_155 = arith.constant 1.000000e+00 : f32
    %401 = vector.broadcast %cst_155 : f32 to vector<8x64xf32>
    %402 = arith.addf %401, %400 : vector<8x64xf32>
    %403 = arith.divf %401, %402 : vector<8x64xf32>
    %404 = arith.mulf %4, %403 : vector<8x64xf32>
    %405 = arith.mulf %398, %404 : vector<8x64xf32>
    %406 = arith.extui %0 : i1 to i32
    %c0_i32_156 = arith.constant 0 : i32
    %407 = arith.cmpi ne, %406, %c0_i32_156 : i32
    scf.if %407 {
      %c0_159 = arith.constant 0 : index
      %c0_160 = arith.constant 0 : index
      %c0_161 = arith.constant 0 : index
      %411 = vector.load %arg11[%c0_159, %c0_160, %c0_161] : memref<1x8x64xf32, #tpu.memory_space<vmem>>, vector<1x8x64xf32>
      %412 = vector.shape_cast %411 : vector<1x8x64xf32> to vector<8x64xf32>
      %413 = vector.shape_cast %405 : vector<8x64xf32> to vector<1x8x64xf32>
      tpu.vector_store %arg11[%c0_159, %c0_160, %c0_161], %413 {strides = array<i32>} : memref<1x8x64xf32, #tpu.memory_space<vmem>>, vector<1x8x64xf32>,
    } else {
    }
    %true_157 = arith.constant true
    %408 = arith.xori %0, %true_157 : i1
    %409 = arith.extui %408 : i1 to i32
    %c0_i32_158 = arith.constant 0 : i32
    %410 = arith.cmpi ne, %409, %c0_i32_158 : i32
    scf.if %410 {
      %c0_159 = arith.constant 0 : index
      %c0_160 = arith.constant 0 : index
      %c0_161 = arith.constant 0 : index
      %411 = vector.load %arg11[%c0_159, %c0_160, %c0_161] : memref<1x8x64xf32, #tpu.memory_space<vmem>>, vector<1x8x64xf32>
      %412 = vector.shape_cast %411 : vector<1x8x64xf32> to vector<8x64xf32>
      %413 = arith.addf %412, %405 : vector<8x64xf32>
      %c0_162 = arith.constant 0 : index
      %c0_163 = arith.constant 0 : index
      %c0_164 = arith.constant 0 : index
      %414 = vector.load %arg11[%c0_162, %c0_163, %c0_164] : memref<1x8x64xf32, #tpu.memory_space<vmem>>, vector<1x8x64xf32>
      %415 = vector.shape_cast %414 : vector<1x8x64xf32> to vector<8x64xf32>
      %416 = vector.shape_cast %413 : vector<8x64xf32> to vector<1x8x64xf32>
      tpu.vector_store %arg11[%c0_162, %c0_163, %c0_164], %416 {strides = array<i32>} : memref<1x8x64xf32, #tpu.memory_space<vmem>>, vector<1x8x64xf32>,
    } else {
    }
    return
  }
  func.func @transform_0(%arg0: i32, %arg1: i32) -> (i32, i32, i32) {
    %c0_i32 = arith.constant 0 : i32
    %c0_i32_0 = arith.constant 0 : i32
    %c0_i32_1 = arith.constant 0 : i32
    return %arg0, %c0_i32, %c0_i32_0 : i32, i32, i32
  }
  func.func @transform_1(%arg0: i32, %arg1: i32) -> (i32, i32, i32) {
    %c0_i32 = arith.constant 0 : i32
    %c0_i32_0 = arith.constant 0 : i32
    %c0_i32_1 = arith.constant 0 : i32
    return %arg0, %c0_i32, %c0_i32_0 : i32, i32, i32
  }
  func.func @transform_2(%arg0: i32, %arg1: i32) -> (i32, i32, i32) {
    %c0_i32 = arith.constant 0 : i32
    %c0_i32_0 = arith.constant 0 : i32
    %c0_i32_1 = arith.constant 0 : i32
    return %arg1, %c0_i32, %c0_i32_0 : i32, i32, i32
  }
  func.func @transform_3(%arg0: i32, %arg1: i32) -> (i32, i32, i32) {
    %c0_i32 = arith.constant 0 : i32
    %c0_i32_0 = arith.constant 0 : i32
    %c0_i32_1 = arith.constant 0 : i32
    return %arg1, %c0_i32, %c0_i32_0 : i32, i32, i32
  }
  func.func @transform_4(%arg0: i32, %arg1: i32) -> (i32, i32, i32) {
    %c0_i32 = arith.constant 0 : i32
    %c0_i32_0 = arith.constant 0 : i32
    %c0_i32_1 = arith.constant 0 : i32
    return %arg1, %c0_i32, %c0_i32_0 : i32, i32, i32
  }
  func.func @transform_5(%arg0: i32, %arg1: i32) -> (i32, i32, i32) {
    %c0_i32 = arith.constant 0 : i32
    %c0_i32_0 = arith.constant 0 : i32
    %c0_i32_1 = arith.constant 0 : i32
    return %arg1, %c0_i32, %c0_i32_0 : i32, i32, i32
  }
  func.func @transform_6(%arg0: i32, %arg1: i32) -> (i32, i32, i32) {
    %c0_i32 = arith.constant 0 : i32
    %c0_i32_0 = arith.constant 0 : i32
    %c0_i32_1 = arith.constant 0 : i32
    return %arg1, %c0_i32, %c0_i32_0 : i32, i32, i32
  }
  func.func @transform_7(%arg0: i32, %arg1: i32) -> (i32, i32, i32) {
    %c0_i32 = arith.constant 0 : i32
    %c0_i32_0 = arith.constant 0 : i32
    %c0_i32_1 = arith.constant 0 : i32
    return %arg1, %c0_i32, %c0_i32_0 : i32, i32, i32
  }
  func.func @transform_8(%arg0: i32, %arg1: i32) -> (i32, i32, i32) {
    %c0_i32 = arith.constant 0 : i32
    %c0_i32_0 = arith.constant 0 : i32
    %c0_i32_1 = arith.constant 0 : i32
    return %arg1, %c0_i32, %c0_i32_0 : i32, i32, i32
  }
  func.func @transform_9(%arg0: i32, %arg1: i32) -> (i32, i32, i32) {
    %c0_i32 = arith.constant 0 : i32
    %c0_i32_0 = arith.constant 0 : i32
    %c0_i32_1 = arith.constant 0 : i32
    return %arg0, %c0_i32, %c0_i32_0 : i32, i32, i32
  }
}

</mosaic_0001>

<llo_original>
// kernel: _lambda_.6
$region0: #{_lambda_.6}
  #allocation0 [shape = 'u32[]', space=smem, size = 0x4, offset = 0x4, fixed_abs, tag = 'smem constant byte address 0x4 - core index']
  #allocation1 [shape = 'u32[144,128]{1,0:T(1,128)}', space=vmem, size = 0x12000, scoped, tag = 'internal scratch']
  %s0 = inlined_call_operand.vmem [shape: f32[16,32], index: 0, kind: input, shape index: {}]
  %s1 = inlined_call_operand.vmem [shape: f32[1,32], index: 1, kind: input, shape index: {}]
  %s2 = inlined_call_operand.vmem [shape: f32[1,32], index: 2, kind: input, shape index: {}]
  %s3 = inlined_call_operand.vmem [shape: f32[32,128], index: 3, kind: input, shape index: {}]
  %s4 = inlined_call_operand.vmem [shape: f32[16,128], index: 4, kind: output, shape index: {}]
  %s5 = sld [smem:[#allocation0]]
  $region26: #{_lambda_.6} parent=0
    _
  %s7 = ssub.s32 1, %s5
  %s8 = scalar_select 0, %s7, %s5
  // Predicated region
  $region2: #{_lambda_.6} parent=0 // pred_check
    _
  $region3: #{_lambda_.6} parent=0 // pred_check_branch
    %10 = sbr.rel (0) target = $region5
  $region4: #{_lambda_.6} parent=0 // pred_region
    _
  $region5: #{_lambda_.6} parent=0 // pred_fallthru
    _
  // Predicated region
  $region6: #{_lambda_.6} parent=0 // pred_check
    _
  $region7: #{_lambda_.6} parent=0 // pred_check_branch
    %12 = sbr.rel (0) target = $region9
  $region8: #{_lambda_.6} parent=0 // pred_region
    _
  $region9: #{_lambda_.6} parent=0 // pred_fallthru
    _
  // Predicated region
  $region10: #{_lambda_.6} parent=0 // pred_check
    _
  $region11: #{_lambda_.6} parent=0 // pred_check_branch
    %14 = sbr.rel (0) target = $region13
  $region12: #{_lambda_.6} parent=0 // pred_region
    _
  $region13: #{_lambda_.6} parent=0 // pred_fallthru
    _
  // Predicated region
  $region14: #{_lambda_.6} parent=0 // pred_check
    _
  $region15: #{_lambda_.6} parent=0 // pred_check_branch
    %16 = sbr.rel (0) target = $region17
  $region16: #{_lambda_.6} parent=0 // pred_region
    _
  $region17: #{_lambda_.6} parent=0 // pred_fallthru
    _
  %v17 = vld [vmem:[%s0] sm:$0xff]
  %v18 = vld [vmem:[%s0 + $0x8] sm:$0xff]
  %vm19 = vcmask 261120
  %v20 = vsel %vm19, %v17, 0.0
  %21 = vadd.xlane.f32.xlu0 %v20
  %v22 = vpop.xlane.xlu0 %21
  %v23 = vsel %vm19, %v18, 0.0
  %24 = vadd.xlane.f32.xlu0 %v23
  %v25 = vpop.xlane.xlu0 %24
  %v26 = vrcp.pop 32.0
  %v27 = vmul.f32 %v22, %v26
  %v28 = vmul.f32 %v25, %v26
  %v29 = vsub.f32 %v17, %v27
  %v30 = vsub.f32 %v18, %v28
  %v31 = vmul.f32 %v29, %v29
  %v32 = vmul.f32 %v30, %v30
  %v33 = vsel %vm19, %v31, 0.0
  %34 = vadd.xlane.f32.xlu0 %v33
  %v35 = vpop.xlane.xlu0 %34
  %v36 = vsel %vm19, %v32, 0.0
  %37 = vadd.xlane.f32.xlu0 %v36
  %v38 = vpop.xlane.xlu0 %37
  %v39 = vmul.f32 %v35, %v26
  %v40 = vmul.f32 %v38, %v26
  %v41 = vadd.f32 %v39, 1e-12
  %v42 = vadd.f32 %v40, 1e-12
  %v43 = vrsqrt.pop %v41
  %v44 = vrsqrt.pop %v42
  %v45 = vmul.f32 %v29, %v43
  %v46 = vmul.f32 %v30, %v44
  %v47 = vld [vmem:[%s1] sm:$0x1]
  %v49 = vlaneseq
  %v50 = vshrl.u32 %v49, 7
  %v51 = vsub.s32 0, %v50
  %v52 = vrot.slane %v47, %v51
  %v54 = vmul.f32 %v45, %v52
  %v55 = vmul.f32 %v46, %v52
  %v56 = vld [vmem:[%s2] sm:$0x1]
  %v58 = vlaneseq
  %v59 = vshrl.u32 %v58, 7
  %v60 = vsub.s32 0, %v59
  %v61 = vrot.slane %v56, %v60
  %v63 = vadd.f32 %v54, %v61
  %v64 = vadd.f32 %v55, %v61
  %v65 = vld [vmem:[%s3] sm:$0xff]
  %v66 = vld [vmem:[%s3 + $0x8] sm:$0xff]
  %v67 = vld [vmem:[%s3 + $0x10] sm:$0xff]
  %v68 = vld [vmem:[%s3 + $0x18] sm:$0xff]
  %v70 = vsel %vm19, %v63, 0
  %v73 = vsel %vm19, %v64, 0
  %75 = vmatprep.subr.mxu0 0.0
  %76 = vmatpush1.msra.mxu0 %v65
  %77 = vmatprep.subr.mxu0 0.0
  %78 = vmatpush1.msra.mxu0 %v66
  %79 = vmatprep.subr.mxu0 0.0
  %80 = vmatpush1.msra.mxu0 %v67
  %81 = vmatprep.subr.mxu0 0.0
  %82 = vmatpush1.msra.mxu0 %v68
  %83 = vmatprep.subr.mxu0 0.0
  %84 = vmatpush1.msra.mxu0 0.0
  %85 = vmatprep.subr.mxu0 0.0
  %86 = vmatpush1.msra.mxu0 0.0
  %87 = vmatprep.subr.mxu0 0.0
  %88 = vmatpush1.msra.mxu0 0.0
  %89 = vmatprep.subr.mxu0 0.0
  %90 = vmatpush1.msra.mxu0 0.0
  %91 = vmatprep.subr.mxu0 0.0
  %92 = vmatpush1.msra.mxu0 0.0
  %93 = vmatprep.subr.mxu0 0.0
  %94 = vmatpush1.msra.mxu0 0.0
  %95 = vmatprep.subr.mxu0 0.0
  %96 = vmatpush1.msra.mxu0 0.0
  %97 = vmatprep.subr.mxu0 0.0
  %98 = vmatpush1.msra.mxu0 0.0
  %99 = vmatprep.subr.mxu0 0.0
  %100 = vmatpush1.msra.mxu0 0.0
  %101 = vmatprep.subr.mxu0 0.0
  %102 = vmatpush1.msra.mxu0 0.0
  %103 = vmatprep.subr.mxu0 0.0
  %104 = vmatpush1.msra.mxu0 0.0
  %105 = vmatprep.subr.mxu0 0.0
  %106 = vmatpush1.msra.mxu0 0.0
  %107 = vmatprep.subr.mxu0 0.0
  %108 = vmatpush1.msra.mxu0 0.0
  %109 = vmatprep.subr.mxu0 0.0
  %110 = vmatpush1.msra.mxu0 0.0
  %111 = vmatprep.subr.mxu0 0.0
  %112 = vmatpush1.msra.mxu0 0.0
  %113 = vmatprep.subr.mxu0 0.0
  %114 = vmatpush1.msra.mxu0 0.0
  %115 = vmatprep.subr.mxu0 0.0
  %116 = vmatpush1.msra.mxu0 0.0
  %117 = vmatprep.subr.mxu0 0.0
  %118 = vmatpush1.msra.mxu0 0.0
  %119 = vmatprep.subr.mxu0 0.0
  %120 = vmatpush1.msra.mxu0 0.0
  %121 = vmatprep.subr.mxu0 0.0
  %122 = vmatpush1.msra.mxu0 0.0
  %123 = vmatprep.subr.mxu0 0.0
  %124 = vmatpush1.msra.mxu0 0.0
  %125 = vmatprep.subr.mxu0 0.0
  %126 = vmatpush1.msra.mxu0 0.0
  %127 = vmatprep.subr.mxu0 0.0
  %128 = vmatpush1.msra.mxu0 0.0
  %129 = vmatprep.subr.mxu0 0.0
  %130 = vmatpush1.msra.mxu0 0.0
  %131 = vmatprep.subr.mxu0 0.0
  %132 = vmatpush1.msra.mxu0 0.0
  %133 = vmatprep.subr.mxu0 0.0
  %134 = vmatpush1.msra.mxu0 0.0
  %135 = vmatprep.subr.mxu0 0.0
  %136 = vmatpush1.msra.mxu0 0.0
  %137 = vmatprep.subr.mxu0 0.0
  %138 = vmatpush1.msra.mxu0 0.0
  %139 = vmatprep.mubr.f32.mxu0 0.0
  %140 = vmatmul.mubr.f32.gmra.mrb[0].mxu0 %v70
  %v141 = vpop.f32.mrb[0].mxu0
  %v142 = vadd.f32 0.0, %v141
  %v143 = vpop.f32.mrb[0].mxu0
  %144 = vmatprep.mubr.f32.mxu0 0.0
  %145 = vmatmul.mubr.f32.gmra.mrb[0].mxu0 %v73
  %v146 = vpop.f32.mrb[0].mxu0
  %v147 = vadd.f32 0.0, %v146
  %v148 = vpop.f32.mrb[0].mxu0
  %149 = vdwg.mxu0
  %150 = vst [vmem:[%s4] sm:$0xff] %v142
  %151 = vst [vmem:[%s4 + $0x8] sm:$0xff] %v147
  // Predicated region
  $region18: #{_lambda_.6} parent=0 // pred_check
    _
  $region19: #{_lambda_.6} parent=0 // pred_check_branch
    %153 = sbr.rel (0) target = $region21
  $region20: #{_lambda_.6} parent=0 // pred_region
    _
  $region21: #{_lambda_.6} parent=0 // pred_fallthru
    _
  // Predicated region
  $region22: #{_lambda_.6} parent=0 // pred_check
    _
  $region23: #{_lambda_.6} parent=0 // pred_check_branch
    %155 = sbr.rel (0) target = $region25
  $region24: #{_lambda_.6} parent=0 // pred_region
    _
  $region25: #{_lambda_.6} parent=0 // pred_fallthru
    _

// kernel: _lambda_.8
$region0: #{_lambda_.8}
  #allocation0 [shape = 'u32[]', space=smem, size = 0x4, offset = 0x4, fixed_abs, tag = 'smem constant byte address 0x4 - core index']
  #allocation1 [shape = 'u32[144,128]{1,0:T(1,128)}', space=vmem, size = 0x12000, scoped, tag = 'internal scratch']
  %s0 = inlined_call_operand.vmem [shape: f32[16,64], index: 0, kind: input, shape index: {}]
  %s1 = inlined_call_operand.vmem [shape: f32[16,32], index: 1, kind: input, shape index: {}]
  %s2 = inlined_call_operand.vmem [shape: f32[64,32], index: 2, kind: input, shape index: {}]
  %s3 = inlined_call_operand.vmem [shape: f32[1,32], index: 3, kind: input, shape index: {}]
  %s4 = inlined_call_operand.vmem [shape: f32[1,32], index: 4, kind: input, shape index: {}]
  %s5 = inlined_call_operand.vmem [shape: f32[256,32], index: 5, kind: input, shape index: {}]
  %s6 = inlined_call_operand.vmem [shape: f32[32,128], index: 6, kind: input, shape index: {}]
  %s7 = inlined_call_operand.vmem [shape: f32[16,32], index: 7, kind: output, shape index: {}]
  %s8 = sld [smem:[#allocation0]]
  $region38: #{_lambda_.8} parent=0
    _
  %s10 = ssub.s32 1, %s8
  %s11 = scalar_select 0, %s10, %s8
  // Predicated region
  $region2: #{_lambda_.8} parent=0 // pred_check
    _
  $region3: #{_lambda_.8} parent=0 // pred_check_branch
    %13 = sbr.rel (0) target = $region5
  $region4: #{_lambda_.8} parent=0 // pred_region
    _
  $region5: #{_lambda_.8} parent=0 // pred_fallthru
    _
  // Predicated region
  $region6: #{_lambda_.8} parent=0 // pred_check
    _
  $region7: #{_lambda_.8} parent=0 // pred_check_branch
    %15 = sbr.rel (0) target = $region9
  $region8: #{_lambda_.8} parent=0 // pred_region
    _
  $region9: #{_lambda_.8} parent=0 // pred_fallthru
    _
  // Predicated region
  $region10: #{_lambda_.8} parent=0 // pred_check
    _
  $region11: #{_lambda_.8} parent=0 // pred_check_branch
    %17 = sbr.rel (0) target = $region13
  $region12: #{_lambda_.8} parent=0 // pred_region
    _
  $region13: #{_lambda_.8} parent=0 // pred_fallthru
    _
  // Predicated region
  $region14: #{_lambda_.8} parent=0 // pred_check
    _
  $region15: #{_lambda_.8} parent=0 // pred_check_branch
    %19 = sbr.rel (0) target = $region17
  $region16: #{_lambda_.8} parent=0 // pred_region
    _
  $region17: #{_lambda_.8} parent=0 // pred_fallthru
    _
  // Predicated region
  $region18: #{_lambda_.8} parent=0 // pred_check
    _
  $region19: #{_lambda_.8} parent=0 // pred_check_branch
    %21 = sbr.rel (0) target = $region21
  $region20: #{_lambda_.8} parent=0 // pred_region
    _
  $region21: #{_lambda_.8} parent=0 // pred_fallthru
    _
  // Predicated region
  $region22: #{_lambda_.8} parent=0 // pred_check
    _
  $region23: #{_lambda_.8} parent=0 // pred_check_branch
    %23 = sbr.rel (0) target = $region25
  $region24: #{_lambda_.8} parent=0 // pred_region
    _
  $region25: #{_lambda_.8} parent=0 // pred_fallthru
    _
  // Predicated region
  $region26: #{_lambda_.8} parent=0 // pred_check
    _
  $region27: #{_lambda_.8} parent=0 // pred_check_branch
    %25 = sbr.rel (0) target = $region29
  $region28: #{_lambda_.8} parent=0 // pred_region
    _
  $region29: #{_lambda_.8} parent=0 // pred_fallthru
    _
  %v26 = vld [vmem:[%s0] sm:$0xff]
  %v27 = vld [vmem:[%s0 + $0x8] sm:$0xff]
  %v28 = vld [vmem:[%s2] sm:$0xff]
  %v29 = vld [vmem:[%s2 + $0x8] sm:$0xff]
  %v30 = vld [vmem:[%s2 + $0x10] sm:$0xff]
  %v31 = vld [vmem:[%s2 + $0x18] sm:$0xff]
  %v32 = vld [vmem:[%s2 + $0x20] sm:$0xff]
  %v33 = vld [vmem:[%s2 + $0x28] sm:$0xff]
  %v34 = vld [vmem:[%s2 + $0x30] sm:$0xff]
  %v35 = vld [vmem:[%s2 + $0x38] sm:$0xff]
  %vm36 = vcmask 523264
  %v38 = vsel %vm36, %v26, 0
  %v41 = vsel %vm36, %v27, 0
  %43 = vmatprep.subr.mxu0 0.0
  %44 = vmatpush1.msra.mxu0 %v28
  %45 = vmatprep.subr.mxu0 0.0
  %46 = vmatpush1.msra.mxu0 %v29
  %47 = vmatprep.subr.mxu0 0.0
  %48 = vmatpush1.msra.mxu0 %v30
  %49 = vmatprep.subr.mxu0 0.0
  %50 = vmatpush1.msra.mxu0 %v31
  %51 = vmatprep.subr.mxu0 0.0
  %52 = vmatpush1.msra.mxu0 %v32
  %53 = vmatprep.subr.mxu0 0.0
  %54 = vmatpush1.msra.mxu0 %v33
  %55 = vmatprep.subr.mxu0 0.0
  %56 = vmatpush1.msra.mxu0 %v34
  %57 = vmatprep.subr.mxu0 0.0
  %58 = vmatpush1.msra.mxu0 %v35
  %59 = vmatprep.subr.mxu0 0.0
  %60 = vmatpush1.msra.mxu0 0.0
  %61 = vmatprep.subr.mxu0 0.0
  %62 = vmatpush1.msra.mxu0 0.0
  %63 = vmatprep.subr.mxu0 0.0
  %64 = vmatpush1.msra.mxu0 0.0
  %65 = vmatprep.subr.mxu0 0.0
  %66 = vmatpush1.msra.mxu0 0.0
  %67 = vmatprep.subr.mxu0 0.0
  %68 = vmatpush1.msra.mxu0 0.0
  %69 = vmatprep.subr.mxu0 0.0
  %70 = vmatpush1.msra.mxu0 0.0
  %71 = vmatprep.subr.mxu0 0.0
  %72 = vmatpush1.msra.mxu0 0.0
  %73 = vmatprep.subr.mxu0 0.0
  %74 = vmatpush1.msra.mxu0 0.0
  %75 = vmatprep.subr.mxu0 0.0
  %76 = vmatpush1.msra.mxu0 0.0
  %77 = vmatprep.subr.mxu0 0.0
  %78 = vmatpush1.msra.mxu0 0.0
  %79 = vmatprep.subr.mxu0 0.0
  %80 = vmatpush1.msra.mxu0 0.0
  %81 = vmatprep.subr.mxu0 0.0
  %82 = vmatpush1.msra.mxu0 0.0
  %83 = vmatprep.subr.mxu0 0.0
  %84 = vmatpush1.msra.mxu0 0.0
  %85 = vmatprep.subr.mxu0 0.0
  %86 = vmatpush1.msra.mxu0 0.0
  %87 = vmatprep.subr.mxu0 0.0
  %88 = vmatpush1.msra.mxu0 0.0
  %89 = vmatprep.subr.mxu0 0.0
  %90 = vmatpush1.msra.mxu0 0.0
  %91 = vmatprep.subr.mxu0 0.0
  %92 = vmatpush1.msra.mxu0 0.0
  %93 = vmatprep.subr.mxu0 0.0
  %94 = vmatpush1.msra.mxu0 0.0
  %95 = vmatprep.subr.mxu0 0.0
  %96 = vmatpush1.msra.mxu0 0.0
  %97 = vmatprep.subr.mxu0 0.0
  %98 = vmatpush1.msra.mxu0 0.0
  %99 = vmatprep.subr.mxu0 0.0
  %100 = vmatpush1.msra.mxu0 0.0
  %101 = vmatprep.subr.mxu0 0.0
  %102 = vmatpush1.msra.mxu0 0.0
  %103 = vmatprep.subr.mxu0 0.0
  %104 = vmatpush1.msra.mxu0 0.0
  %105 = vmatprep.subr.mxu0 0.0
  %106 = vmatpush1.msra.mxu0 0.0
  %107 = vmatprep.mubr.f32.mxu0 0.0
  %108 = vmatmul.mubr.f32.gmra.mrb[0].mxu0 %v38
  %v109 = vpop.f32.mrb[0].mxu0
  %v110 = vadd.f32 0.0, %v109
  %v111 = vpop.f32.mrb[0].mxu0
  %112 = vmatprep.mubr.f32.mxu0 0.0
  %113 = vmatmul.mubr.f32.gmra.mrb[0].mxu0 %v41
  %v114 = vpop.f32.mrb[0].mxu0
  %v115 = vadd.f32 0.0, %v114
  %v116 = vpop.f32.mrb[0].mxu0
  %117 = vdwg.mxu0
  %vm118 = vcmask 261120
  %v119 = vsel %vm118, %v110, 0.0
  %120 = vadd.xlane.f32.xlu0 %v119
  %v121 = vpop.xlane.xlu0 %120
  %v122 = vsel %vm118, %v115, 0.0
  %123 = vadd.xlane.f32.xlu0 %v122
  %v124 = vpop.xlane.xlu0 %123
  %v125 = vrcp.pop 32.0
  %v126 = vmul.f32 %v121, %v125
  %v127 = vmul.f32 %v124, %v125
  %v128 = vsub.f32 %v110, %v126
  %v129 = vsub.f32 %v115, %v127
  %v130 = vmul.f32 %v128, %v128
  %v131 = vmul.f32 %v129, %v129
  %v132 = vsel %vm118, %v130, 0.0
  %133 = vadd.xlane.f32.xlu0 %v132
  %v134 = vpop.xlane.xlu0 %133
  %v135 = vsel %vm118, %v131, 0.0
  %136 = vadd.xlane.f32.xlu0 %v135
  %v137 = vpop.xlane.xlu0 %136
  %v138 = vmul.f32 %v134, %v125
  %v139 = vmul.f32 %v137, %v125
  %v140 = vadd.f32 %v138, 1e-12
  %v141 = vadd.f32 %v139, 1e-12
  %v142 = vrsqrt.pop %v140
  %v143 = vrsqrt.pop %v141
  %v144 = vmul.f32 %v128, %v142
  %v145 = vmul.f32 %v129, %v143
  %v146 = vld [vmem:[%s3] sm:$0x1]
  %v148 = vlaneseq
  %v149 = vshrl.u32 %v148, 7
  %v150 = vsub.s32 0, %v149
  %v151 = vrot.slane %v146, %v150
  %v153 = vmul.f32 %v144, %v151
  %v154 = vmul.f32 %v145, %v151
  %v155 = vld [vmem:[%s4] sm:$0x1]
  %v157 = vlaneseq
  %v158 = vshrl.u32 %v157, 7
  %v159 = vsub.s32 0, %v158
  %v160 = vrot.slane %v155, %v159
  %v162 = vadd.f32 %v153, %v160
  %v163 = vadd.f32 %v154, %v160
  %v164 = vld [vmem:[%s6] sm:$0xff]
  %v165 = vld [vmem:[%s6 + $0x8] sm:$0xff]
  %v166 = vld [vmem:[%s6 + $0x10] sm:$0xff]
  %v167 = vld [vmem:[%s6 + $0x18] sm:$0xff]
  %v169 = vsel %vm118, %v162, 0
  %v172 = vsel %vm118, %v163, 0
  %174 = vmatprep.subr.mxu0 0.0
  %175 = vmatpush1.msra.mxu0 %v164
  %176 = vmatprep.subr.mxu0 0.0
  %177 = vmatpush1.msra.mxu0 %v165
  %178 = vmatprep.subr.mxu0 0.0
  %179 = vmatpush1.msra.mxu0 %v166
  %180 = vmatprep.subr.mxu0 0.0
  %181 = vmatpush1.msra.mxu0 %v167
  %182 = vmatprep.subr.mxu0 0.0
  %183 = vmatpush1.msra.mxu0 0.0
  %184 = vmatprep.subr.mxu0 0.0
  %185 = vmatpush1.msra.mxu0 0.0
  %186 = vmatprep.subr.mxu0 0.0
  %187 = vmatpush1.msra.mxu0 0.0
  %188 = vmatprep.subr.mxu0 0.0
  %189 = vmatpush1.msra.mxu0 0.0
  %190 = vmatprep.subr.mxu0 0.0
  %191 = vmatpush1.msra.mxu0 0.0
  %192 = vmatprep.subr.mxu0 0.0
  %193 = vmatpush1.msra.mxu0 0.0
  %194 = vmatprep.subr.mxu0 0.0
  %195 = vmatpush1.msra.mxu0 0.0
  %196 = vmatprep.subr.mxu0 0.0
  %197 = vmatpush1.msra.mxu0 0.0
  %198 = vmatprep.subr.mxu0 0.0
  %199 = vmatpush1.msra.mxu0 0.0
  %200 = vmatprep.subr.mxu0 0.0
  %201 = vmatpush1.msra.mxu0 0.0
  %202 = vmatprep.subr.mxu0 0.0
  %203 = vmatpush1.msra.mxu0 0.0
  %204 = vmatprep.subr.mxu0 0.0
  %205 = vmatpush1.msra.mxu0 0.0
  %206 = vmatprep.subr.mxu0 0.0
  %207 = vmatpush1.msra.mxu0 0.0
  %208 = vmatprep.subr.mxu0 0.0
  %209 = vmatpush1.msra.mxu0 0.0
  %210 = vmatprep.subr.mxu0 0.0
  %211 = vmatpush1.msra.mxu0 0.0
  %212 = vmatprep.subr.mxu0 0.0
  %213 = vmatpush1.msra.mxu0 0.0
  %214 = vmatprep.subr.mxu0 0.0
  %215 = vmatpush1.msra.mxu0 0.0
  %216 = vmatprep.subr.mxu0 0.0
  %217 = vmatpush1.msra.mxu0 0.0
  %218 = vmatprep.subr.mxu0 0.0
  %219 = vmatpush1.msra.mxu0 0.0
  %220 = vmatprep.subr.mxu0 0.0
  %221 = vmatpush1.msra.mxu0 0.0
  %222 = vmatprep.subr.mxu0 0.0
  %223 = vmatpush1.msra.mxu0 0.0
  %224 = vmatprep.subr.mxu0 0.0
  %225 = vmatpush1.msra.mxu0 0.0
  %226 = vmatprep.subr.mxu0 0.0
  %227 = vmatpush1.msra.mxu0 0.0
  %228 = vmatprep.subr.mxu0 0.0
  %229 = vmatpush1.msra.mxu0 0.0
  %230 = vmatprep.subr.mxu0 0.0
  %231 = vmatpush1.msra.mxu0 0.0
  %232 = vmatprep.subr.mxu0 0.0
  %233 = vmatpush1.msra.mxu0 0.0
  %234 = vmatprep.subr.mxu0 0.0
  %235 = vmatpush1.msra.mxu0 0.0
  %236 = vmatprep.subr.mxu0 0.0
  %237 = vmatpush1.msra.mxu0 0.0
  %238 = vmatprep.mubr.f32.mxu0 0.0
  %239 = vmatmul.mubr.f32.gmra.mrb[0].mxu0 %v169
  %v240 = vpop.f32.mrb[0].mxu0
  %v241 = vadd.f32 0.0, %v240
  %v242 = vpop.f32.mrb[0].mxu0
  %243 = vmatprep.mubr.f32.mxu0 0.0
  %244 = vmatmul.mubr.f32.gmra.mrb[0].mxu0 %v172
  %v245 = vpop.f32.mrb[0].mxu0
  %v246 = vadd.f32 0.0, %v245
  %v247 = vpop.f32.mrb[0].mxu0
  %248 = vdwg.mxu0
  %v249 = vand.u32 2147483647, %v241
  %vm250 = vcmp.le.f32.partialorder %v249, 0.7853982
  %vm251 = vcmp.lt.s32.totalorder %v241, 0
  %v252 = vand.u32 %v241, 2139095040
  %v253 = vshrl.u32 %v252, 23
  %v254 = vsub.s32 %v253, 127
  %v255 = vand.u32 2147483647, %v241
  %v256 = vand.u32 %v255, 8388607
  %v257 = vor.u32 %v256, 8388608
  %v258 = vsub.s32 0, %v257
  %v259 = vadd.s32 %v254, 1
  %vm260 = vcmp.gt.s32.totalorder %v259, 0
  %v261 = vsel %vm260, %v259, 0
  %v262 = vshrl.u32 %v261, 5
  %v263 = vand.u32 %v261, 31
  %v264 = vsub.s32 32, %v263
  %v265 = vshrl.u32 683565275, %v264
  %v266 = vshll.u32 683565275, %v263
  %v267 = vshrl.u32 2475754826, %v264
  %v268 = vor.u32 %v266, %v267
  %v269 = vshll.u32 2475754826, %v263
  %v270 = vshrl.u32 2131351028, %v264
  %v271 = vor.u32 %v269, %v270
  %v272 = vshll.u32 2131351028, %v263
  %v273 = vshrl.u32 2102212464, %v264
  %v274 = vor.u32 %v272, %v273
  %v275 = vshll.u32 2102212464, %v263
  %v276 = vshrl.u32 920167782, %v264
  %v277 = vor.u32 %v275, %v276
  %v278 = vshll.u32 920167782, %v263
  %v279 = vshrl.u32 1326507024, %v264
  %v280 = vor.u32 %v278, %v279
  %vm281 = vcmp.lt.s32.totalorder %v262, 1
  %vm282 = vcmp.lt.s32.totalorder %v262, 2
  %vm283 = vcmp.lt.s32.totalorder %v262, 3
  %vm284 = vcmp.lt.s32.totalorder %v262, 4
  %v285 = vsel %vm281, %v265, %v268
  %v286 = vsel %vm284, %v274, 2102212464
  %v287 = vsel %vm283, %v271, %v286
  %v288 = vsel %vm282, %v285, %v287
  %v289 = vsel %vm281, %v268, %v271
  %v290 = vsel %vm284, %v277, 920167782
  %v291 = vsel %vm283, %v274, %v290
  %v292 = vsel %vm282, %v289, %v291
  %v293 = vsel %vm281, %v271, %v274
  %v294 = vsel %vm284, %v280, 1326507024
  %v295 = vsel %vm283, %v277, %v294
  %v296 = vsel %vm282, %v293, %v295
  %v297 = vshll.u32 %v257, 8
  %v298 = vmul.u32.u64.compose %v297, %v296
  %v299 = vextract.low.u32 %v298
  %v300 = vextract.high.u32 %v298
  %v301 = vmul.u32.u64.compose %v297, %v292
  %v302 = vextract.low.u32 %v301
  %v303 = vextract.high.u32 %v301
  %v304 = vmul.u32 %v297, %v288
  %v305 = vadd.s32 %v300, %v302
  %vm306 = vc.u32 %v300, %v302
  %v307 = vadd.s32 %v303, 1
  %v308 = vsel %vm306, %v307, %v303
  %v309 = vadd.s32 %v304, %v308
  %v310 = vadd.s32 %v309, 536870912
  %v311 = vshrl.u32 %v310, 30
  %v312 = vshll.u32 %v311, 30
  %v313 = vsub.s32 %v309, %v312
  %vm314 = vcmp.lt.s32.totalorder %v313, 0
  %v315 = vsub.s32 0, %v313
  %v316 = vsel %vm314, %v315, %v313
  %v317 = vclz %v316
  %v318 = vsub.s32 %v317, 2
  %vm319 = vcmp.gt.s32.totalorder 0, %v318
  %v320 = vsel %vm319, 0, %v318
  %v321 = vsub.s32 32, %v320
  %v322 = vshll.u32 %v313, %v320
  %v323 = vshrl.u32 %v305, %v321
  %v324 = vor.u32 %v322, %v323
  %v325 = vsub.s32 4294967266, %v320
  %v326 = vadd.s32 %v325, 127
  %v327 = vshll.u32 %v326, 23
  %v328 = vor.u32 4788187, %v327
  %v329 = vand.u32 2147483647, %v328
  %v331 = vcvt.s32.f32 %v324
  %v332 = vmul.f32 %v331, %v329
  %v333 = vxor.u32 %v332, 2147483648
  %v334 = vsel %vm251, %v333, %v332
  %v335 = vsub.s32 4, %v311
  %v336 = vsel %vm251, %v335, %v311
  %v337 = vsel %vm250, %v241, %v334
  %v338 = vsel %vm250, 0, %v336
  %v339 = vcosq.f32.pop %v337
  %v340 = vsinq.f32.pop %v337
  %vm341 = vweird.f32 %v241
  %v342 = vand.u32 %v338, 3
  %vm343 = vcmp.lt.s32.totalorder %v342, 2
  %vm344 = vcmp.eq.s32.totalorder %v342, 0
  %v345 = vxor.u32 %v340, 2147483648
  %v346 = vsel %vm344, %v339, %v345
  %vm347 = vcmp.eq.s32.totalorder %v342, 2
  %v348 = vxor.u32 %v339, 2147483648
  %v349 = vsel %vm347, %v348, %v340
  %v350 = vsel %vm343, %v346, %v349
  %v351 = vsel %vm341, nan, %v350
  %v352 = vand.u32 2147483647, %v246
  %vm353 = vcmp.le.f32.partialorder %v352, 0.7853982
  %vm354 = vcmp.lt.s32.totalorder %v246, 0
  %v355 = vand.u32 %v246, 2139095040
  %v356 = vshrl.u32 %v355, 23
  %v357 = vsub.s32 %v356, 127
  %v358 = vand.u32 2147483647, %v246
  %v359 = vand.u32 %v358, 8388607
  %v360 = vor.u32 %v359, 8388608
  %v361 = vsub.s32 0, %v360
  %v362 = vadd.s32 %v357, 1
  %vm363 = vcmp.gt.s32.totalorder %v362, 0
  %v364 = vsel %vm363, %v362, 0
  %v365 = vshrl.u32 %v364, 5
  %v366 = vand.u32 %v364, 31
  %v367 = vsub.s32 32, %v366
  %v368 = vshrl.u32 683565275, %v367
  %v369 = vshll.u32 683565275, %v366
  %v370 = vshrl.u32 2475754826, %v367
  %v371 = vor.u32 %v369, %v370
  %v372 = vshll.u32 2475754826, %v366
  %v373 = vshrl.u32 2131351028, %v367
  %v374 = vor.u32 %v372, %v373
  %v375 = vshll.u32 2131351028, %v366
  %v376 = vshrl.u32 2102212464, %v367
  %v377 = vor.u32 %v375, %v376
  %v378 = vshll.u32 2102212464, %v366
  %v379 = vshrl.u32 920167782, %v367
  %v380 = vor.u32 %v378, %v379
  %v381 = vshll.u32 920167782, %v366
  %v382 = vshrl.u32 1326507024, %v367
  %v383 = vor.u32 %v381, %v382
  %vm384 = vcmp.lt.s32.totalorder %v365, 1
  %vm385 = vcmp.lt.s32.totalorder %v365, 2
  %vm386 = vcmp.lt.s32.totalorder %v365, 3
  %vm387 = vcmp.lt.s32.totalorder %v365, 4
  %v388 = vsel %vm384, %v368, %v371
  %v389 = vsel %vm387, %v377, 2102212464
  %v390 = vsel %vm386, %v374, %v389
  %v391 = vsel %vm385, %v388, %v390
  %v392 = vsel %vm384, %v371, %v374
  %v393 = vsel %vm387, %v380, 920167782
  %v394 = vsel %vm386, %v377, %v393
  %v395 = vsel %vm385, %v392, %v394
  %v396 = vsel %vm384, %v374, %v377
  %v397 = vsel %vm387, %v383, 1326507024
  %v398 = vsel %vm386, %v380, %v397
  %v399 = vsel %vm385, %v396, %v398
  %v400 = vshll.u32 %v360, 8
  %v401 = vmul.u32.u64.compose %v400, %v399
  %v402 = vextract.low.u32 %v401
  %v403 = vextract.high.u32 %v401
  %v404 = vmul.u32.u64.compose %v400, %v395
  %v405 = vextract.low.u32 %v404
  %v406 = vextract.high.u32 %v404
  %v407 = vmul.u32 %v400, %v391
  %v408 = vadd.s32 %v403, %v405
  %vm409 = vc.u32 %v403, %v405
  %v410 = vadd.s32 %v406, 1
  %v411 = vsel %vm409, %v410, %v406
  %v412 = vadd.s32 %v407, %v411
  %v413 = vadd.s32 %v412, 536870912
  %v414 = vshrl.u32 %v413, 30
  %v415 = vshll.u32 %v414, 30
  %v416 = vsub.s32 %v412, %v415
  %vm417 = vcmp.lt.s32.totalorder %v416, 0
  %v418 = vsub.s32 0, %v416
  %v419 = vsel %vm417, %v418, %v416
  %v420 = vclz %v419
  %v421 = vsub.s32 %v420, 2
  %vm422 = vcmp.gt.s32.totalorder 0, %v421
  %v423 = vsel %vm422, 0, %v421
  %v424 = vsub.s32 32, %v423
  %v425 = vshll.u32 %v416, %v423
  %v426 = vshrl.u32 %v408, %v424
  %v427 = vor.u32 %v425, %v426
  %v428 = vsub.s32 4294967266, %v423
  %v429 = vadd.s32 %v428, 127
  %v430 = vshll.u32 %v429, 23
  %v431 = vor.u32 4788187, %v430
  %v432 = vand.u32 2147483647, %v431
  %v434 = vcvt.s32.f32 %v427
  %v435 = vmul.f32 %v434, %v432
  %v436 = vxor.u32 %v435, 2147483648
  %v437 = vsel %vm354, %v436, %v435
  %v438 = vsub.s32 4, %v414
  %v439 = vsel %vm354, %v438, %v414
  %v440 = vsel %vm353, %v246, %v437
  %v441 = vsel %vm353, 0, %v439
  %v442 = vcosq.f32.pop %v440
  %v443 = vsinq.f32.pop %v440
  %vm444 = vweird.f32 %v246
  %v445 = vand.u32 %v441, 3
  %vm446 = vcmp.lt.s32.totalorder %v445, 2
  %vm447 = vcmp.eq.s32.totalorder %v445, 0
  %v448 = vxor.u32 %v443, 2147483648
  %v449 = vsel %vm447, %v442, %v448
  %vm450 = vcmp.eq.s32.totalorder %v445, 2
  %v451 = vxor.u32 %v442, 2147483648
  %v452 = vsel %vm450, %v451, %v443
  %v453 = vsel %vm446, %v449, %v452
  %v454 = vsel %vm444, nan, %v453
  %v455 = vand.u32 2147483647, %v241
  %vm456 = vcmp.le.f32.partialorder %v455, 0.7853982
  %vm457 = vcmp.lt.s32.totalorder %v241, 0
  %v458 = vand.u32 %v241, 2139095040
  %v459 = vshrl.u32 %v458, 23
  %v460 = vsub.s32 %v459, 127
  %v461 = vand.u32 2147483647, %v241
  %v462 = vand.u32 %v461, 8388607
  %v463 = vor.u32 %v462, 8388608
  %v464 = vsub.s32 0, %v463
  %v465 = vadd.s32 %v460, 1
  %vm466 = vcmp.gt.s32.totalorder %v465, 0
  %v467 = vsel %vm466, %v465, 0
  %v468 = vshrl.u32 %v467, 5
  %v469 = vand.u32 %v467, 31
  %v470 = vsub.s32 32, %v469
  %v471 = vshrl.u32 683565275, %v470
  %v472 = vshll.u32 683565275, %v469
  %v473 = vshrl.u32 2475754826, %v470
  %v474 = vor.u32 %v472, %v473
  %v475 = vshll.u32 2475754826, %v469
  %v476 = vshrl.u32 2131351028, %v470
  %v477 = vor.u32 %v475, %v476
  %v478 = vshll.u32 2131351028, %v469
  %v479 = vshrl.u32 2102212464, %v470
  %v480 = vor.u32 %v478, %v479
  %v481 = vshll.u32 2102212464, %v469
  %v482 = vshrl.u32 920167782, %v470
  %v483 = vor.u32 %v481, %v482
  %v484 = vshll.u32 920167782, %v469
  %v485 = vshrl.u32 1326507024, %v470
  %v486 = vor.u32 %v484, %v485
  %vm487 = vcmp.lt.s32.totalorder %v468, 1
  %vm488 = vcmp.lt.s32.totalorder %v468, 2
  %vm489 = vcmp.lt.s32.totalorder %v468, 3
  %vm490 = vcmp.lt.s32.totalorder %v468, 4
  %v491 = vsel %vm487, %v471, %v474
  %v492 = vsel %vm490, %v480, 2102212464
  %v493 = vsel %vm489, %v477, %v492
  %v494 = vsel %vm488, %v491, %v493
  %v495 = vsel %vm487, %v474, %v477
  %v496 = vsel %vm490, %v483, 920167782
  %v497 = vsel %vm489, %v480, %v496
  %v498 = vsel %vm488, %v495, %v497
  %v499 = vsel %vm487, %v477, %v480
  %v500 = vsel %vm490, %v486, 1326507024
  %v501 = vsel %vm489, %v483, %v500
  %v502 = vsel %vm488, %v499, %v501
  %v503 = vshll.u32 %v463, 8
  %v504 = vmul.u32.u64.compose %v503, %v502
  %v505 = vextract.low.u32 %v504
  %v506 = vextract.high.u32 %v504
  %v507 = vmul.u32.u64.compose %v503, %v498
  %v508 = vextract.low.u32 %v507
  %v509 = vextract.high.u32 %v507
  %v510 = vmul.u32 %v503, %v494
  %v511 = vadd.s32 %v506, %v508
  %vm512 = vc.u32 %v506, %v508
  %v513 = vadd.s32 %v509, 1
  %v514 = vsel %vm512, %v513, %v509
  %v515 = vadd.s32 %v510, %v514
  %v516 = vadd.s32 %v515, 536870912
  %v517 = vshrl.u32 %v516, 30
  %v518 = vshll.u32 %v517, 30
  %v519 = vsub.s32 %v515, %v518
  %vm520 = vcmp.lt.s32.totalorder %v519, 0
  %v521 = vsub.s32 0, %v519
  %v522 = vsel %vm520, %v521, %v519
  %v523 = vclz %v522
  %v524 = vsub.s32 %v523, 2
  %vm525 = vcmp.gt.s32.totalorder 0, %v524
  %v526 = vsel %vm525, 0, %v524
  %v527 = vsub.s32 32, %v526
  %v528 = vshll.u32 %v519, %v526
  %v529 = vshrl.u32 %v511, %v527
  %v530 = vor.u32 %v528, %v529
  %v531 = vsub.s32 4294967266, %v526
  %v532 = vadd.s32 %v531, 127
  %v533 = vshll.u32 %v532, 23
  %v534 = vor.u32 4788187, %v533
  %v535 = vand.u32 2147483647, %v534
  %v537 = vcvt.s32.f32 %v530
  %v538 = vmul.f32 %v537, %v535
  %v539 = vxor.u32 %v538, 2147483648
  %v540 = vsel %vm457, %v539, %v538
  %v541 = vsub.s32 4, %v517
  %v542 = vsel %vm457, %v541, %v517
  %v543 = vsel %vm456, %v241, %v540
  %v544 = vsel %vm456, 0, %v542
  %v545 = vcosq.f32.pop %v543
  %v546 = vsinq.f32.pop %v543
  %vm547 = vweird.f32 %v241
  %v548 = vadd.s32 %v544, 3
  %v549 = vand.u32 %v548, 3
  %vm550 = vcmp.lt.s32.totalorder %v549, 2
  %vm551 = vcmp.eq.s32.totalorder %v549, 0
  %v552 = vxor.u32 %v546, 2147483648
  %v553 = vsel %vm551, %v545, %v552
  %vm554 = vcmp.eq.s32.totalorder %v549, 2
  %v555 = vxor.u32 %v545, 2147483648
  %v556 = vsel %vm554, %v555, %v546
  %v557 = vsel %vm550, %v553, %v556
  %v558 = vsel %vm547, nan, %v557
  %v559 = vand.u32 2147483647, %v246
  %vm560 = vcmp.le.f32.partialorder %v559, 0.7853982
  %vm561 = vcmp.lt.s32.totalorder %v246, 0
  %v562 = vand.u32 %v246, 2139095040
  %v563 = vshrl.u32 %v562, 23
  %v564 = vsub.s32 %v563, 127
  %v565 = vand.u32 2147483647, %v246
  %v566 = vand.u32 %v565, 8388607
  %v567 = vor.u32 %v566, 8388608
  %v568 = vsub.s32 0, %v567
  %v569 = vadd.s32 %v564, 1
  %vm570 = vcmp.gt.s32.totalorder %v569, 0
  %v571 = vsel %vm570, %v569, 0
  %v572 = vshrl.u32 %v571, 5
  %v573 = vand.u32 %v571, 31
  %v574 = vsub.s32 32, %v573
  %v575 = vshrl.u32 683565275, %v574
  %v576 = vshll.u32 683565275, %v573
  %v577 = vshrl.u32 2475754826, %v574
  %v578 = vor.u32 %v576, %v577
  %v579 = vshll.u32 2475754826, %v573
  %v580 = vshrl.u32 2131351028, %v574
  %v581 = vor.u32 %v579, %v580
  %v582 = vshll.u32 2131351028, %v573
  %v583 = vshrl.u32 2102212464, %v574
  %v584 = vor.u32 %v582, %v583
  %v585 = vshll.u32 2102212464, %v573
  %v586 = vshrl.u32 920167782, %v574
  %v587 = vor.u32 %v585, %v586
  %v588 = vshll.u32 920167782, %v573
  %v589 = vshrl.u32 1326507024, %v574
  %v590 = vor.u32 %v588, %v589
  %vm591 = vcmp.lt.s32.totalorder %v572, 1
  %vm592 = vcmp.lt.s32.totalorder %v572, 2
  %vm593 = vcmp.lt.s32.totalorder %v572, 3
  %vm594 = vcmp.lt.s32.totalorder %v572, 4
  %v595 = vsel %vm591, %v575, %v578
  %v596 = vsel %vm594, %v584, 2102212464
  %v597 = vsel %vm593, %v581, %v596
  %v598 = vsel %vm592, %v595, %v597
  %v599 = vsel %vm591, %v578, %v581
  %v600 = vsel %vm594, %v587, 920167782
  %v601 = vsel %vm593, %v584, %v600
  %v602 = vsel %vm592, %v599, %v601
  %v603 = vsel %vm591, %v581, %v584
  %v604 = vsel %vm594, %v590, 1326507024
  %v605 = vsel %vm593, %v587, %v604
  %v606 = vsel %vm592, %v603, %v605
  %v607 = vshll.u32 %v567, 8
  %v608 = vmul.u32.u64.compose %v607, %v606
  %v609 = vextract.low.u32 %v608
  %v610 = vextract.high.u32 %v608
  %v611 = vmul.u32.u64.compose %v607, %v602
  %v612 = vextract.low.u32 %v611
  %v613 = vextract.high.u32 %v611
  %v614 = vmul.u32 %v607, %v598
  %v615 = vadd.s32 %v610, %v612
  %vm616 = vc.u32 %v610, %v612
  %v617 = vadd.s32 %v613, 1
  %v618 = vsel %vm616, %v617, %v613
  %v619 = vadd.s32 %v614, %v618
  %v620 = vadd.s32 %v619, 536870912
  %v621 = vshrl.u32 %v620, 30
  %v622 = vshll.u32 %v621, 30
  %v623 = vsub.s32 %v619, %v622
  %vm624 = vcmp.lt.s32.totalorder %v623, 0
  %v625 = vsub.s32 0, %v623
  %v626 = vsel %vm624, %v625, %v623
  %v627 = vclz %v626
  %v628 = vsub.s32 %v627, 2
  %vm629 = vcmp.gt.s32.totalorder 0, %v628
  %v630 = vsel %vm629, 0, %v628
  %v631 = vsub.s32 32, %v630
  %v632 = vshll.u32 %v623, %v630
  %v633 = vshrl.u32 %v615, %v631
  %v634 = vor.u32 %v632, %v633
  %v635 = vsub.s32 4294967266, %v630
  %v636 = vadd.s32 %v635, 127
  %v637 = vshll.u32 %v636, 23
  %v638 = vor.u32 4788187, %v637
  %v639 = vand.u32 2147483647, %v638
  %v641 = vcvt.s32.f32 %v634
  %v642 = vmul.f32 %v641, %v639
  %v643 = vxor.u32 %v642, 2147483648
  %v644 = vsel %vm561, %v643, %v642
  %v645 = vsub.s32 4, %v621
  %v646 = vsel %vm561, %v645, %v621
  %v647 = vsel %vm560, %v246, %v644
  %v648 = vsel %vm560, 0, %v646
  %v649 = vcosq.f32.pop %v647
  %v650 = vsinq.f32.pop %v647
  %vm651 = vweird.f32 %v246
  %v652 = vadd.s32 %v648, 3
  %v653 = vand.u32 %v652, 3
  %vm654 = vcmp.lt.s32.totalorder %v653, 2
  %vm655 = vcmp.eq.s32.totalorder %v653, 0
  %v656 = vxor.u32 %v650, 2147483648
  %v657 = vsel %vm655, %v649, %v656
  %vm658 = vcmp.eq.s32.totalorder %v653, 2
  %v659 = vxor.u32 %v649, 2147483648
  %v660 = vsel %vm658, %v659, %v650
  %v661 = vsel %vm654, %v657, %v660
  %v662 = vsel %vm651, nan, %v661
  %v663 = vld [vmem:[%s5] sm:$0xff]
  %v664 = vld [vmem:[%s5 + $0x8] sm:$0xff]
  %v665 = vld [vmem:[%s5 + $0x10] sm:$0xff]
  %v666 = vld [vmem:[%s5 + $0x18] sm:$0xff]
  %v667 = vld [vmem:[%s5 + $0x20] sm:$0xff]
  %v668 = vld [vmem:[%s5 + $0x28] sm:$0xff]
  %v669 = vld [vmem:[%s5 + $0x30] sm:$0xff]
  %v670 = vld [vmem:[%s5 + $0x38] sm:$0xff]
  %v671 = vld [vmem:[%s5 + $0x40] sm:$0xff]
  %v672 = vld [vmem:[%s5 + $0x48] sm:$0xff]
  %v673 = vld [vmem:[%s5 + $0x50] sm:$0xff]
  %v674 = vld [vmem:[%s5 + $0x58] sm:$0xff]
  %v675 = vld [vmem:[%s5 + $0x60] sm:$0xff]
  %v676 = vld [vmem:[%s5 + $0x68] sm:$0xff]
  %v677 = vld [vmem:[%s5 + $0x70] sm:$0xff]
  %v678 = vld [vmem:[%s5 + $0x78] sm:$0xff]
  %v679 = vld [vmem:[%s5 + $0x80] sm:$0xff]
  %v680 = vld [vmem:[%s5 + $0x88] sm:$0xff]
  %v681 = vld [vmem:[%s5 + $0x90] sm:$0xff]
  %v682 = vld [vmem:[%s5 + $0x98] sm:$0xff]
  %v683 = vld [vmem:[%s5 + $0xa0] sm:$0xff]
  %v684 = vld [vmem:[%s5 + $0xa8] sm:$0xff]
  %v685 = vld [vmem:[%s5 + $0xb0] sm:$0xff]
  %v686 = vld [vmem:[%s5 + $0xb8] sm:$0xff]
  %v687 = vld [vmem:[%s5 + $0xc0] sm:$0xff]
  %v688 = vld [vmem:[%s5 + $0xc8] sm:$0xff]
  %v689 = vld [vmem:[%s5 + $0xd0] sm:$0xff]
  %v690 = vld [vmem:[%s5 + $0xd8] sm:$0xff]
  %v691 = vld [vmem:[%s5 + $0xe0] sm:$0xff]
  %v692 = vld [vmem:[%s5 + $0xe8] sm:$0xff]
  %v693 = vld [vmem:[%s5 + $0xf0] sm:$0xff]
  %v694 = vld [vmem:[%s5 + $0xf8] sm:$0xff]
  %v695 = vld [vmem:[%s1] sm:$0xff]
  %v696 = vld [vmem:[%s1 + $0x8] sm:$0xff]
  %697 = vmatprep.subr.mxu0 0.0
  %698 = vmatpush1.msra.mxu0 %v663
  %699 = vmatprep.subr.mxu0 0.0
  %700 = vmatpush1.msra.mxu0 %v664
  %701 = vmatprep.subr.mxu0 0.0
  %702 = vmatpush1.msra.mxu0 %v665
  %703 = vmatprep.subr.mxu0 0.0
  %704 = vmatpush1.msra.mxu0 %v666
  %705 = vmatprep.subr.mxu0 0.0
  %706 = vmatpush1.msra.mxu0 %v667
  %707 = vmatprep.subr.mxu0 0.0
  %708 = vmatpush1.msra.mxu0 %v668
  %709 = vmatprep.subr.mxu0 0.0
  %710 = vmatpush1.msra.mxu0 %v669
  %711 = vmatprep.subr.mxu0 0.0
  %712 = vmatpush1.msra.mxu0 %v670
  %713 = vmatprep.subr.mxu0 0.0
  %714 = vmatpush1.msra.mxu0 %v671
  %715 = vmatprep.subr.mxu0 0.0
  %716 = vmatpush1.msra.mxu0 %v672
  %717 = vmatprep.subr.mxu0 0.0
  %718 = vmatpush1.msra.mxu0 %v673
  %719 = vmatprep.subr.mxu0 0.0
  %720 = vmatpush1.msra.mxu0 %v674
  %721 = vmatprep.subr.mxu0 0.0
  %722 = vmatpush1.msra.mxu0 %v675
  %723 = vmatprep.subr.mxu0 0.0
  %724 = vmatpush1.msra.mxu0 %v676
  %725 = vmatprep.subr.mxu0 0.0
  %726 = vmatpush1.msra.mxu0 %v677
  %727 = vmatprep.subr.mxu0 0.0
  %728 = vmatpush1.msra.mxu0 %v678
  %729 = vmatprep.subr.mxu0 0.0
  %730 = vmatpush1.msra.mxu0 %v679
  %731 = vmatprep.subr.mxu0 0.0
  %732 = vmatpush1.msra.mxu0 %v680
  %733 = vmatprep.subr.mxu0 0.0
  %734 = vmatpush1.msra.mxu0 %v681
  %735 = vmatprep.subr.mxu0 0.0
  %736 = vmatpush1.msra.mxu0 %v682
  %737 = vmatprep.subr.mxu0 0.0
  %738 = vmatpush1.msra.mxu0 %v683
  %739 = vmatprep.subr.mxu0 0.0
  %740 = vmatpush1.msra.mxu0 %v684
  %741 = vmatprep.subr.mxu0 0.0
  %742 = vmatpush1.msra.mxu0 %v685
  %743 = vmatprep.subr.mxu0 0.0
  %744 = vmatpush1.msra.mxu0 %v686
  %745 = vmatprep.subr.mxu0 0.0
  %746 = vmatpush1.msra.mxu0 %v687
  %747 = vmatprep.subr.mxu0 0.0
  %748 = vmatpush1.msra.mxu0 %v688
  %749 = vmatprep.subr.mxu0 0.0
  %750 = vmatpush1.msra.mxu0 %v689
  %751 = vmatprep.subr.mxu0 0.0
  %752 = vmatpush1.msra.mxu0 %v690
  %753 = vmatprep.subr.mxu0 0.0
  %754 = vmatpush1.msra.mxu0 %v691
  %755 = vmatprep.subr.mxu0 0.0
  %756 = vmatpush1.msra.mxu0 %v692
  %757 = vmatprep.subr.mxu0 0.0
  %758 = vmatpush1.msra.mxu0 %v693
  %759 = vmatprep.subr.mxu0 0.0
  %760 = vmatpush1.msra.mxu0 %v694
  %761 = vmatprep.mubr.f32.mxu0 %v558
  %762 = vmatmul.mubr.f32.gmra.mrb[0].mxu0 %v351
  %v763 = vpop.f32.mrb[0].mxu0
  %v764 = vadd.f32 %v695, %v763
  %v765 = vpop.f32.mrb[0].mxu0
  %766 = vmatprep.mubr.f32.mxu0 %v662
  %767 = vmatmul.mubr.f32.gmra.mrb[0].mxu0 %v454
  %v768 = vpop.f32.mrb[0].mxu0
  %v769 = vadd.f32 %v696, %v768
  %v770 = vpop.f32.mrb[0].mxu0
  %771 = vdwg.mxu0
  %772 = vst.msk [vmem:[%s7] sm:$0xff] %vm118, %v764
  %773 = vst.msk [vmem:[%s7 + $0x8] sm:$0xff] %vm118, %v769
  // Predicated region
  $region30: #{_lambda_.8} parent=0 // pred_check
    _
  $region31: #{_lambda_.8} parent=0 // pred_check_branch
    %775 = sbr.rel (0) target = $region33
  $region32: #{_lambda_.8} parent=0 // pred_region
    _
  $region33: #{_lambda_.8} parent=0 // pred_fallthru
    _
  // Predicated region
  $region34: #{_lambda_.8} parent=0 // pred_check
    _
  $region35: #{_lambda_.8} parent=0 // pred_check_branch
    %777 = sbr.rel (0) target = $region37
  $region36: #{_lambda_.8} parent=0 // pred_region
    _
  $region37: #{_lambda_.8} parent=0 // pred_fallthru
    _

// kernel: _lambda_.7
$region0: #{_lambda_.7}
  #allocation0 [shape = 'u32[]', space=smem, size = 0x4, offset = 0x4, fixed_abs, tag = 'smem constant byte address 0x4 - core index']
  #allocation1 [shape = 'u32[144,128]{1,0:T(1,128)}', space=vmem, size = 0x12000, scoped, tag = 'internal scratch']
  #allocation2 [shape = 'f32[11,64]{1,0:T(8,128)}', space=vmem, size = 0x2000, scoped, tag = 'scratch operand']
  #allocation3 [shape = 'f32[64,64]{1,0:T(8,128)}', space=vmem, size = 0x8000, scoped, tag = 'scratch operand']
  #allocation4 [shape = 'f32[64,64]{1,0:T(8,128)}', space=vmem, size = 0x8000, scoped, tag = 'scratch operand']
  #allocation5 [shape = 'f32[64,1]{1,0:T(8,128)}', space=vmem, size = 0x8000, scoped, tag = 'scratch operand']
  #allocation6 [shape = 'f32[8,64]{1,0:T(8,128)}', space=vmem, size = 0x1000, scoped, tag = 'scratch operand']
  %s0 = inlined_call_operand.vmem [shape: f32[2,8,64], index: 0, kind: input, shape index: {}]
  %s1 = inlined_call_operand.vmem [shape: f32[2,8,64], index: 1, kind: input, shape index: {}]
  %s2 = inlined_call_operand.vmem [shape: f32[2,4,64], index: 2, kind: input, shape index: {}]
  %s3 = inlined_call_operand.vmem [shape: f32[2,1,64], index: 3, kind: input, shape index: {}]
  %s4 = inlined_call_operand.vmem [shape: f32[2,64,18], index: 4, kind: input, shape index: {}]
  %s5 = inlined_call_operand.vmem [shape: f32[2,2,64], index: 5, kind: input, shape index: {}]
  %s6 = inlined_call_operand.vmem [shape: f32[2,1,64], index: 6, kind: input, shape index: {}]
  %s7 = inlined_call_operand.vmem [shape: f32[2,8,64], index: 7, kind: input, shape index: {}]
  %s8 = inlined_call_operand.vmem [shape: f32[2,1,64], index: 8, kind: input, shape index: {}]
  %s9 = inlined_call_operand.vmem [shape: f32[2,8,64], index: 9, kind: output, shape index: {}]
  %s10 = sld [smem:[#allocation0]]
  $region85: #{_lambda_.7} parent=0
    _
  %s12 = ssub.s32 1, %s10
  %s13 = scalar_select 0, %s12, %s10
  loop: start=0, step=1, limit=6
  $region2: #{_lambda_.7} parent=0 // loop_pre_header
    _
  $region3: #{_lambda_.7} parent=0 // loop_header
    %s15 = sphi 0, %s19
    %p16 = scmp.ge.s32.totalorder %s15, 6
    %s22 = sphi 0, %s34
    %s23 = sphi 0, %s30
    %s24 = sphi 0, %s22
    %s25 = sphi 0, %s23
    %s26 = sphi 0, %s24
    %s27 = sphi 0, %s25
    %s37 = sphi 0, %s39
    %s40 = sphi 0, %s37
    %s41 = sphi 0, %s40
    %s57 = sphi 0, %s41
    %s63 = sphi 0, %s65
    %s66 = sphi 0, %s63
    %s67 = sphi 0, %s66
    %s83 = sphi 0, %s67
    %s89 = sphi 0, %s91
    %s92 = sphi 0, %s89
    %s93 = sphi 0, %s92
    %s109 = sphi 0, %s93
    %s115 = sphi 0, %s117
    %s118 = sphi 0, %s115
    %s119 = sphi 0, %s118
    %s135 = sphi 0, %s119
    %s141 = sphi 0, %s143
    %s144 = sphi 0, %s141
    %s145 = sphi 0, %s144
    %s161 = sphi 0, %s145
    %s167 = sphi 0, %s169
    %s170 = sphi 0, %s167
    %s171 = sphi 0, %s170
    %s187 = sphi 0, %s171
    %s193 = sphi 0, %s195
    %s196 = sphi 0, %s193
    %s197 = sphi 0, %s196
    %s213 = sphi 0, %s197
    %s219 = sphi 0, %s221
    %s222 = sphi 0, %s219
    %s223 = sphi 0, %s222
    %s239 = sphi 0, %s223
    %s245 = sphi 0, %s247
    %s248 = sphi 0, %s245
    %s249 = sphi 0, %s248
    %s265 = sphi 0, %s249
    %s271 = sphi 0, %s273
    %s274 = sphi 0, %s271
    %s275 = sphi 0, %s274
    %s291 = sphi 0, %s275
  $region4: #{_lambda_.7} parent=0 // loop_header_branch
    %18 = sbr.rel (%p16) target = $region8
  $region5: #{_lambda_.7} parent=0 // loop_body
    %s20 = ssub.s32 %s15, 1
    %s21 = ssub.s32 %s15, 2
    %s28 = sadd.s32 1, %s23
    %p29 = scmp.ge.s32.totalorder %s28, 2
    %s30 = scalar_select %p29, 0, %s28
    %s31 = sadd.s32 1, %s22
    %s32 = scalar_select %p29, %s31, %s22
    %p33 = scmp.ge.s32.totalorder %s32, 2
    %s34 = scalar_select %p33, 0, %s32
    %s35 = ssub.s32 %s22, %s34
    %p36 = scmp.eq.s32.totalorder %s35, 0
    %s38 = sadd.s32 %s37, 1
    %s39 = scalar_select %p36, %s37, %s38
    %p42 = pneg %p36
    %p43 = scmp.eq.s32.totalorder %s15, 3
    %p44 = por %p42, %p43
    %p45 = scmp.ne.s32.totalorder %s37, %s40
    %p46 = scmp.eq.s32.totalorder %s15, 0
    %p47 = por %p45, %p46
    %p48 = scmp.ne.s32.totalorder %s37, %s40
    %p49 = scmp.eq.s32.totalorder %s20, 3
    %p50 = por %p48, %p49
    %p51 = scmp.ne.s32.totalorder %s40, %s41
    %p52 = scmp.eq.s32.totalorder %s20, 0
    %p53 = por %p51, %p52
    %p54 = scmp.ne.s32.totalorder %s40, %s41
    %p55 = scmp.eq.s32.totalorder %s21, 3
    %p56 = por %p54, %p55
    %p58 = scmp.ne.s32.totalorder %s41, %s57
    %p59 = scmp.eq.s32.totalorder %s21, 0
    %p60 = por %p58, %p59
    %s61 = ssub.s32 %s22, %s34
    %p62 = scmp.eq.s32.totalorder %s61, 0
    %s64 = sadd.s32 %s63, 1
    %s65 = scalar_select %p62, %s63, %s64
    %p68 = pneg %p62
    %p69 = scmp.eq.s32.totalorder %s15, 3
    %p70 = por %p68, %p69
    %p71 = scmp.ne.s32.totalorder %s63, %s66
    %p72 = scmp.eq.s32.totalorder %s15, 0
    %p73 = por %p71, %p72
    %p74 = scmp.ne.s32.totalorder %s63, %s66
    %p75 = scmp.eq.s32.totalorder %s20, 3
    %p76 = por %p74, %p75
    %p77 = scmp.ne.s32.totalorder %s66, %s67
    %p78 = scmp.eq.s32.totalorder %s20, 0
    %p79 = por %p77, %p78
    %p80 = scmp.ne.s32.totalorder %s66, %s67
    %p81 = scmp.eq.s32.totalorder %s21, 3
    %p82 = por %p80, %p81
    %p84 = scmp.ne.s32.totalorder %s67, %s83
    %p85 = scmp.eq.s32.totalorder %s21, 0
    %p86 = por %p84, %p85
    %s87 = ssub.s32 %s23, %s30
    %p88 = scmp.eq.s32.totalorder %s87, 0
    %s90 = sadd.s32 %s89, 1
    %s91 = scalar_select %p88, %s89, %s90
    %p94 = pneg %p88
    %p95 = scmp.eq.s32.totalorder %s15, 3
    %p96 = por %p94, %p95
    %p97 = scmp.ne.s32.totalorder %s89, %s92
    %p98 = scmp.eq.s32.totalorder %s15, 0
    %p99 = por %p97, %p98
    %p100 = scmp.ne.s32.totalorder %s89, %s92
    %p101 = scmp.eq.s32.totalorder %s20, 3
    %p102 = por %p100, %p101
    %p103 = scmp.ne.s32.totalorder %s92, %s93
    %p104 = scmp.eq.s32.totalorder %s20, 0
    %p105 = por %p103, %p104
    %p106 = scmp.ne.s32.totalorder %s92, %s93
    %p107 = scmp.eq.s32.totalorder %s21, 3
    %p108 = por %p106, %p107
    %p110 = scmp.ne.s32.totalorder %s93, %s109
    %p111 = scmp.eq.s32.totalorder %s21, 0
    %p112 = por %p110, %p111
    %s113 = ssub.s32 %s23, %s30
    %p114 = scmp.eq.s32.totalorder %s113, 0
    %s116 = sadd.s32 %s115, 1
    %s117 = scalar_select %p114, %s115, %s116
    %p120 = pneg %p114
    %p121 = scmp.eq.s32.totalorder %s15, 3
    %p122 = por %p120, %p121
    %p123 = scmp.ne.s32.totalorder %s115, %s118
    %p124 = scmp.eq.s32.totalorder %s15, 0
    %p125 = por %p123, %p124
    %p126 = scmp.ne.s32.totalorder %s115, %s118
    %p127 = scmp.eq.s32.totalorder %s20, 3
    %p128 = por %p126, %p127
    %p129 = scmp.ne.s32.totalorder %s118, %s119
    %p130 = scmp.eq.s32.totalorder %s20, 0
    %p131 = por %p129, %p130
    %p132 = scmp.ne.s32.totalorder %s118, %s119
    %p133 = scmp.eq.s32.totalorder %s21, 3
    %p134 = por %p132, %p133
    %p136 = scmp.ne.s32.totalorder %s119, %s135
    %p137 = scmp.eq.s32.totalorder %s21, 0
    %p138 = por %p136, %p137
    %s139 = ssub.s32 %s23, %s30
    %p140 = scmp.eq.s32.totalorder %s139, 0
    %s142 = sadd.s32 %s141, 1
    %s143 = scalar_select %p140, %s141, %s142
    %p146 = pneg %p140
    %p147 = scmp.eq.s32.totalorder %s15, 3
    %p148 = por %p146, %p147
    %p149 = scmp.ne.s32.totalorder %s141, %s144
    %p150 = scmp.eq.s32.totalorder %s15, 0
    %p151 = por %p149, %p150
    %p152 = scmp.ne.s32.totalorder %s141, %s144
    %p153 = scmp.eq.s32.totalorder %s20, 3
    %p154 = por %p152, %p153
    %p155 = scmp.ne.s32.totalorder %s144, %s145
    %p156 = scmp.eq.s32.totalorder %s20, 0
    %p157 = por %p155, %p156
    %p158 = scmp.ne.s32.totalorder %s144, %s145
    %p159 = scmp.eq.s32.totalorder %s21, 3
    %p160 = por %p158, %p159
    %p162 = scmp.ne.s32.totalorder %s145, %s161
    %p163 = scmp.eq.s32.totalorder %s21, 0
    %p164 = por %p162, %p163
    %s165 = ssub.s32 %s23, %s30
    %p166 = scmp.eq.s32.totalorder %s165, 0
    %s168 = sadd.s32 %s167, 1
    %s169 = scalar_select %p166, %s167, %s168
    %p172 = pneg %p166
    %p173 = scmp.eq.s32.totalorder %s15, 3
    %p174 = por %p172, %p173
    %p175 = scmp.ne.s32.totalorder %s167, %s170
    %p176 = scmp.eq.s32.totalorder %s15, 0
    %p177 = por %p175, %p176
    %p178 = scmp.ne.s32.totalorder %s167, %s170
    %p179 = scmp.eq.s32.totalorder %s20, 3
    %p180 = por %p178, %p179
    %p181 = scmp.ne.s32.totalorder %s170, %s171
    %p182 = scmp.eq.s32.totalorder %s20, 0
    %p183 = por %p181, %p182
    %p184 = scmp.ne.s32.totalorder %s170, %s171
    %p185 = scmp.eq.s32.totalorder %s21, 3
    %p186 = por %p184, %p185
    %p188 = scmp.ne.s32.totalorder %s171, %s187
    %p189 = scmp.eq.s32.totalorder %s21, 0
    %p190 = por %p188, %p189
    %s191 = ssub.s32 %s23, %s30
    %p192 = scmp.eq.s32.totalorder %s191, 0
    %s194 = sadd.s32 %s193, 1
    %s195 = scalar_select %p192, %s193, %s194
    %p198 = pneg %p192
    %p199 = scmp.eq.s32.totalorder %s15, 3
    %p200 = por %p198, %p199
    %p201 = scmp.ne.s32.totalorder %s193, %s196
    %p202 = scmp.eq.s32.totalorder %s15, 0
    %p203 = por %p201, %p202
    %p204 = scmp.ne.s32.totalorder %s193, %s196
    %p205 = scmp.eq.s32.totalorder %s20, 3
    %p206 = por %p204, %p205
    %p207 = scmp.ne.s32.totalorder %s196, %s197
    %p208 = scmp.eq.s32.totalorder %s20, 0
    %p209 = por %p207, %p208
    %p210 = scmp.ne.s32.totalorder %s196, %s197
    %p211 = scmp.eq.s32.totalorder %s21, 3
    %p212 = por %p210, %p211
    %p214 = scmp.ne.s32.totalorder %s197, %s213
    %p215 = scmp.eq.s32.totalorder %s21, 0
    %p216 = por %p214, %p215
    %s217 = ssub.s32 %s23, %s30
    %p218 = scmp.eq.s32.totalorder %s217, 0
    %s220 = sadd.s32 %s219, 1
    %s221 = scalar_select %p218, %s219, %s220
    %p224 = pneg %p218
    %p225 = scmp.eq.s32.totalorder %s15, 3
    %p226 = por %p224, %p225
    %p227 = scmp.ne.s32.totalorder %s219, %s222
    %p228 = scmp.eq.s32.totalorder %s15, 0
    %p229 = por %p227, %p228
    %p230 = scmp.ne.s32.totalorder %s219, %s222
    %p231 = scmp.eq.s32.totalorder %s20, 3
    %p232 = por %p230, %p231
    %p233 = scmp.ne.s32.totalorder %s222, %s223
    %p234 = scmp.eq.s32.totalorder %s20, 0
    %p235 = por %p233, %p234
    %p236 = scmp.ne.s32.totalorder %s222, %s223
    %p237 = scmp.eq.s32.totalorder %s21, 3
    %p238 = por %p236, %p237
    %p240 = scmp.ne.s32.totalorder %s223, %s239
    %p241 = scmp.eq.s32.totalorder %s21, 0
    %p242 = por %p240, %p241
    %s243 = ssub.s32 %s23, %s30
    %p244 = scmp.eq.s32.totalorder %s243, 0
    %s246 = sadd.s32 %s245, 1
    %s247 = scalar_select %p244, %s245, %s246
    %p250 = pneg %p244
    %p251 = scmp.eq.s32.totalorder %s15, 3
    %p252 = por %p250, %p251
    %p253 = scmp.ne.s32.totalorder %s245, %s248
    %p254 = scmp.eq.s32.totalorder %s15, 0
    %p255 = por %p253, %p254
    %p256 = scmp.ne.s32.totalorder %s245, %s248
    %p257 = scmp.eq.s32.totalorder %s20, 3
    %p258 = por %p256, %p257
    %p259 = scmp.ne.s32.totalorder %s248, %s249
    %p260 = scmp.eq.s32.totalorder %s20, 0
    %p261 = por %p259, %p260
    %p262 = scmp.ne.s32.totalorder %s248, %s249
    %p263 = scmp.eq.s32.totalorder %s21, 3
    %p264 = por %p262, %p263
    %p266 = scmp.ne.s32.totalorder %s249, %s265
    %p267 = scmp.eq.s32.totalorder %s21, 0
    %p268 = por %p266, %p267
    %s269 = ssub.s32 %s22, %s34
    %p270 = scmp.eq.s32.totalorder %s269, 0
    %s272 = sadd.s32 %s271, 1
    %s273 = scalar_select %p270, %s271, %s272
    %p276 = pneg %p270
    %p277 = scmp.eq.s32.totalorder %s15, 3
    %p278 = por %p276, %p277
    %p279 = scmp.ne.s32.totalorder %s271, %s274
    %p280 = scmp.eq.s32.totalorder %s15, 0
    %p281 = por %p279, %p280
    %p282 = scmp.ne.s32.totalorder %s271, %s274
    %p283 = scmp.eq.s32.totalorder %s20, 3
    %p284 = por %p282, %p283
    %p285 = scmp.ne.s32.totalorder %s274, %s275
    %p286 = scmp.eq.s32.totalorder %s20, 0
    %p287 = por %p285, %p286
    %p288 = scmp.ne.s32.totalorder %s274, %s275
    %p289 = scmp.eq.s32.totalorder %s21, 3
    %p290 = por %p288, %p289
    %p292 = scmp.ne.s32.totalorder %s275, %s291
    %p293 = scmp.eq.s32.totalorder %s21, 0
    %p294 = por %p292, %p293
    %p295 = scmp.le.s32.totalorder 1, %s15
    %p296 = scmp.lt.s32.totalorder %s15, 5
    %p297 = pnand %p295, %p296
    %p298 = pneg %p297
    // Predicated region
    $region9: #{_lambda_.7} parent=5 // pred_check
      _
    $region10: #{_lambda_.7} parent=5 // pred_check_branch
      %300 = sbr.rel (%p297) target = $region12
    $region11: #{_lambda_.7} parent=5 // pred_region
      %s301 = ssub.s32 %s15, 1
    $region12: #{_lambda_.7} parent=5 // pred_fallthru
      _
    %p302 = scmp.lt.s32.totalorder %s15, 4
    // Predicated region
    $region13: #{_lambda_.7} parent=5 // pred_check
      %p303 = pneg %p302
    $region14: #{_lambda_.7} parent=5 // pred_check_branch
      %305 = sbr.rel (%p303) target = $region16
    $region15: #{_lambda_.7} parent=5 // pred_region
      // Predicated region
      $region17: #{_lambda_.7} parent=15 // pred_check
        %p306 = pneg %p47
      $region18: #{_lambda_.7} parent=15 // pred_check_branch
        %308 = sbr.rel (%p306) target = $region20
      $region19: #{_lambda_.7} parent=15 // pred_region
        %p309 = scmp.lt.s32.totalorder %s22, 1
        %s310 = scalar_select %p309, %s22, 1
        %s311 = smul.addr %s310, 8
        %s312 = scalar_lea.vmem %s0, %s311
      $region20: #{_lambda_.7} parent=15 // pred_fallthru
        _
      // Predicated region
      $region21: #{_lambda_.7} parent=15 // pred_check
        %p313 = pneg %p73
      $region22: #{_lambda_.7} parent=15 // pred_check_branch
        %315 = sbr.rel (%p313) target = $region24
      $region23: #{_lambda_.7} parent=15 // pred_region
        %p316 = scmp.lt.s32.totalorder %s22, 1
        %s317 = scalar_select %p316, %s22, 1
        %s318 = smul.addr %s317, 8
        %s319 = scalar_lea.vmem %s1, %s318
      $region24: #{_lambda_.7} parent=15 // pred_fallthru
        _
      // Predicated region
      $region25: #{_lambda_.7} parent=15 // pred_check
        %p320 = pneg %p99
      $region26: #{_lambda_.7} parent=15 // pred_check_branch
        %322 = sbr.rel (%p320) target = $region28
      $region27: #{_lambda_.7} parent=15 // pred_region
        %p323 = scmp.lt.s32.totalorder %s23, 1
        %s324 = scalar_select %p323, %s23, 1
        %s325 = smul.addr %s324, 4
        %s326 = scalar_lea.vmem %s2, %s325
      $region28: #{_lambda_.7} parent=15 // pred_fallthru
        _
      // Predicated region
      $region29: #{_lambda_.7} parent=15 // pred_check
        %p327 = pneg %p125
      $region30: #{_lambda_.7} parent=15 // pred_check_branch
        %329 = sbr.rel (%p327) target = $region32
      $region31: #{_lambda_.7} parent=15 // pred_region
        %p330 = scmp.lt.s32.totalorder %s23, 1
        %s331 = scalar_select %p330, %s23, 1
        %s332 = scalar_lea.vmem %s3, %s331
      $region32: #{_lambda_.7} parent=15 // pred_fallthru
        _
      // Predicated region
      $region33: #{_lambda_.7} parent=15 // pred_check
        %p333 = pneg %p151
      $region34: #{_lambda_.7} parent=15 // pred_check_branch
        %335 = sbr.rel (%p333) target = $region36
      $region35: #{_lambda_.7} parent=15 // pred_region
        %p336 = scmp.lt.s32.totalorder %s23, 1
        %s337 = scalar_select %p336, %s23, 1
        %s338 = smul.addr %s337, 8
        %s339 = smul.addr %s338, 8
        %s340 = scalar_lea.vmem %s4, %s339
      $region36: #{_lambda_.7} parent=15 // pred_fallthru
        _
      // Predicated region
      $region37: #{_lambda_.7} parent=15 // pred_check
        %p341 = pneg %p177
      $region38: #{_lambda_.7} parent=15 // pred_check_branch
        %343 = sbr.rel (%p341) target = $region40
      $region39: #{_lambda_.7} parent=15 // pred_region
        %p344 = scmp.lt.s32.totalorder %s23, 1
        %s345 = scalar_select %p344, %s23, 1
        %s346 = smul.addr %s345, 2
        %s347 = scalar_lea.vmem %s5, %s346
      $region40: #{_lambda_.7} parent=15 // pred_fallthru
        _
      // Predicated region
      $region41: #{_lambda_.7} parent=15 // pred_check
        %p348 = pneg %p203
      $region42: #{_lambda_.7} parent=15 // pred_check_branch
        %350 = sbr.rel (%p348) target = $region44
      $region43: #{_lambda_.7} parent=15 // pred_region
        %p351 = scmp.lt.s32.totalorder %s23, 1
        %s352 = scalar_select %p351, %s23, 1
        %s353 = scalar_lea.vmem %s6, %s352
      $region44: #{_lambda_.7} parent=15 // pred_fallthru
        _
      // Predicated region
      $region45: #{_lambda_.7} parent=15 // pred_check
        %p354 = pneg %p229
      $region46: #{_lambda_.7} parent=15 // pred_check_branch
        %356 = sbr.rel (%p354) target = $region48
      $region47: #{_lambda_.7} parent=15 // pred_region
        %p357 = scmp.lt.s32.totalorder %s23, 1
        %s358 = scalar_select %p357, %s23, 1
        %s359 = smul.addr %s358, 8
        %s360 = scalar_lea.vmem %s7, %s359
      $region48: #{_lambda_.7} parent=15 // pred_fallthru
        _
      // Predicated region
      $region49: #{_lambda_.7} parent=15 // pred_check
        %p361 = pneg %p255
      $region50: #{_lambda_.7} parent=15 // pred_check_branch
        %363 = sbr.rel (%p361) target = $region52
      $region51: #{_lambda_.7} parent=15 // pred_region
        %p364 = scmp.lt.s32.totalorder %s23, 1
        %s365 = scalar_select %p364, %s23, 1
        %s366 = scalar_lea.vmem %s8, %s365
      $region52: #{_lambda_.7} parent=15 // pred_fallthru
        _
    $region16: #{_lambda_.7} parent=5 // pred_fallthru
      _
    %p367 = scmp.le.s32.totalorder 1, %s15
    %p368 = scmp.lt.s32.totalorder %s15, 5
    %p369 = pnand %p367, %p368
    %p370 = pneg %p369
    // Predicated region
    $region53: #{_lambda_.7} parent=5 // pred_check
      _
    $region54: #{_lambda_.7} parent=5 // pred_check_branch
      %372 = sbr.rel (%p369) target = $region56
    $region55: #{_lambda_.7} parent=5 // pred_region
      %s373 = ssub.s32 %s15, 1
      %p374 = scmp.lt.s32.totalorder %s24, 1
      %s375 = scalar_select %p374, %s24, 1
      %s376 = smul.addr %s375, 8
      %s377 = scalar_lea.vmem %s0, %s376
      %p378 = pneg %p53
      %p379 = pneg %p50
      %p380 = scmp.lt.s32.totalorder %s24, 1
      %s381 = scalar_select %p380, %s24, 1
      %s382 = smul.addr %s381, 8
      %s383 = scalar_lea.vmem %s1, %s382
      %p384 = pneg %p79
      %p385 = pneg %p76
      %p386 = scmp.lt.s32.totalorder %s25, 1
      %s387 = scalar_select %p386, %s25, 1
      %s388 = smul.addr %s387, 4
      %s389 = scalar_lea.vmem %s2, %s388
      %p390 = pneg %p105
      %p391 = pneg %p102
      %p392 = scmp.lt.s32.totalorder %s25, 1
      %s393 = scalar_select %p392, %s25, 1
      %s394 = scalar_lea.vmem %s3, %s393
      %p395 = pneg %p131
      %p396 = pneg %p128
      %p397 = scmp.lt.s32.totalorder %s25, 1
      %s398 = scalar_select %p397, %s25, 1
      %s399 = smul.addr %s398, 8
      %s400 = smul.addr %s399, 8
      %s401 = scalar_lea.vmem %s4, %s400
      %p402 = pneg %p157
      %p403 = pneg %p154
      %p404 = scmp.lt.s32.totalorder %s25, 1
      %s405 = scalar_select %p404, %s25, 1
      %s406 = smul.addr %s405, 2
      %s407 = scalar_lea.vmem %s5, %s406
      %p408 = pneg %p183
      %p409 = pneg %p180
      %p410 = scmp.lt.s32.totalorder %s25, 1
      %s411 = scalar_select %p410, %s25, 1
      %s412 = scalar_lea.vmem %s6, %s411
      %p413 = pneg %p209
      %p414 = pneg %p206
      %p415 = scmp.lt.s32.totalorder %s25, 1
      %s416 = scalar_select %p415, %s25, 1
      %s417 = smul.addr %s416, 8
      %s418 = scalar_lea.vmem %s7, %s417
      %p419 = pneg %p235
      %p420 = pneg %p232
      %p421 = scmp.lt.s32.totalorder %s25, 1
      %s422 = scalar_select %p421, %s25, 1
      %s423 = scalar_lea.vmem %s8, %s422
      %p424 = pneg %p261
      %p425 = pneg %p258
      %p426 = pneg %p287
      %p427 = pneg %p284
      %p428 = scmp.lt.s32.totalorder %s24, 1
      %s429 = scalar_select %p428, %s24, 1
      %s430 = smul.addr %s429, 8
      %s431 = scalar_lea.vmem %s9, %s430
      %p432 = scmp.lt.s32.totalorder %s24, 1
      %s433 = scalar_select %p432, %s24, 1
      %s434 = smul.addr %s433, 8
      %s435 = scalar_lea.vmem %s0, %s434
      %p436 = scmp.lt.s32.totalorder %s24, 1
      %s437 = scalar_select %p436, %s24, 1
      %s438 = smul.addr %s437, 8
      %s439 = scalar_lea.vmem %s1, %s438
      %p440 = scmp.lt.s32.totalorder %s25, 1
      %s441 = scalar_select %p440, %s25, 1
      %s442 = smul.addr %s441, 4
      %s443 = scalar_lea.vmem %s2, %s442
      %p444 = scmp.lt.s32.totalorder %s25, 1
      %s445 = scalar_select %p444, %s25, 1
      %s446 = scalar_lea.vmem %s3, %s445
      %p447 = scmp.lt.s32.totalorder %s25, 1
      %s448 = scalar_select %p447, %s25, 1
      %s449 = smul.addr %s448, 8
      %s450 = smul.addr %s449, 8
      %s451 = scalar_lea.vmem %s4, %s450
      %p452 = scmp.lt.s32.totalorder %s25, 1
      %s453 = scalar_select %p452, %s25, 1
      %s454 = smul.addr %s453, 2
      %s455 = scalar_lea.vmem %s5, %s454
      %p456 = scmp.lt.s32.totalorder %s25, 1
      %s457 = scalar_select %p456, %s25, 1
      %s458 = scalar_lea.vmem %s6, %s457
      %p459 = scmp.lt.s32.totalorder %s25, 1
      %s460 = scalar_select %p459, %s25, 1
      %s461 = smul.addr %s460, 8
      %s462 = scalar_lea.vmem %s7, %s461
      %p463 = scmp.lt.s32.totalorder %s25, 1
      %s464 = scalar_select %p463, %s25, 1
      %s465 = scalar_lea.vmem %s8, %s464
      %p466 = scmp.lt.s32.totalorder %s24, 1
      %s467 = scalar_select %p466, %s24, 1
      %s468 = smul.addr %s467, 8
      %s469 = scalar_lea.vmem %s9, %s468
      %p470 = scmp.eq.s32.totalorder %s25, 0
      %v471 = vld [vmem:[%s435] sm:$0xff]
      %v472 = vld [vmem:[%s439] sm:$0xff]
      // Predicated region
      $region57: #{_lambda_.7} parent=55 // pred_check
        %p473 = pneg %p470
      $region58: #{_lambda_.7} parent=55 // pred_check_branch
        %475 = sbr.rel (%p473) target = $region60
      $region59: #{_lambda_.7} parent=55 // pred_region
        %vm476 = vcmask 518144
        %477 = vst.msk [vmem:[#allocation2] sm:$0x7] %vm476, 0.0
        %vm478 = vcmask 523264
        %479 = vst.msk [vmem:[#allocation2 + $0x3] sm:$0xff] %vm478, %v471
      $region60: #{_lambda_.7} parent=55 // pred_fallthru
        _
      %p480 = scmp.ne.s32.totalorder %s25, 0
      // Predicated region
      $region61: #{_lambda_.7} parent=55 // pred_check
        %p481 = pneg %p480
      $region62: #{_lambda_.7} parent=55 // pred_check_branch
        %483 = sbr.rel (%p481) target = $region64
      $region63: #{_lambda_.7} parent=55 // pred_region
        %vm484 = vcmask 523264
        %485 = vst.msk [vmem:[#allocation2] sm:$0xff] %vm484, %v471
        %vm486 = vcmask 518144
        %487 = vst.msk [vmem:[#allocation2 + $0x8] sm:$0x7] %vm486, 0.0
      $region64: #{_lambda_.7} parent=55 // pred_fallthru
        _
      %v488 = vld [vmem:[%s443] sm:$0xf]
      %v489 = vld [vmem:[%s446] sm:$0x1]
      %s490 = scalar_select %p470, 1, 0
      %v491 = vstv %s490
      %vm492 = vcmp.eq.s32.totalorder %v491, 1
      %v494 = vrot.slane %v488, 3
      %v496 = vsel %vm492, %v488, %v494
      %v497 = vld [vmem:[#allocation2] sm:$0xff]
      %v498 = vlaneseq
      %v499 = vshrl.u32 %v498, 7
      %v500 = vsub.s32 0, %v499
      %v501 = vrot.slane %v496, %v500
      %v502 = vmul.f32 %v497, %v501
      %v504 = vlaneseq
      %v505 = vshrl.u32 %v504, 7
      %v506 = vsub.s32 0, %v505
      %v507 = vrot.slane %v489, %v506
      %v509 = vadd.f32 %v507, %v502
      %v510 = vrot.slane %v488, 1
      %v512 = vsel %vm492, %v488, %v510
      %v513 = vld [vmem:[#allocation2 + $0x1] sm:$0xff]
      %v514 = vlaneseq
      %v515 = vshrl.u32 %v514, 7
      %v516 = vsub.s32 1, %v515
      %v517 = vrot.slane %v512, %v516
      %v518 = vmul.f32 %v513, %v517
      %v519 = vadd.f32 %v509, %v518
      %v520 = vrot.slane %v488, 7
      %v522 = vsel %vm492, %v488, %v520
      %v523 = vld [vmem:[#allocation2 + $0x2] sm:$0xff]
      %v524 = vlaneseq
      %v525 = vshrl.u32 %v524, 7
      %v526 = vsub.s32 2, %v525
      %v527 = vrot.slane %v522, %v526
      %v528 = vmul.f32 %v523, %v527
      %v529 = vadd.f32 %v519, %v528
      %v530 = vrot.slane %v488, 5
      %v532 = vsel %vm492, %v488, %v530
      %v533 = vld [vmem:[#allocation2 + $0x3] sm:$0xff]
      %v534 = vlaneseq
      %v535 = vshrl.u32 %v534, 7
      %v536 = vsub.s32 3, %v535
      %v537 = vrot.slane %v532, %v536
      %v538 = vmul.f32 %v533, %v537
      %v539 = vadd.f32 %v529, %v538
      %v540 = vxor.u32 %v539, 2147483648
      %v541 = vmul.f32 %v540, 1.442695
      %v542 = vpow.pop %v541
      %v543 = vadd.f32 %v542, 1.0
      %v544 = vrcp.pop %v543
      %v545 = vmul.f32 1.0, %v544
      %v546 = vmul.f32 %v539, %v545
      %v547 = vld [vmem:[%s451] sm:$0xff]
      %v548 = vld [vmem:[%s451 + $0x8] sm:$0xff]
      %v549 = vld [vmem:[%s451 + $0x10] sm:$0xff]
      %v550 = vld [vmem:[%s451 + $0x18] sm:$0xff]
      %v551 = vld [vmem:[%s451 + $0x20] sm:$0xff]
      %v552 = vld [vmem:[%s451 + $0x28] sm:$0xff]
      %v553 = vld [vmem:[%s451 + $0x30] sm:$0xff]
      %v554 = vld [vmem:[%s451 + $0x38] sm:$0xff]
      %vm555 = vcmask 523264
      %v557 = vsel %vm555, %v546, 0
      %559 = vmatprep.subr.mxu0 0.0
      %560 = vmatpush1.msra.mxu0 %v547
      %561 = vmatprep.subr.mxu0 0.0
      %562 = vmatpush1.msra.mxu0 %v548
      %563 = vmatprep.subr.mxu0 0.0
      %564 = vmatpush1.msra.mxu0 %v549
      %565 = vmatprep.subr.mxu0 0.0
      %566 = vmatpush1.msra.mxu0 %v550
      %567 = vmatprep.subr.mxu0 0.0
      %568 = vmatpush1.msra.mxu0 %v551
      %569 = vmatprep.subr.mxu0 0.0
      %570 = vmatpush1.msra.mxu0 %v552
      %571 = vmatprep.subr.mxu0 0.0
      %572 = vmatpush1.msra.mxu0 %v553
      %573 = vmatprep.subr.mxu0 0.0
      %574 = vmatpush1.msra.mxu0 %v554
      %575 = vmatprep.subr.mxu0 0.0
      %576 = vmatpush1.msra.mxu0 0.0
      %577 = vmatprep.subr.mxu0 0.0
      %578 = vmatpush1.msra.mxu0 0.0
      %579 = vmatprep.subr.mxu0 0.0
      %580 = vmatpush1.msra.mxu0 0.0
      %581 = vmatprep.subr.mxu0 0.0
      %582 = vmatpush1.msra.mxu0 0.0
      %583 = vmatprep.subr.mxu0 0.0
      %584 = vmatpush1.msra.mxu0 0.0
      %585 = vmatprep.subr.mxu0 0.0
      %586 = vmatpush1.msra.mxu0 0.0
      %587 = vmatprep.subr.mxu0 0.0
      %588 = vmatpush1.msra.mxu0 0.0
      %589 = vmatprep.subr.mxu0 0.0
      %590 = vmatpush1.msra.mxu0 0.0
      %591 = vmatprep.subr.mxu0 0.0
      %592 = vmatpush1.msra.mxu0 0.0
      %593 = vmatprep.subr.mxu0 0.0
      %594 = vmatpush1.msra.mxu0 0.0
      %595 = vmatprep.subr.mxu0 0.0
      %596 = vmatpush1.msra.mxu0 0.0
      %597 = vmatprep.subr.mxu0 0.0
      %598 = vmatpush1.msra.mxu0 0.0
      %599 = vmatprep.subr.mxu0 0.0
      %600 = vmatpush1.msra.mxu0 0.0
      %601 = vmatprep.subr.mxu0 0.0
      %602 = vmatpush1.msra.mxu0 0.0
      %603 = vmatprep.subr.mxu0 0.0
      %604 = vmatpush1.msra.mxu0 0.0
      %605 = vmatprep.subr.mxu0 0.0
      %606 = vmatpush1.msra.mxu0 0.0
      %607 = vmatprep.subr.mxu0 0.0
      %608 = vmatpush1.msra.mxu0 0.0
      %609 = vmatprep.subr.mxu0 0.0
      %610 = vmatpush1.msra.mxu0 0.0
      %611 = vmatprep.subr.mxu0 0.0
      %612 = vmatpush1.msra.mxu0 0.0
      %613 = vmatprep.subr.mxu0 0.0
      %614 = vmatpush1.msra.mxu0 0.0
      %615 = vmatprep.subr.mxu0 0.0
      %616 = vmatpush1.msra.mxu0 0.0
      %617 = vmatprep.subr.mxu0 0.0
      %618 = vmatpush1.msra.mxu0 0.0
      %619 = vmatprep.subr.mxu0 0.0
      %620 = vmatpush1.msra.mxu0 0.0
      %621 = vmatprep.subr.mxu0 0.0
      %622 = vmatpush1.msra.mxu0 0.0
      %623 = vmatprep.mubr.f32.mxu0 0.0
      %624 = vmatmul.mubr.f32.gmra.mrb[0].mxu0 %v557
      %v625 = vpop.f32.mrb[0].mxu0
      %v626 = vadd.f32 0.0, %v625
      %v627 = vpop.f32.mrb[0].mxu0
      %628 = vdwg.mxu0
      %v629 = vld [vmem:[%s455] sm:$0x3]
      %v630 = vld [vmem:[%s458] sm:$0x1]
      %v632 = vlaneseq
      %v633 = vshrl.u32 %v632, 7
      %v634 = vsub.s32 0, %v633
      %v635 = vrot.slane %v630, %v634
      %vm637 = vcmask 15360
      %v639 = vsel %vm637, %v626, 0
      %vm641 = vcmask 1041408
      %v643 = vsel %vm641, %v629, 0
      %645 = vmatprep.subr.mxu0 0.0
      %646 = vmatpush1.msra.mxu0 %v643
      %647 = vmatprep.subr.mxu0 0.0
      %648 = vmatpush1.msra.mxu0 0.0
      %649 = vmatprep.subr.mxu0 0.0
      %650 = vmatpush1.msra.mxu0 0.0
      %651 = vmatprep.subr.mxu0 0.0
      %652 = vmatpush1.msra.mxu0 0.0
      %653 = vmatprep.subr.mxu0 0.0
      %654 = vmatpush1.msra.mxu0 0.0
      %655 = vmatprep.subr.mxu0 0.0
      %656 = vmatpush1.msra.mxu0 0.0
      %657 = vmatprep.subr.mxu0 0.0
      %658 = vmatpush1.msra.mxu0 0.0
      %659 = vmatprep.subr.mxu0 0.0
      %660 = vmatpush1.msra.mxu0 0.0
      %661 = vmatprep.subr.mxu0 0.0
      %662 = vmatpush1.msra.mxu0 0.0
      %663 = vmatprep.subr.mxu0 0.0
      %664 = vmatpush1.msra.mxu0 0.0
      %665 = vmatprep.subr.mxu0 0.0
      %666 = vmatpush1.msra.mxu0 0.0
      %667 = vmatprep.subr.mxu0 0.0
      %668 = vmatpush1.msra.mxu0 0.0
      %669 = vmatprep.subr.mxu0 0.0
      %670 = vmatpush1.msra.mxu0 0.0
      %671 = vmatprep.subr.mxu0 0.0
      %672 = vmatpush1.msra.mxu0 0.0
      %673 = vmatprep.subr.mxu0 0.0
      %674 = vmatpush1.msra.mxu0 0.0
      %675 = vmatprep.subr.mxu0 0.0
      %676 = vmatpush1.msra.mxu0 0.0
      %677 = vmatprep.subr.mxu0 0.0
      %678 = vmatpush1.msra.mxu0 0.0
      %679 = vmatprep.subr.mxu0 0.0
      %680 = vmatpush1.msra.mxu0 0.0
      %681 = vmatprep.subr.mxu0 0.0
      %682 = vmatpush1.msra.mxu0 0.0
      %683 = vmatprep.subr.mxu0 0.0
      %684 = vmatpush1.msra.mxu0 0.0
      %685 = vmatprep.subr.mxu0 0.0
      %686 = vmatpush1.msra.mxu0 0.0
      %687 = vmatprep.subr.mxu0 0.0
      %688 = vmatpush1.msra.mxu0 0.0
      %689 = vmatprep.subr.mxu0 0.0
      %690 = vmatpush1.msra.mxu0 0.0
      %691 = vmatprep.subr.mxu0 0.0
      %692 = vmatpush1.msra.mxu0 0.0
      %693 = vmatprep.subr.mxu0 0.0
      %694 = vmatpush1.msra.mxu0 0.0
      %695 = vmatprep.subr.mxu0 0.0
      %696 = vmatpush1.msra.mxu0 0.0
      %697 = vmatprep.subr.mxu0 0.0
      %698 = vmatpush1.msra.mxu0 0.0
      %699 = vmatprep.subr.mxu0 0.0
      %700 = vmatpush1.msra.mxu0 0.0
      %701 = vmatprep.subr.mxu0 0.0
      %702 = vmatpush1.msra.mxu0 0.0
      %703 = vmatprep.subr.mxu0 0.0
      %704 = vmatpush1.msra.mxu0 0.0
      %705 = vmatprep.subr.mxu0 0.0
      %706 = vmatpush1.msra.mxu0 0.0
      %707 = vmatprep.subr.mxu0 0.0
      %708 = vmatpush1.msra.mxu0 0.0
      %709 = vmatprep.mubr.f32.mxu0 0.0
      %710 = vmatmul.mubr.f32.gmra.mrb[0].mxu0 %v639
      %v711 = vpop.f32.mrb[0].mxu0
      %v712 = vadd.f32 %v635, %v711
      %v713 = vpop.f32.mrb[0].mxu0
      %714 = vdwg.mxu0
      %v715 = vmax.f32 %v712, 0.0
      %v716 = vand.u32 2147483647, %v712
      %v717 = vsub.f32 0.0, %v716
      %v718 = vmul.f32 %v717, 1.442695
      %v719 = vpow.pop %v718
      %v720 = vadd.f32 %v719, 1.0
      %v721 = vlog2.pop %v720
      %v722 = vmul.f32 %v721, 0.6931472
      %v723 = vadd.f32 %v715, %v722
      %v724 = vld [vmem:[%s462] sm:$0xff]
      %v725 = vmul.f32 %v723, %v546
      %v726 = vlaneseq
      %v727 = vshrl.u32 %v726, 7
      %v728 = vlaneseq
      %v729 = vand.u32 %v728, 127
      %vm730 = vcmp.eq.s32.totalorder %v727, %v729
      %v731 = vsel %vm730, 1, 0
      %v732 = vcvt.s32.f32 %v731
      %v733 = vlaneseq
      %v734 = vshrl.u32 %v733, 7
      %v735 = vsub.s32 0, %v734
      %v736 = vrot.slane %v723, %v735
      %v737 = vmul.f32 %v736, %v724
      %v738 = vmul.f32 %v737, 1.442695
      %v739 = vpow.pop %v738
      %740 = vst.msk [vmem:[#allocation3] sm:$0xff] %vm555, %v739
      %v741 = vlaneseq
      %v742 = vshrl.u32 %v741, 7
      %v743 = vsub.s32 0, %v742
      %v744 = vrot.slane %v626, %v743
      %746 = vrot.lane.b32.xlu0 %v744, 126
      %v747 = vpop.permute.xlu0 %746
      %v749 = vmul.f32 %v732, %v747
      %vm750 = vcmask 64512
      %v751 = vsel %vm750, %v749, 0.0
      %752 = vadd.xlane.f32.xlu0 %v751
      %v753 = vpop.xlane.xlu0 %752
      %754 = vrot.lane.b32.xlu0 %v744, 118
      %v755 = vpop.permute.xlu0 %754
      %v757 = vmul.f32 %v732, %v755
      %v758 = vsel %vm750, %v757, 0.0
      %759 = vadd.xlane.f32.xlu0 %v758
      %v760 = vpop.xlane.xlu0 %759
      %v761 = vlaneseq
      %v762 = vshrl.u32 %v761, 7
      %v763 = vsub.s32 0, %v762
      %v764 = vrot.slane %v725, %v763
      %v765 = vmul.f32 %v753, %v764
      %766 = vst.msk [vmem:[#allocation4] sm:$0xff] %vm555, %v765
      %vm767 = vcmask 7168
      %768 = vst.msk [vmem:[#allocation5] sm:$0xff] %vm767, %v760
      %v769 = vlaneseq
      %v770 = vshrl.u32 %v769, 7
      %v771 = vsub.s32 1, %v770
      %v772 = vrot.slane %v723, %v771
      %v773 = vmul.f32 %v772, %v724
      %v774 = vmul.f32 %v773, 1.442695
      %v775 = vpow.pop %v774
      %776 = vst.msk [vmem:[#allocation3 + $0x8] sm:$0xff] %vm555, %v775
      %v777 = vlaneseq
      %v778 = vshrl.u32 %v777, 7
      %v779 = vsub.s32 1, %v778
      %v780 = vrot.slane %v626, %v779
      %782 = vrot.lane.b32.xlu0 %v780, 126
      %v783 = vpop.permute.xlu0 %782
      %v785 = vmul.f32 %v732, %v783
      %v786 = vsel %vm750, %v785, 0.0
      %787 = vadd.xlane.f32.xlu0 %v786
      %v788 = vpop.xlane.xlu0 %787
      %789 = vrot.lane.b32.xlu0 %v780, 118
      %v790 = vpop.permute.xlu0 %789
      %v792 = vmul.f32 %v732, %v790
      %v793 = vsel %vm750, %v792, 0.0
      %794 = vadd.xlane.f32.xlu0 %v793
      %v795 = vpop.xlane.xlu0 %794
      %v796 = vlaneseq
      %v797 = vshrl.u32 %v796, 7
      %v798 = vsub.s32 1, %v797
      %v799 = vrot.slane %v725, %v798
      %v800 = vmul.f32 %v788, %v799
      %801 = vst.msk [vmem:[#allocation4 + $0x8] sm:$0xff] %vm555, %v800
      %802 = vst.msk [vmem:[#allocation5 + $0x8] sm:$0xff] %vm767, %v795
      %v803 = vlaneseq
      %v804 = vshrl.u32 %v803, 7
      %v805 = vsub.s32 2, %v804
      %v806 = vrot.slane %v723, %v805
      %v807 = vmul.f32 %v806, %v724
      %v808 = vmul.f32 %v807, 1.442695
      %v809 = vpow.pop %v808
      %810 = vst.msk [vmem:[#allocation3 + $0x10] sm:$0xff] %vm555, %v809
      %v811 = vlaneseq
      %v812 = vshrl.u32 %v811, 7
      %v813 = vsub.s32 2, %v812
      %v814 = vrot.slane %v626, %v813
      %816 = vrot.lane.b32.xlu0 %v814, 126
      %v817 = vpop.permute.xlu0 %816
      %v819 = vmul.f32 %v732, %v817
      %v820 = vsel %vm750, %v819, 0.0
      %821 = vadd.xlane.f32.xlu0 %v820
      %v822 = vpop.xlane.xlu0 %821
      %823 = vrot.lane.b32.xlu0 %v814, 118
      %v824 = vpop.permute.xlu0 %823
      %v826 = vmul.f32 %v732, %v824
      %v827 = vsel %vm750, %v826, 0.0
      %828 = vadd.xlane.f32.xlu0 %v827
      %v829 = vpop.xlane.xlu0 %828
      %v830 = vlaneseq
      %v831 = vshrl.u32 %v830, 7
      %v832 = vsub.s32 2, %v831
      %v833 = vrot.slane %v725, %v832
      %v834 = vmul.f32 %v822, %v833
      %835 = vst.msk [vmem:[#allocation4 + $0x10] sm:$0xff] %vm555, %v834
      %836 = vst.msk [vmem:[#allocation5 + $0x10] sm:$0xff] %vm767, %v829
      %v837 = vlaneseq
      %v838 = vshrl.u32 %v837, 7
      %v839 = vsub.s32 3, %v838
      %v840 = vrot.slane %v723, %v839
      %v841 = vmul.f32 %v840, %v724
      %v842 = vmul.f32 %v841, 1.442695
      %v843 = vpow.pop %v842
      %844 = vst.msk [vmem:[#allocation3 + $0x18] sm:$0xff] %vm555, %v843
      %v845 = vlaneseq
      %v846 = vshrl.u32 %v845, 7
      %v847 = vsub.s32 3, %v846
      %v848 = vrot.slane %v626, %v847
      %850 = vrot.lane.b32.xlu0 %v848, 126
      %v851 = vpop.permute.xlu0 %850
      %v853 = vmul.f32 %v732, %v851
      %v854 = vsel %vm750, %v853, 0.0
      %855 = vadd.xlane.f32.xlu0 %v854
      %v856 = vpop.xlane.xlu0 %855
      %857 = vrot.lane.b32.xlu0 %v848, 118
      %v858 = vpop.permute.xlu0 %857
      %v860 = vmul.f32 %v732, %v858
      %v861 = vsel %vm750, %v860, 0.0
      %862 = vadd.xlane.f32.xlu0 %v861
      %v863 = vpop.xlane.xlu0 %862
      %v864 = vlaneseq
      %v865 = vshrl.u32 %v864, 7
      %v866 = vsub.s32 3, %v865
      %v867 = vrot.slane %v725, %v866
      %v868 = vmul.f32 %v856, %v867
      %869 = vst.msk [vmem:[#allocation4 + $0x18] sm:$0xff] %vm555, %v868
      %870 = vst.msk [vmem:[#allocation5 + $0x18] sm:$0xff] %vm767, %v863
      %v871 = vlaneseq
      %v872 = vshrl.u32 %v871, 7
      %v873 = vsub.s32 4, %v872
      %v874 = vrot.slane %v723, %v873
      %v875 = vmul.f32 %v874, %v724
      %v876 = vmul.f32 %v875, 1.442695
      %v877 = vpow.pop %v876
      %878 = vst.msk [vmem:[#allocation3 + $0x20] sm:$0xff] %vm555, %v877
      %v879 = vlaneseq
      %v880 = vshrl.u32 %v879, 7
      %v881 = vsub.s32 4, %v880
      %v882 = vrot.slane %v626, %v881
      %884 = vrot.lane.b32.xlu0 %v882, 126
      %v885 = vpop.permute.xlu0 %884
      %v887 = vmul.f32 %v732, %v885
      %v888 = vsel %vm750, %v887, 0.0
      %889 = vadd.xlane.f32.xlu0 %v888
      %v890 = vpop.xlane.xlu0 %889
      %891 = vrot.lane.b32.xlu0 %v882, 118
      %v892 = vpop.permute.xlu0 %891
      %v894 = vmul.f32 %v732, %v892
      %v895 = vsel %vm750, %v894, 0.0
      %896 = vadd.xlane.f32.xlu0 %v895
      %v897 = vpop.xlane.xlu0 %896
      %v898 = vlaneseq
      %v899 = vshrl.u32 %v898, 7
      %v900 = vsub.s32 4, %v899
      %v901 = vrot.slane %v725, %v900
      %v902 = vmul.f32 %v890, %v901
      %903 = vst.msk [vmem:[#allocation4 + $0x20] sm:$0xff] %vm555, %v902
      %904 = vst.msk [vmem:[#allocation5 + $0x20] sm:$0xff] %vm767, %v897
      %v905 = vlaneseq
      %v906 = vshrl.u32 %v905, 7
      %v907 = vsub.s32 5, %v906
      %v908 = vrot.slane %v723, %v907
      %v909 = vmul.f32 %v908, %v724
      %v910 = vmul.f32 %v909, 1.442695
      %v911 = vpow.pop %v910
      %912 = vst.msk [vmem:[#allocation3 + $0x28] sm:$0xff] %vm555, %v911
      %v913 = vlaneseq
      %v914 = vshrl.u32 %v913, 7
      %v915 = vsub.s32 5, %v914
      %v916 = vrot.slane %v626, %v915
      %918 = vrot.lane.b32.xlu0 %v916, 126
      %v919 = vpop.permute.xlu0 %918
      %v921 = vmul.f32 %v732, %v919
      %v922 = vsel %vm750, %v921, 0.0
      %923 = vadd.xlane.f32.xlu0 %v922
      %v924 = vpop.xlane.xlu0 %923
      %925 = vrot.lane.b32.xlu0 %v916, 118
      %v926 = vpop.permute.xlu0 %925
      %v928 = vmul.f32 %v732, %v926
      %v929 = vsel %vm750, %v928, 0.0
      %930 = vadd.xlane.f32.xlu0 %v929
      %v931 = vpop.xlane.xlu0 %930
      %v932 = vlaneseq
      %v933 = vshrl.u32 %v932, 7
      %v934 = vsub.s32 5, %v933
      %v935 = vrot.slane %v725, %v934
      %v936 = vmul.f32 %v924, %v935
      %937 = vst.msk [vmem:[#allocation4 + $0x28] sm:$0xff] %vm555, %v936
      %938 = vst.msk [vmem:[#allocation5 + $0x28] sm:$0xff] %vm767, %v931
      %v939 = vlaneseq
      %v940 = vshrl.u32 %v939, 7
      %v941 = vsub.s32 6, %v940
      %v942 = vrot.slane %v723, %v941
      %v943 = vmul.f32 %v942, %v724
      %v944 = vmul.f32 %v943, 1.442695
      %v945 = vpow.pop %v944
      %946 = vst.msk [vmem:[#allocation3 + $0x30] sm:$0xff] %vm555, %v945
      %v947 = vlaneseq
      %v948 = vshrl.u32 %v947, 7
      %v949 = vsub.s32 6, %v948
      %v950 = vrot.slane %v626, %v949
      %952 = vrot.lane.b32.xlu0 %v950, 126
      %v953 = vpop.permute.xlu0 %952
      %v955 = vmul.f32 %v732, %v953
      %v956 = vsel %vm750, %v955, 0.0
      %957 = vadd.xlane.f32.xlu0 %v956
      %v958 = vpop.xlane.xlu0 %957
      %959 = vrot.lane.b32.xlu0 %v950, 118
      %v960 = vpop.permute.xlu0 %959
      %v962 = vmul.f32 %v732, %v960
      %v963 = vsel %vm750, %v962, 0.0
      %964 = vadd.xlane.f32.xlu0 %v963
      %v965 = vpop.xlane.xlu0 %964
      %v966 = vlaneseq
      %v967 = vshrl.u32 %v966, 7
      %v968 = vsub.s32 6, %v967
      %v969 = vrot.slane %v725, %v968
      %v970 = vmul.f32 %v958, %v969
      %971 = vst.msk [vmem:[#allocation4 + $0x30] sm:$0xff] %vm555, %v970
      %972 = vst.msk [vmem:[#allocation5 + $0x30] sm:$0xff] %vm767, %v965
      %v973 = vlaneseq
      %v974 = vshrl.u32 %v973, 7
      %v975 = vsub.s32 7, %v974
      %v976 = vrot.slane %v723, %v975
      %v977 = vmul.f32 %v976, %v724
      %v978 = vmul.f32 %v977, 1.442695
      %v979 = vpow.pop %v978
      %980 = vst.msk [vmem:[#allocation3 + $0x38] sm:$0xff] %vm555, %v979
      %v981 = vlaneseq
      %v982 = vshrl.u32 %v981, 7
      %v983 = vsub.s32 7, %v982
      %v984 = vrot.slane %v626, %v983
      %986 = vrot.lane.b32.xlu0 %v984, 126
      %v987 = vpop.permute.xlu0 %986
      %v989 = vmul.f32 %v732, %v987
      %v990 = vsel %vm750, %v989, 0.0
      %991 = vadd.xlane.f32.xlu0 %v990
      %v992 = vpop.xlane.xlu0 %991
      %993 = vrot.lane.b32.xlu0 %v984, 118
      %v994 = vpop.permute.xlu0 %993
      %v996 = vmul.f32 %v732, %v994
      %v997 = vsel %vm750, %v996, 0.0
      %998 = vadd.xlane.f32.xlu0 %v997
      %v999 = vpop.xlane.xlu0 %998
      %v1000 = vlaneseq
      %v1001 = vshrl.u32 %v1000, 7
      %v1002 = vsub.s32 7, %v1001
      %v1003 = vrot.slane %v725, %v1002
      %v1004 = vmul.f32 %v992, %v1003
      %1005 = vst.msk [vmem:[#allocation4 + $0x38] sm:$0xff] %vm555, %v1004
      %1006 = vst.msk [vmem:[#allocation5 + $0x38] sm:$0xff] %vm767, %v999
      %s1007 = scalar_select %p470, 0, 7
      %s1008 = smul.u32 %s1007, 8
      %s1009 = scalar_lea.vmem [#allocation3], %s1008
      %v1010 = vld [vmem:[%s1009] sm:$0xff]
      %v1011 = vmul.f32 %v1010, 0.0
      %s1012 = scalar_lea.vmem [#allocation4], %s1008
      %v1013 = vld [vmem:[%s1012] sm:$0xff]
      %v1014 = vadd.f32 %v1011, %v1013
      %s1015 = scalar_lea.vmem [#allocation5], %s1008
      %v1016 = vld [vmem:[%s1015] sm:$0xff]
      %1018 = vset.pattern.permute.xlu0 0
      %1019 = vperm.xlu0 %1018, %v1016
      %v1020 = vpop.permute.xlu0 %1019
      %v1022 = vmul.f32 %v1020, %v1014
      %v1023 = vsel %vm555, %v1022, 0.0
      %v1024 = vrot.slane %v1023, 4
      %v1025 = vadd.f32 %v1023, %v1024
      %v1026 = vrot.slane %v1025, 2
      %v1027 = vadd.f32 %v1025, %v1026
      %v1028 = vrot.slane %v1027, 1
      %v1029 = vadd.f32 %v1027, %v1028
      %s1030 = scalar_lea.vmem [#allocation6], %s1007
      %vm1031 = vcmask 516096
      %1032 = vst.msk [vmem:[%s1030] sm:$0x1] %vm1031, %v1029
      %s1033 = scalar_select %p470, 1, 6
      %s1034 = smul.u32 %s1033, 8
      %s1035 = scalar_lea.vmem [#allocation3], %s1034
      %v1036 = vld [vmem:[%s1035] sm:$0xff]
      %v1037 = vmul.f32 %v1036, %v1014
      %s1038 = scalar_lea.vmem [#allocation4], %s1034
      %v1039 = vld [vmem:[%s1038] sm:$0xff]
      %v1040 = vadd.f32 %v1037, %v1039
      %s1041 = scalar_lea.vmem [#allocation5], %s1034
      %v1042 = vld [vmem:[%s1041] sm:$0xff]
      %1044 = vset.pattern.permute.xlu0 0
      %1045 = vperm.xlu0 %1044, %v1042
      %v1046 = vpop.permute.xlu0 %1045
      %v1048 = vmul.f32 %v1046, %v1040
      %v1049 = vsel %vm555, %v1048, 0.0
      %v1050 = vrot.slane %v1049, 4
      %v1051 = vadd.f32 %v1049, %v1050
      %v1052 = vrot.slane %v1051, 2
      %v1053 = vadd.f32 %v1051, %v1052
      %v1054 = vrot.slane %v1053, 1
      %v1055 = vadd.f32 %v1053, %v1054
      %s1056 = scalar_lea.vmem [#allocation6], %s1033
      %1057 = vst.msk [vmem:[%s1056] sm:$0x1] %vm1031, %v1055
      %s1058 = scalar_select %p470, 2, 5
      %s1059 = smul.u32 %s1058, 8
      %s1060 = scalar_lea.vmem [#allocation3], %s1059
      %v1061 = vld [vmem:[%s1060] sm:$0xff]
      %v1062 = vmul.f32 %v1061, %v1040
      %s1063 = scalar_lea.vmem [#allocation4], %s1059
      %v1064 = vld [vmem:[%s1063] sm:$0xff]
      %v1065 = vadd.f32 %v1062, %v1064
      %s1066 = scalar_lea.vmem [#allocation5], %s1059
      %v1067 = vld [vmem:[%s1066] sm:$0xff]
      %1069 = vset.pattern.permute.xlu0 0
      %1070 = vperm.xlu0 %1069, %v1067
      %v1071 = vpop.permute.xlu0 %1070
      %v1073 = vmul.f32 %v1071, %v1065
      %v1074 = vsel %vm555, %v1073, 0.0
      %v1075 = vrot.slane %v1074, 4
      %v1076 = vadd.f32 %v1074, %v1075
      %v1077 = vrot.slane %v1076, 2
      %v1078 = vadd.f32 %v1076, %v1077
      %v1079 = vrot.slane %v1078, 1
      %v1080 = vadd.f32 %v1078, %v1079
      %s1081 = scalar_lea.vmem [#allocation6], %s1058
      %1082 = vst.msk [vmem:[%s1081] sm:$0x1] %vm1031, %v1080
      %s1083 = scalar_select %p470, 3, 4
      %s1084 = smul.u32 %s1083, 8
      %s1085 = scalar_lea.vmem [#allocation3], %s1084
      %v1086 = vld [vmem:[%s1085] sm:$0xff]
      %v1087 = vmul.f32 %v1086, %v1065
      %s1088 = scalar_lea.vmem [#allocation4], %s1084
      %v1089 = vld [vmem:[%s1088] sm:$0xff]
      %v1090 = vadd.f32 %v1087, %v1089
      %s1091 = scalar_lea.vmem [#allocation5], %s1084
      %v1092 = vld [vmem:[%s1091] sm:$0xff]
      %1094 = vset.pattern.permute.xlu0 0
      %1095 = vperm.xlu0 %1094, %v1092
      %v1096 = vpop.permute.xlu0 %1095
      %v1098 = vmul.f32 %v1096, %v1090
      %v1099 = vsel %vm555, %v1098, 0.0
      %v1100 = vrot.slane %v1099, 4
      %v1101 = vadd.f32 %v1099, %v1100
      %v1102 = vrot.slane %v1101, 2
      %v1103 = vadd.f32 %v1101, %v1102
      %v1104 = vrot.slane %v1103, 1
      %v1105 = vadd.f32 %v1103, %v1104
      %s1106 = scalar_lea.vmem [#allocation6], %s1083
      %1107 = vst.msk [vmem:[%s1106] sm:$0x1] %vm1031, %v1105
      %s1108 = scalar_select %p470, 4, 3
      %s1109 = smul.u32 %s1108, 8
      %s1110 = scalar_lea.vmem [#allocation3], %s1109
      %v1111 = vld [vmem:[%s1110] sm:$0xff]
      %v1112 = vmul.f32 %v1111, %v1090
      %s1113 = scalar_lea.vmem [#allocation4], %s1109
      %v1114 = vld [vmem:[%s1113] sm:$0xff]
      %v1115 = vadd.f32 %v1112, %v1114
      %s1116 = scalar_lea.vmem [#allocation5], %s1109
      %v1117 = vld [vmem:[%s1116] sm:$0xff]
      %1119 = vset.pattern.permute.xlu0 0
      %1120 = vperm.xlu0 %1119, %v1117
      %v1121 = vpop.permute.xlu0 %1120
      %v1123 = vmul.f32 %v1121, %v1115
      %v1124 = vsel %vm555, %v1123, 0.0
      %v1125 = vrot.slane %v1124, 4
      %v1126 = vadd.f32 %v1124, %v1125
      %v1127 = vrot.slane %v1126, 2
      %v1128 = vadd.f32 %v1126, %v1127
      %v1129 = vrot.slane %v1128, 1
      %v1130 = vadd.f32 %v1128, %v1129
      %s1131 = scalar_lea.vmem [#allocation6], %s1108
      %1132 = vst.msk [vmem:[%s1131] sm:$0x1] %vm1031, %v1130
      %s1133 = scalar_select %p470, 5, 2
      %s1134 = smul.u32 %s1133, 8
      %s1135 = scalar_lea.vmem [#allocation3], %s1134
      %v1136 = vld [vmem:[%s1135] sm:$0xff]
      %v1137 = vmul.f32 %v1136, %v1115
      %s1138 = scalar_lea.vmem [#allocation4], %s1134
      %v1139 = vld [vmem:[%s1138] sm:$0xff]
      %v1140 = vadd.f32 %v1137, %v1139
      %s1141 = scalar_lea.vmem [#allocation5], %s1134
      %v1142 = vld [vmem:[%s1141] sm:$0xff]
      %1144 = vset.pattern.permute.xlu0 0
      %1145 = vperm.xlu0 %1144, %v1142
      %v1146 = vpop.permute.xlu0 %1145
      %v1148 = vmul.f32 %v1146, %v1140
      %v1149 = vsel %vm555, %v1148, 0.0
      %v1150 = vrot.slane %v1149, 4
      %v1151 = vadd.f32 %v1149, %v1150
      %v1152 = vrot.slane %v1151, 2
      %v1153 = vadd.f32 %v1151, %v1152
      %v1154 = vrot.slane %v1153, 1
      %v1155 = vadd.f32 %v1153, %v1154
      %s1156 = scalar_lea.vmem [#allocation6], %s1133
      %1157 = vst.msk [vmem:[%s1156] sm:$0x1] %vm1031, %v1155
      %s1158 = scalar_select %p470, 6, 1
      %s1159 = smul.u32 %s1158, 8
      %s1160 = scalar_lea.vmem [#allocation3], %s1159
      %v1161 = vld [vmem:[%s1160] sm:$0xff]
      %v1162 = vmul.f32 %v1161, %v1140
      %s1163 = scalar_lea.vmem [#allocation4], %s1159
      %v1164 = vld [vmem:[%s1163] sm:$0xff]
      %v1165 = vadd.f32 %v1162, %v1164
      %s1166 = scalar_lea.vmem [#allocation5], %s1159
      %v1167 = vld [vmem:[%s1166] sm:$0xff]
      %1169 = vset.pattern.permute.xlu0 0
      %1170 = vperm.xlu0 %1169, %v1167
      %v1171 = vpop.permute.xlu0 %1170
      %v1173 = vmul.f32 %v1171, %v1165
      %v1174 = vsel %vm555, %v1173, 0.0
      %v1175 = vrot.slane %v1174, 4
      %v1176 = vadd.f32 %v1174, %v1175
      %v1177 = vrot.slane %v1176, 2
      %v1178 = vadd.f32 %v1176, %v1177
      %v1179 = vrot.slane %v1178, 1
      %v1180 = vadd.f32 %v1178, %v1179
      %s1181 = scalar_lea.vmem [#allocation6], %s1158
      %1182 = vst.msk [vmem:[%s1181] sm:$0x1] %vm1031, %v1180
      %s1183 = scalar_select %p470, 7, 0
      %s1184 = smul.u32 %s1183, 8
      %s1185 = scalar_lea.vmem [#allocation3], %s1184
      %v1186 = vld [vmem:[%s1185] sm:$0xff]
      %v1187 = vmul.f32 %v1186, %v1165
      %s1188 = scalar_lea.vmem [#allocation4], %s1184
      %v1189 = vld [vmem:[%s1188] sm:$0xff]
      %v1190 = vadd.f32 %v1187, %v1189
      %s1191 = scalar_lea.vmem [#allocation5], %s1184
      %v1192 = vld [vmem:[%s1191] sm:$0xff]
      %1194 = vset.pattern.permute.xlu0 0
      %1195 = vperm.xlu0 %1194, %v1192
      %v1196 = vpop.permute.xlu0 %1195
      %v1198 = vmul.f32 %v1196, %v1190
      %v1199 = vsel %vm555, %v1198, 0.0
      %v1200 = vrot.slane %v1199, 4
      %v1201 = vadd.f32 %v1199, %v1200
      %v1202 = vrot.slane %v1201, 2
      %v1203 = vadd.f32 %v1201, %v1202
      %v1204 = vrot.slane %v1203, 1
      %v1205 = vadd.f32 %v1203, %v1204
      %s1206 = scalar_lea.vmem [#allocation6], %s1183
      %1207 = vst.msk [vmem:[%s1206] sm:$0x1] %vm1031, %v1205
      %v1208 = vld [vmem:[#allocation6] sm:$0xff]
      %v1209 = vld [vmem:[%s465] sm:$0x1]
      %v1211 = vlaneseq
      %v1212 = vshrl.u32 %v1211, 7
      %v1213 = vsub.s32 0, %v1212
      %v1214 = vrot.slane %v1209, %v1213
      %v1216 = vmul.f32 %v1214, %v546
      %v1217 = vadd.f32 %v1208, %v1216
      %v1218 = vxor.u32 %v472, 2147483648
      %v1219 = vmul.f32 %v1218, 1.442695
      %v1220 = vpow.pop %v1219
      %v1221 = vadd.f32 %v1220, 1.0
      %v1222 = vrcp.pop %v1221
      %v1223 = vmul.f32 1.0, %v1222
      %v1224 = vmul.f32 %v472, %v1223
      %v1225 = vmul.f32 %v1217, %v1224
      // Predicated region
      $region65: #{_lambda_.7} parent=55 // pred_check
        %p1226 = pneg %p470
      $region66: #{_lambda_.7} parent=55 // pred_check_branch
        %1228 = sbr.rel (%p1226) target = $region68
      $region67: #{_lambda_.7} parent=55 // pred_region
        %1229 = vst.msk [vmem:[%s469] sm:$0xff] %vm555, %v1225
      $region68: #{_lambda_.7} parent=55 // pred_fallthru
        _
      // Predicated region
      $region69: #{_lambda_.7} parent=55 // pred_check
        %p1230 = pneg %p480
      $region70: #{_lambda_.7} parent=55 // pred_check_branch
        %1232 = sbr.rel (%p1230) target = $region72
      $region71: #{_lambda_.7} parent=55 // pred_region
        %v1233 = vld [vmem:[%s469] sm:$0xff]
        %v1234 = vadd.f32 %v1233, %v1225
        %1235 = vst.msk [vmem:[%s469] sm:$0xff] %vm555, %v1234
      $region72: #{_lambda_.7} parent=55 // pred_fallthru
        _
      %p1236 = scmp.lt.s32.totalorder %s24, 1
      %s1237 = scalar_select %p1236, %s24, 1
      %s1238 = smul.addr %s1237, 8
      %s1239 = scalar_lea.vmem %s9, %s1238
      // Predicated region
      $region73: #{_lambda_.7} parent=55 // pred_check
        %p1240 = pneg %p284
      $region74: #{_lambda_.7} parent=55 // pred_check_branch
        %1242 = sbr.rel (%p1240) target = $region76
      $region75: #{_lambda_.7} parent=55 // pred_region
        _
      $region76: #{_lambda_.7} parent=55 // pred_fallthru
        _
    $region56: #{_lambda_.7} parent=5 // pred_fallthru
      _
    %p1243 = scmp.le.s32.totalorder 2, %s15
    // Predicated region
    $region77: #{_lambda_.7} parent=5 // pred_check
      %p1244 = pneg %p1243
    $region78: #{_lambda_.7} parent=5 // pred_check_branch
      %1246 = sbr.rel (%p1244) target = $region80
    $region79: #{_lambda_.7} parent=5 // pred_region
      %s1247 = ssub.s32 %s15, 2
      // Predicated region
      $region81: #{_lambda_.7} parent=79 // pred_check
        %p1248 = pneg %p290
      $region82: #{_lambda_.7} parent=79 // pred_check_branch
        %1250 = sbr.rel (%p1248) target = $region84
      $region83: #{_lambda_.7} parent=79 // pred_region
        %p1251 = scmp.lt.s32.totalorder %s26, 1
        %s1252 = scalar_select %p1251, %s26, 1
        %s1253 = smul.addr %s1252, 8
        %s1254 = scalar_lea.vmem %s9, %s1253
      $region84: #{_lambda_.7} parent=79 // pred_fallthru
        _
    $region80: #{_lambda_.7} parent=5 // pred_fallthru
      _
  $region6: #{_lambda_.7} parent=0 // loop_footer
    %s19 = sadd.s32 1, %s15
  $region7: #{_lambda_.7} parent=0 // loop_footer_branch
    %14 = sbr.rel target = $region3
  $region8: #{_lambda_.7} parent=0 // loop_exit
    _

</llo_original>
